<compile_context>
chip_gen: v6e
topology: v6e:2x2x1
jax: 0.10.0
libtpu: 0.0.40
codegen_flags: <defaults>
</compile_context>

<pallas_src>
import functools

import jax
import jax.numpy as jnp
from jax.experimental import pallas as pl
from jax.experimental.pallas import tpu as pltpu


# ---------------------------------------------------------------------------
# Kernel
# ---------------------------------------------------------------------------
def _layer_norm(x, gamma, beta, eps):
    mu = jnp.mean(x, axis=-1, keepdims=True)
    xc = x - mu
    var = jnp.mean(xc * xc, axis=-1, keepdims=True)
    return xc * jax.lax.rsqrt(var + eps) * gamma + beta


def _self_attn_layer_kernel(x_ref, wqkv_ref, bqkv_ref, wo_ref, bo_ref,
                            g1_ref, be1_ref, w1_ref, bf1_ref,
                            w2_ref, bf2_ref, g2_ref, be2_ref,
                            o_ref, *, num_heads, head_dim, mask_type, eps):
    TB, L, D = x_ref.shape                      # static block shape
    x = x_ref[...].astype(jnp.float32)          # (TB, L, D)
    x2 = x.reshape(TB * L, D)

    # Fused QKV projection: one lane-dense (TB*L, D) @ (D, 3D) MXU matmul.
    qkv = jnp.dot(x2, wqkv_ref[...],
                  preferred_element_type=jnp.float32) + bqkv_ref[...]

    # Static (compile-time) attention mask.  'mixed' (tril | ~diag) is
    # identically True -> same as 'none', skip the select entirely.
    if mask_type in ('none', 'mixed'):
        mask = None
    else:
        rows = jax.lax.broadcasted_iota(jnp.int32, (L, L), 0)
        cols = jax.lax.broadcasted_iota(jnp.int32, (L, L), 1)
        if mask_type == 'temporal':
            mask = cols <= rows
        elif mask_type == 'spatial':
            mask = rows != cols
        elif mask_type == 'decoupled':
            mask = rows == cols
        else:
            raise ValueError(f"unknown mask_type {mask_type}")
        mask = mask[None, :, :]                 # broadcast over TB

    scale = jnp.float32(1.0 / (head_dim ** 0.5))
    neg = jnp.float32(-1e30)   # finite: avoids inf-inf -> NaN on fully-masked rows

    head_outs = []
    for h in range(num_heads):                  # static unroll (H is small)
        lo = h * head_dim
        q_h = qkv[:, lo:lo + head_dim].reshape(TB, L, head_dim)
        k_h = qkv[:, D + lo:D + lo + head_dim].reshape(TB, L, head_dim)
        v_h = qkv[:, 2 * D + lo:2 * D + lo + head_dim].reshape(TB, L, head_dim)

        # Batched over the TB slices; no explicit transpose of K.
        s = jnp.einsum('bld,bmd->blm', q_h, k_h,
                       preferred_element_type=jnp.float32) * scale
        if mask is not None:
            s = jnp.where(mask, s, neg)

        m = jnp.max(s, axis=-1, keepdims=True)
        p = jnp.exp(s - m)
        denom = jnp.sum(p, axis=-1, keepdims=True)
        p = p * pl.reciprocal(denom, approx=True)     # EUP slot, frees VALU

        head_outs.append(jnp.einsum('blm,bmd->bld', p, v_h,
                                    preferred_element_type=jnp.float32))

    attn = jnp.concatenate(head_outs, axis=-1).reshape(TB * L, D)
    attn = jnp.dot(attn, wo_ref[...],
                   preferred_element_type=jnp.float32) + bo_ref[...]

    # Residual + LayerNorm 1 (dropout == identity in eval mode).
    h1 = _layer_norm(x2 + attn, g1_ref[...], be1_ref[...], eps)

    # Feed-forward: Linear -> ReLU -> Linear.
    f = jnp.dot(h1, w1_ref[...], preferred_element_type=jnp.float32) + bf1_ref[...]
    f = jnp.maximum(f, 0.0)
    f = jnp.dot(f, w2_ref[...], preferred_element_type=jnp.float32) + bf2_ref[...]

    # Residual + LayerNorm 2.
    out = _layer_norm(h1 + f, g2_ref[...], be2_ref[...], eps)
    o_ref[...] = out.reshape(TB, L, D).astype(o_ref.dtype)


# ---------------------------------------------------------------------------
# Per-layer wrapper (one SelfAttentionLayer)
# ---------------------------------------------------------------------------
def _self_attention_layer(x, p, *, num_heads, mask_type, block_bt=64, eps=1e-5):
    B, T, L, D = x.shape
    assert D % num_heads == 0
    head_dim = D // num_heads
    BT = B * T

    # Batch TB (b, t) slices per grid step (biggest lever: MXU-sized matmuls,
    # ~1/TB the per-step pipeline overhead).  For v7x keep the grid >= 2 when
    # possible so both TensorCores get work.
    tb = min(block_bt, BT)
    n_blk = pl.cdiv(BT, tb)
    pad = n_blk * tb - BT

    xf = x.reshape(BT, L, D)
    if pad:
        xf = jnp.concatenate([xf, jnp.zeros((pad, L, D), x.dtype)], axis=0)

    # Fuse the three projection weights -> one (D, 3D) matmul.
    wqkv = jnp.concatenate([p['wq'], p['wk'], p['wv']], axis=1)      # (D, 3D)
    bqkv = jnp.concatenate([p['bq'], p['bk'], p['bv']], axis=1)      # (1, 3D)
    FF = p['w1'].shape[1]

    def const2d(a):      # whole (small) weight resident in VMEM every step
        return pl.BlockSpec(a.shape, lambda i: (0, 0))

    kernel = functools.partial(
        _self_attn_layer_kernel,
        num_heads=num_heads, head_dim=head_dim, mask_type=mask_type, eps=eps)

    rows = n_blk * tb * L
    flops = int(rows * (2 * D * 3 * D          # fused QKV projection
                        + 4 * L * D            # QK^T + PV (all heads)
                        + 2 * D * D            # output projection
                        + 4 * D * FF))         # FFN
    transcendentals = int(n_blk * tb * num_heads * L * L + 3 * rows)
    weight_bytes = 4 * (wqkv.size + bqkv.size + p['wo'].size + p['bo'].size
                        + p['w1'].size + p['b1'].size + p['w2'].size + p['b2'].size
                        + 4 * D)
    bytes_accessed = int(2 * xf.size * 4 + weight_bytes)

    out = pl.pallas_call(
        kernel,
        out_shape=jax.ShapeDtypeStruct((n_blk * tb, L, D), x.dtype),
        grid_spec=pltpu.PrefetchScalarGridSpec(
            num_scalar_prefetch=0,
            grid=(n_blk,),
            in_specs=[
                pl.BlockSpec((tb, L, D), lambda i: (i, 0, 0)),   # activations
                const2d(wqkv), const2d(bqkv),                    # fused QKV
                const2d(p['wo']), const2d(p['bo']),              # out_proj
                const2d(p['g1']), const2d(p['be1']),             # LayerNorm 1
                const2d(p['w1']), const2d(p['b1']),              # FFN linear 1
                const2d(p['w2']), const2d(p['b2']),              # FFN linear 2
                const2d(p['g2']), const2d(p['be2']),             # LayerNorm 2
            ],
            out_specs=pl.BlockSpec((tb, L, D), lambda i: (i, 0, 0)),
        ),
        compiler_params=pltpu.CompilerParams(
            dimension_semantics=("parallel",)),
        cost_estimate=pl.CostEstimate(
            flops=flops, transcendentals=transcendentals,
            bytes_accessed=bytes_accessed),
    )(xf, wqkv, bqkv, p['wo'], p['bo'], p['g1'], p['be1'],
      p['w1'], p['b1'], p['w2'], p['b2'], p['g2'], p['be2'])

    if pad:
        out = out[:BT]
    return out.reshape(B, T, L, D)


def transformer_module_forward(x, layer_params, *, num_heads, mask_type='none',
                               dim=-2, block_bt=64):
    """Pallas implementation of Transformer_module.forward (eval mode)."""
    x = jnp.swapaxes(x, dim, -2)
    for p in layer_params:
        x = _self_attention_layer(x, p, num_heads=num_heads,
                                  mask_type=mask_type, block_bt=block_bt)
    return jnp.swapaxes(x, dim, -2)


# ---------------------------------------------------------------------------
# Pure-JAX reference (matches PyTorch semantics, dropout = identity)
# ---------------------------------------------------------------------------
def _layer_norm_ref(x, gamma, beta, eps=1e-5):
    mu = jnp.mean(x, axis=-1, keepdims=True)
    var = jnp.mean((x - mu) ** 2, axis=-1, keepdims=True)
    return (x - mu) * jax.lax.rsqrt(var + eps) * gamma + beta


def _attention_ref(q_in, k_in, v_in, p, *, num_heads, mask_type):
    D = q_in.shape[-1]
    hd = D // num_heads
    lq, lk = q_in.shape[-2], k_in.shape[-2]
    q = q_in @ p['wq'] + p['bq']
    k = k_in @ p['wk'] + p['bk']
    v = v_in @ p['wv'] + p['bv']
    if mask_type in ('none', 'mixed'):
        mask = None
    else:
        rows = jnp.arange(lq)[:, None]
        cols = jnp.arange(lk)[None, :]
        if mask_type == 'temporal':
            mask = cols <= rows
        elif mask_type == 'spatial':
            mask = rows != cols
        elif mask_type == 'decoupled':
            mask = rows == cols
    outs = []
    for h in range(num_heads):
        lo = h * hd
        s = jnp.einsum('btqd,btkd->btqk',
                       q[..., lo:lo + hd], k[..., lo:lo + hd]) / hd ** 0.5
        if mask is not None:
            s = jnp.where(mask, s, -jnp.inf)
        pr = jax.nn.softmax(s, axis=-1)
        outs.append(jnp.einsum('btqk,btkd->btqd', pr, v[..., lo:lo + hd]))
    out = jnp.concatenate(outs, axis=-1)
    return out @ p['wo'] + p['bo']


def transformer_module_ref(x, layer_params, *, num_heads, mask_type='none', dim=-2):
    x = jnp.swapaxes(x, dim, -2)
    for p in layer_params:
        attn = _attention_ref(x, x, x, p, num_heads=num_heads, mask_type=mask_type)
        h = _layer_norm_ref(x + attn, p['g1'], p['be1'])
        f = jnp.maximum(h @ p['w1'] + p['b1'], 0.0) @ p['w2'] + p['b2']
        x = _layer_norm_ref(h + f, p['g2'], p['be2'])
    return jnp.swapaxes(x, dim, -2)


# ---------------------------------------------------------------------------
# Synthetic parameters (weights already in y = x @ W + b form)
# ---------------------------------------------------------------------------
def init_layer_params(key, model_dim, ff_dim):
    ks = jax.random.split(key, 12)

    def lin(kw, kb, fan_in, fan_out):
        s = 1.0 / (fan_in ** 0.5)
        w = jax.random.uniform(kw, (fan_in, fan_out), jnp.float32, -s, s)
        b = jax.random.uniform(kb, (1, fan_out), jnp.float32, -s, s)
        return w, b

    wq, bq = lin(ks[0], ks[1], model_dim, model_dim)
    wk, bk = lin(ks[2], ks[3], model_dim, model_dim)
    wv, bv = lin(ks[4], ks[5], model_dim, model_dim)
    wo, bo = lin(ks[6], ks[7], model_dim, model_dim)
    w1, b1 = lin(ks[8], ks[9], model_dim, ff_dim)
    w2, b2 = lin(ks[10], ks[11], ff_dim, model_dim)
    return dict(wq=wq, bq=bq, wk=wk, bk=bk, wv=wv, bv=bv, wo=wo, bo=bo,
                g1=jnp.ones((1, model_dim), jnp.float32),
                be1=jnp.zeros((1, model_dim), jnp.float32),
                w1=w1, b1=b1, w2=w2, b2=b2,
                g2=jnp.ones((1, model_dim), jnp.float32),
                be2=jnp.zeros((1, model_dim), jnp.float32))


if __name__ == "__main__":
    B, T, N, D = 2, 3, 8, 32     # batch, in_steps, num_nodes, model_dim
    H = 4                        # num_heads -> head_dim = 8
    FF = 256                     # feed_forward_dim (module default)
    NUM_LAYERS = 3

    root = jax.random.PRNGKey(0)
    kx, kp = jax.random.split(root)
    x = jax.random.normal(kx, (B, T, N, D), jnp.float32)
    params = [init_layer_params(k, D, FF) for k in jax.random.split(kp, NUM_LAYERS)]

    for mt in ('none', 'temporal'):
        out = transformer_module_forward(x, params, num_heads=H,
                                         mask_type=mt, dim=-2, block_bt=64)
        out = jax.block_until_ready(out)
        ref = transformer_module_ref(x, params, num_heads=H, mask_type=mt, dim=-2)
        assert out.shape == x.shape
        assert not bool(jnp.any(jnp.isnan(out))), f"NaN in output ({mt})"
        assert jnp.allclose(out, ref, atol=1e-2, rtol=1e-2), (
            f"mismatch vs reference ({mt}): "
            f"max abs err {float(jnp.max(jnp.abs(out - ref)))}")

    print("KERNEL_OK")
</pallas_src>

<mosaic_0001>
module attributes {stable_mosaic.version = 11 : i64} {
  func.func @_self_attn_layer_kernel(%arg0: i32, %arg1: memref<6x8x32xf32, #tpu.memory_space<vmem>>, %arg2: memref<32x96xf32, #tpu.memory_space<vmem>>, %arg3: memref<1x96xf32, #tpu.memory_space<vmem>>, %arg4: memref<32x32xf32, #tpu.memory_space<vmem>>, %arg5: memref<1x32xf32, #tpu.memory_space<vmem>>, %arg6: memref<1x32xf32, #tpu.memory_space<vmem>>, %arg7: memref<1x32xf32, #tpu.memory_space<vmem>>, %arg8: memref<32x256xf32, #tpu.memory_space<vmem>>, %arg9: memref<1x256xf32, #tpu.memory_space<vmem>>, %arg10: memref<256x32xf32, #tpu.memory_space<vmem>>, %arg11: memref<1x32xf32, #tpu.memory_space<vmem>>, %arg12: memref<1x32xf32, #tpu.memory_space<vmem>>, %arg13: memref<1x32xf32, #tpu.memory_space<vmem>>, %arg14: memref<6x8x32xf32, #tpu.memory_space<vmem>>) attributes {dimension_semantics = [#tpu.dimension_semantics<parallel>], iteration_bounds = array<i64: 1>, scalar_prefetch = 0 : i64, scratch_operands = 0 : i64, tpu.core_type = #tpu.core_type<tc>, window_params = [{transform_indices = @transform_0, window_bounds = array<i64: 6, 8, 32>}, {pipeline_mode = #tpu.pipeline_mode<synchronous>, transform_indices = @transform_1, window_bounds = array<i64: 32, 96>}, {pipeline_mode = #tpu.pipeline_mode<synchronous>, transform_indices = @transform_2, window_bounds = array<i64: 1, 96>}, {pipeline_mode = #tpu.pipeline_mode<synchronous>, transform_indices = @transform_3, window_bounds = array<i64: 32, 32>}, {pipeline_mode = #tpu.pipeline_mode<synchronous>, transform_indices = @transform_4, window_bounds = array<i64: 1, 32>}, {pipeline_mode = #tpu.pipeline_mode<synchronous>, transform_indices = @transform_5, window_bounds = array<i64: 1, 32>}, {pipeline_mode = #tpu.pipeline_mode<synchronous>, transform_indices = @transform_6, window_bounds = array<i64: 1, 32>}, {pipeline_mode = #tpu.pipeline_mode<synchronous>, transform_indices = @transform_7, window_bounds = array<i64: 32, 256>}, {pipeline_mode = #tpu.pipeline_mode<synchronous>, transform_indices = @transform_8, window_bounds = array<i64: 1, 256>}, {pipeline_mode = #tpu.pipeline_mode<synchronous>, transform_indices = @transform_9, window_bounds = array<i64: 256, 32>}, {pipeline_mode = #tpu.pipeline_mode<synchronous>, transform_indices = @transform_10, window_bounds = array<i64: 1, 32>}, {pipeline_mode = #tpu.pipeline_mode<synchronous>, transform_indices = @transform_11, window_bounds = array<i64: 1, 32>}, {pipeline_mode = #tpu.pipeline_mode<synchronous>, transform_indices = @transform_12, window_bounds = array<i64: 1, 32>}, {transform_indices = @transform_13, window_bounds = array<i64: 6, 8, 32>}]} {
    %c0 = arith.constant 0 : index
    %c0_0 = arith.constant 0 : index
    %c0_1 = arith.constant 0 : index
    %0 = vector.load %arg1[%c0, %c0_0, %c0_1] : memref<6x8x32xf32, #tpu.memory_space<vmem>>, vector<6x8x32xf32>
    %1 = vector.shape_cast %0 : vector<6x8x32xf32> to vector<48x32xf32>
    %c0_2 = arith.constant 0 : index
    %c0_3 = arith.constant 0 : index
    %2 = vector.load %arg2[%c0_2, %c0_3] : memref<32x96xf32, #tpu.memory_space<vmem>>, vector<32x96xf32>
    %cst = arith.constant dense<0.000000e+00> : vector<48x96xf32>
    %3 = tpu.matmul %1, %2, %cst {dimension_numbers = #tpu.dot_dimension_numbers<[1], [0], [0], [1], [0, 0, 1, 1], [], []>} : vector<48x32xf32>, vector<32x96xf32>, vector<48x96xf32> -> vector<48x96xf32>
    %c0_4 = arith.constant 0 : index
    %c0_5 = arith.constant 0 : index
    %4 = vector.load %arg3[%c0_4, %c0_5] : memref<1x96xf32, #tpu.memory_space<vmem>>, vector<1x96xf32>
    %5 = vector.broadcast %4 : vector<1x96xf32> to vector<48x96xf32>
    %6 = arith.addf %3, %5 : vector<48x96xf32>
    %7 = vector.extract_strided_slice %6 {offsets = [0, 0], sizes = [48, 8], strides = [1, 1]} : vector<48x96xf32> to vector<48x8xf32>
    %8 = vector.shape_cast %7 : vector<48x8xf32> to vector<6x8x8xf32>
    %9 = vector.extract_strided_slice %6 {offsets = [0, 32], sizes = [48, 8], strides = [1, 1]} : vector<48x96xf32> to vector<48x8xf32>
    %10 = vector.shape_cast %9 : vector<48x8xf32> to vector<6x8x8xf32>
    %11 = vector.extract_strided_slice %6 {offsets = [0, 64], sizes = [48, 8], strides = [1, 1]} : vector<48x96xf32> to vector<48x8xf32>
    %12 = vector.shape_cast %11 : vector<48x8xf32> to vector<6x8x8xf32>
    "tpu.trace_start"() <{level = 10 : i32, message = "bld,bmd->blm"}> : () -> ()
    %cst_6 = arith.constant dense<0.000000e+00> : vector<6x8x8xf32>
    %13 = tpu.matmul %8, %10, %cst_6 {dimension_numbers = #tpu.dot_dimension_numbers<[2], [2], [1], [1], [0, 0, 0, 1, 1, 1], [0], [0]>} : vector<6x8x8xf32>, vector<6x8x8xf32>, vector<6x8x8xf32> -> vector<6x8x8xf32>
    "tpu.trace_stop"() : () -> ()
    %cst_7 = arith.constant 0.353553385 : f32
    %14 = vector.broadcast %cst_7 : f32 to vector<6x8x8xf32>
    %15 = arith.mulf %13, %14 : vector<6x8x8xf32>
    %cst_8 = arith.constant dense<0xFF800000> : vector<6x8xf32>
    %16 = vector.multi_reduction <maximumf>, %15, %cst_8 [2] : vector<6x8x8xf32> to vector<6x8xf32>
    %17 = vector.shape_cast %16 : vector<6x8xf32> to vector<6x8x1xf32>
    %18 = vector.broadcast %17 : vector<6x8x1xf32> to vector<6x8x8xf32>
    %19 = arith.subf %15, %18 : vector<6x8x8xf32>
    %20 = math.exp %19 : vector<6x8x8xf32>
    %cst_9 = arith.constant dense<0.000000e+00> : vector<6x8xf32>
    %21 = vector.multi_reduction <add>, %20, %cst_9 [2] : vector<6x8x8xf32> to vector<6x8xf32>
    %22 = vector.shape_cast %21 : vector<6x8xf32> to vector<6x8x1xf32>
    %23 = tpu.reciprocal %22 {approx = true} : vector<6x8x1xf32> -> vector<6x8x1xf32>
    %24 = vector.broadcast %23 : vector<6x8x1xf32> to vector<6x8x8xf32>
    %25 = arith.mulf %20, %24 : vector<6x8x8xf32>
    "tpu.trace_start"() <{level = 10 : i32, message = "blm,bmd->bld"}> : () -> ()
    %cst_10 = arith.constant dense<0.000000e+00> : vector<6x8x8xf32>
    %26 = tpu.matmul %25, %12, %cst_10 {dimension_numbers = #tpu.dot_dimension_numbers<[2], [1], [1], [2], [0, 0, 0, 1, 1, 2], [0], [0]>} : vector<6x8x8xf32>, vector<6x8x8xf32>, vector<6x8x8xf32> -> vector<6x8x8xf32>
    "tpu.trace_stop"() : () -> ()
    %27 = vector.extract_strided_slice %6 {offsets = [0, 8], sizes = [48, 8], strides = [1, 1]} : vector<48x96xf32> to vector<48x8xf32>
    %28 = vector.shape_cast %27 : vector<48x8xf32> to vector<6x8x8xf32>
    %29 = vector.extract_strided_slice %6 {offsets = [0, 40], sizes = [48, 8], strides = [1, 1]} : vector<48x96xf32> to vector<48x8xf32>
    %30 = vector.shape_cast %29 : vector<48x8xf32> to vector<6x8x8xf32>
    %31 = vector.extract_strided_slice %6 {offsets = [0, 72], sizes = [48, 8], strides = [1, 1]} : vector<48x96xf32> to vector<48x8xf32>
    %32 = vector.shape_cast %31 : vector<48x8xf32> to vector<6x8x8xf32>
    "tpu.trace_start"() <{level = 10 : i32, message = "bld,bmd->blm"}> : () -> ()
    %cst_11 = arith.constant dense<0.000000e+00> : vector<6x8x8xf32>
    %33 = tpu.matmul %28, %30, %cst_11 {dimension_numbers = #tpu.dot_dimension_numbers<[2], [2], [1], [1], [0, 0, 0, 1, 1, 1], [0], [0]>} : vector<6x8x8xf32>, vector<6x8x8xf32>, vector<6x8x8xf32> -> vector<6x8x8xf32>
    "tpu.trace_stop"() : () -> ()
    %cst_12 = arith.constant 0.353553385 : f32
    %34 = vector.broadcast %cst_12 : f32 to vector<6x8x8xf32>
    %35 = arith.mulf %33, %34 : vector<6x8x8xf32>
    %cst_13 = arith.constant dense<0xFF800000> : vector<6x8xf32>
    %36 = vector.multi_reduction <maximumf>, %35, %cst_13 [2] : vector<6x8x8xf32> to vector<6x8xf32>
    %37 = vector.shape_cast %36 : vector<6x8xf32> to vector<6x8x1xf32>
    %38 = vector.broadcast %37 : vector<6x8x1xf32> to vector<6x8x8xf32>
    %39 = arith.subf %35, %38 : vector<6x8x8xf32>
    %40 = math.exp %39 : vector<6x8x8xf32>
    %cst_14 = arith.constant dense<0.000000e+00> : vector<6x8xf32>
    %41 = vector.multi_reduction <add>, %40, %cst_14 [2] : vector<6x8x8xf32> to vector<6x8xf32>
    %42 = vector.shape_cast %41 : vector<6x8xf32> to vector<6x8x1xf32>
    %43 = tpu.reciprocal %42 {approx = true} : vector<6x8x1xf32> -> vector<6x8x1xf32>
    %44 = vector.broadcast %43 : vector<6x8x1xf32> to vector<6x8x8xf32>
    %45 = arith.mulf %40, %44 : vector<6x8x8xf32>
    "tpu.trace_start"() <{level = 10 : i32, message = "blm,bmd->bld"}> : () -> ()
    %cst_15 = arith.constant dense<0.000000e+00> : vector<6x8x8xf32>
    %46 = tpu.matmul %45, %32, %cst_15 {dimension_numbers = #tpu.dot_dimension_numbers<[2], [1], [1], [2], [0, 0, 0, 1, 1, 2], [0], [0]>} : vector<6x8x8xf32>, vector<6x8x8xf32>, vector<6x8x8xf32> -> vector<6x8x8xf32>
    "tpu.trace_stop"() : () -> ()
    %47 = vector.extract_strided_slice %6 {offsets = [0, 16], sizes = [48, 8], strides = [1, 1]} : vector<48x96xf32> to vector<48x8xf32>
    %48 = vector.shape_cast %47 : vector<48x8xf32> to vector<6x8x8xf32>
    %49 = vector.extract_strided_slice %6 {offsets = [0, 48], sizes = [48, 8], strides = [1, 1]} : vector<48x96xf32> to vector<48x8xf32>
    %50 = vector.shape_cast %49 : vector<48x8xf32> to vector<6x8x8xf32>
    %51 = vector.extract_strided_slice %6 {offsets = [0, 80], sizes = [48, 8], strides = [1, 1]} : vector<48x96xf32> to vector<48x8xf32>
    %52 = vector.shape_cast %51 : vector<48x8xf32> to vector<6x8x8xf32>
    "tpu.trace_start"() <{level = 10 : i32, message = "bld,bmd->blm"}> : () -> ()
    %cst_16 = arith.constant dense<0.000000e+00> : vector<6x8x8xf32>
    %53 = tpu.matmul %48, %50, %cst_16 {dimension_numbers = #tpu.dot_dimension_numbers<[2], [2], [1], [1], [0, 0, 0, 1, 1, 1], [0], [0]>} : vector<6x8x8xf32>, vector<6x8x8xf32>, vector<6x8x8xf32> -> vector<6x8x8xf32>
    "tpu.trace_stop"() : () -> ()
    %cst_17 = arith.constant 0.353553385 : f32
    %54 = vector.broadcast %cst_17 : f32 to vector<6x8x8xf32>
    %55 = arith.mulf %53, %54 : vector<6x8x8xf32>
    %cst_18 = arith.constant dense<0xFF800000> : vector<6x8xf32>
    %56 = vector.multi_reduction <maximumf>, %55, %cst_18 [2] : vector<6x8x8xf32> to vector<6x8xf32>
    %57 = vector.shape_cast %56 : vector<6x8xf32> to vector<6x8x1xf32>
    %58 = vector.broadcast %57 : vector<6x8x1xf32> to vector<6x8x8xf32>
    %59 = arith.subf %55, %58 : vector<6x8x8xf32>
    %60 = math.exp %59 : vector<6x8x8xf32>
    %cst_19 = arith.constant dense<0.000000e+00> : vector<6x8xf32>
    %61 = vector.multi_reduction <add>, %60, %cst_19 [2] : vector<6x8x8xf32> to vector<6x8xf32>
    %62 = vector.shape_cast %61 : vector<6x8xf32> to vector<6x8x1xf32>
    %63 = tpu.reciprocal %62 {approx = true} : vector<6x8x1xf32> -> vector<6x8x1xf32>
    %64 = vector.broadcast %63 : vector<6x8x1xf32> to vector<6x8x8xf32>
    %65 = arith.mulf %60, %64 : vector<6x8x8xf32>
    "tpu.trace_start"() <{level = 10 : i32, message = "blm,bmd->bld"}> : () -> ()
    %cst_20 = arith.constant dense<0.000000e+00> : vector<6x8x8xf32>
    %66 = tpu.matmul %65, %52, %cst_20 {dimension_numbers = #tpu.dot_dimension_numbers<[2], [1], [1], [2], [0, 0, 0, 1, 1, 2], [0], [0]>} : vector<6x8x8xf32>, vector<6x8x8xf32>, vector<6x8x8xf32> -> vector<6x8x8xf32>
    "tpu.trace_stop"() : () -> ()
    %67 = vector.extract_strided_slice %6 {offsets = [0, 24], sizes = [48, 8], strides = [1, 1]} : vector<48x96xf32> to vector<48x8xf32>
    %68 = vector.shape_cast %67 : vector<48x8xf32> to vector<6x8x8xf32>
    %69 = vector.extract_strided_slice %6 {offsets = [0, 56], sizes = [48, 8], strides = [1, 1]} : vector<48x96xf32> to vector<48x8xf32>
    %70 = vector.shape_cast %69 : vector<48x8xf32> to vector<6x8x8xf32>
    %71 = vector.extract_strided_slice %6 {offsets = [0, 88], sizes = [48, 8], strides = [1, 1]} : vector<48x96xf32> to vector<48x8xf32>
    %72 = vector.shape_cast %71 : vector<48x8xf32> to vector<6x8x8xf32>
    "tpu.trace_start"() <{level = 10 : i32, message = "bld,bmd->blm"}> : () -> ()
    %cst_21 = arith.constant dense<0.000000e+00> : vector<6x8x8xf32>
    %73 = tpu.matmul %68, %70, %cst_21 {dimension_numbers = #tpu.dot_dimension_numbers<[2], [2], [1], [1], [0, 0, 0, 1, 1, 1], [0], [0]>} : vector<6x8x8xf32>, vector<6x8x8xf32>, vector<6x8x8xf32> -> vector<6x8x8xf32>
    "tpu.trace_stop"() : () -> ()
    %cst_22 = arith.constant 0.353553385 : f32
    %74 = vector.broadcast %cst_22 : f32 to vector<6x8x8xf32>
    %75 = arith.mulf %73, %74 : vector<6x8x8xf32>
    %cst_23 = arith.constant dense<0xFF800000> : vector<6x8xf32>
    %76 = vector.multi_reduction <maximumf>, %75, %cst_23 [2] : vector<6x8x8xf32> to vector<6x8xf32>
    %77 = vector.shape_cast %76 : vector<6x8xf32> to vector<6x8x1xf32>
    %78 = vector.broadcast %77 : vector<6x8x1xf32> to vector<6x8x8xf32>
    %79 = arith.subf %75, %78 : vector<6x8x8xf32>
    %80 = math.exp %79 : vector<6x8x8xf32>
    %cst_24 = arith.constant dense<0.000000e+00> : vector<6x8xf32>
    %81 = vector.multi_reduction <add>, %80, %cst_24 [2] : vector<6x8x8xf32> to vector<6x8xf32>
    %82 = vector.shape_cast %81 : vector<6x8xf32> to vector<6x8x1xf32>
    %83 = tpu.reciprocal %82 {approx = true} : vector<6x8x1xf32> -> vector<6x8x1xf32>
    %84 = vector.broadcast %83 : vector<6x8x1xf32> to vector<6x8x8xf32>
    %85 = arith.mulf %80, %84 : vector<6x8x8xf32>
    "tpu.trace_start"() <{level = 10 : i32, message = "blm,bmd->bld"}> : () -> ()
    %cst_25 = arith.constant dense<0.000000e+00> : vector<6x8x8xf32>
    %86 = tpu.matmul %85, %72, %cst_25 {dimension_numbers = #tpu.dot_dimension_numbers<[2], [1], [1], [2], [0, 0, 0, 1, 1, 2], [0], [0]>} : vector<6x8x8xf32>, vector<6x8x8xf32>, vector<6x8x8xf32> -> vector<6x8x8xf32>
    "tpu.trace_stop"() : () -> ()
    %87 = tpu.concatenate %26, %46, %66, %86 in 2 : vector<6x8x8xf32>, vector<6x8x8xf32>, vector<6x8x8xf32>, vector<6x8x8xf32> -> vector<6x8x32xf32>
    %88 = vector.shape_cast %87 : vector<6x8x32xf32> to vector<48x32xf32>
    %c0_26 = arith.constant 0 : index
    %c0_27 = arith.constant 0 : index
    %89 = vector.load %arg4[%c0_26, %c0_27] : memref<32x32xf32, #tpu.memory_space<vmem>>, vector<32x32xf32>
    %cst_28 = arith.constant dense<0.000000e+00> : vector<48x32xf32>
    %90 = tpu.matmul %88, %89, %cst_28 {dimension_numbers = #tpu.dot_dimension_numbers<[1], [0], [0], [1], [0, 0, 1, 1], [], []>} : vector<48x32xf32>, vector<32x32xf32>, vector<48x32xf32> -> vector<48x32xf32>
    %c0_29 = arith.constant 0 : index
    %c0_30 = arith.constant 0 : index
    %91 = vector.load %arg5[%c0_29, %c0_30] : memref<1x32xf32, #tpu.memory_space<vmem>>, vector<1x32xf32>
    %92 = vector.broadcast %91 : vector<1x32xf32> to vector<48x32xf32>
    %93 = arith.addf %90, %92 : vector<48x32xf32>
    %94 = arith.addf %1, %93 : vector<48x32xf32>
    %c0_31 = arith.constant 0 : index
    %c0_32 = arith.constant 0 : index
    %95 = vector.load %arg6[%c0_31, %c0_32] : memref<1x32xf32, #tpu.memory_space<vmem>>, vector<1x32xf32>
    %c0_33 = arith.constant 0 : index
    %c0_34 = arith.constant 0 : index
    %96 = vector.load %arg7[%c0_33, %c0_34] : memref<1x32xf32, #tpu.memory_space<vmem>>, vector<1x32xf32>
    %cst_35 = arith.constant dense<0.000000e+00> : vector<48xf32>
    %97 = vector.multi_reduction <add>, %94, %cst_35 [1] : vector<48x32xf32> to vector<48xf32>
    %98 = vector.shape_cast %97 : vector<48xf32> to vector<48x1xf32>
    %cst_36 = arith.constant 3.200000e+01 : f32
    %99 = vector.broadcast %cst_36 : f32 to vector<48x1xf32>
    %100 = arith.divf %98, %99 : vector<48x1xf32>
    %101 = vector.broadcast %100 : vector<48x1xf32> to vector<48x32xf32>
    %102 = arith.subf %94, %101 : vector<48x32xf32>
    %103 = arith.mulf %102, %102 : vector<48x32xf32>
    %cst_37 = arith.constant dense<0.000000e+00> : vector<48xf32>
    %104 = vector.multi_reduction <add>, %103, %cst_37 [1] : vector<48x32xf32> to vector<48xf32>
    %105 = vector.shape_cast %104 : vector<48xf32> to vector<48x1xf32>
    %cst_38 = arith.constant 3.200000e+01 : f32
    %106 = vector.broadcast %cst_38 : f32 to vector<48x1xf32>
    %107 = arith.divf %105, %106 : vector<48x1xf32>
    %cst_39 = arith.constant 9.99999974E-6 : f32
    %108 = vector.broadcast %cst_39 : f32 to vector<48x1xf32>
    %109 = arith.addf %107, %108 : vector<48x1xf32>
    %110 = math.rsqrt %109 : vector<48x1xf32>
    %111 = vector.broadcast %110 : vector<48x1xf32> to vector<48x32xf32>
    %112 = arith.mulf %102, %111 : vector<48x32xf32>
    %113 = vector.broadcast %95 : vector<1x32xf32> to vector<48x32xf32>
    %114 = arith.mulf %112, %113 : vector<48x32xf32>
    %115 = vector.broadcast %96 : vector<1x32xf32> to vector<48x32xf32>
    %116 = arith.addf %114, %115 : vector<48x32xf32>
    %c0_40 = arith.constant 0 : index
    %c0_41 = arith.constant 0 : index
    %117 = vector.load %arg8[%c0_40, %c0_41] : memref<32x256xf32, #tpu.memory_space<vmem>>, vector<32x256xf32>
    %cst_42 = arith.constant dense<0.000000e+00> : vector<48x256xf32>
    %118 = tpu.matmul %116, %117, %cst_42 {dimension_numbers = #tpu.dot_dimension_numbers<[1], [0], [0], [1], [0, 0, 1, 1], [], []>} : vector<48x32xf32>, vector<32x256xf32>, vector<48x256xf32> -> vector<48x256xf32>
    %c0_43 = arith.constant 0 : index
    %c0_44 = arith.constant 0 : index
    %119 = vector.load %arg9[%c0_43, %c0_44] : memref<1x256xf32, #tpu.memory_space<vmem>>, vector<1x256xf32>
    %120 = vector.broadcast %119 : vector<1x256xf32> to vector<48x256xf32>
    %121 = arith.addf %118, %120 : vector<48x256xf32>
    %cst_45 = arith.constant 0.000000e+00 : f32
    %122 = vector.broadcast %cst_45 : f32 to vector<48x256xf32>
    %123 = arith.maximumf %121, %122 : vector<48x256xf32>
    %c0_46 = arith.constant 0 : index
    %c0_47 = arith.constant 0 : index
    %124 = vector.load %arg10[%c0_46, %c0_47] : memref<256x32xf32, #tpu.memory_space<vmem>>, vector<256x32xf32>
    %cst_48 = arith.constant dense<0.000000e+00> : vector<48x32xf32>
    %125 = tpu.matmul %123, %124, %cst_48 {dimension_numbers = #tpu.dot_dimension_numbers<[1], [0], [0], [1], [0, 0, 1, 1], [], []>} : vector<48x256xf32>, vector<256x32xf32>, vector<48x32xf32> -> vector<48x32xf32>
    %c0_49 = arith.constant 0 : index
    %c0_50 = arith.constant 0 : index
    %126 = vector.load %arg11[%c0_49, %c0_50] : memref<1x32xf32, #tpu.memory_space<vmem>>, vector<1x32xf32>
    %127 = vector.broadcast %126 : vector<1x32xf32> to vector<48x32xf32>
    %128 = arith.addf %125, %127 : vector<48x32xf32>
    %129 = arith.addf %116, %128 : vector<48x32xf32>
    %c0_51 = arith.constant 0 : index
    %c0_52 = arith.constant 0 : index
    %130 = vector.load %arg12[%c0_51, %c0_52] : memref<1x32xf32, #tpu.memory_space<vmem>>, vector<1x32xf32>
    %c0_53 = arith.constant 0 : index
    %c0_54 = arith.constant 0 : index
    %131 = vector.load %arg13[%c0_53, %c0_54] : memref<1x32xf32, #tpu.memory_space<vmem>>, vector<1x32xf32>
    %cst_55 = arith.constant dense<0.000000e+00> : vector<48xf32>
    %132 = vector.multi_reduction <add>, %129, %cst_55 [1] : vector<48x32xf32> to vector<48xf32>
    %133 = vector.shape_cast %132 : vector<48xf32> to vector<48x1xf32>
    %cst_56 = arith.constant 3.200000e+01 : f32
    %134 = vector.broadcast %cst_56 : f32 to vector<48x1xf32>
    %135 = arith.divf %133, %134 : vector<48x1xf32>
    %136 = vector.broadcast %135 : vector<48x1xf32> to vector<48x32xf32>
    %137 = arith.subf %129, %136 : vector<48x32xf32>
    %138 = arith.mulf %137, %137 : vector<48x32xf32>
    %cst_57 = arith.constant dense<0.000000e+00> : vector<48xf32>
    %139 = vector.multi_reduction <add>, %138, %cst_57 [1] : vector<48x32xf32> to vector<48xf32>
    %140 = vector.shape_cast %139 : vector<48xf32> to vector<48x1xf32>
    %cst_58 = arith.constant 3.200000e+01 : f32
    %141 = vector.broadcast %cst_58 : f32 to vector<48x1xf32>
    %142 = arith.divf %140, %141 : vector<48x1xf32>
    %cst_59 = arith.constant 9.99999974E-6 : f32
    %143 = vector.broadcast %cst_59 : f32 to vector<48x1xf32>
    %144 = arith.addf %142, %143 : vector<48x1xf32>
    %145 = math.rsqrt %144 : vector<48x1xf32>
    %146 = vector.broadcast %145 : vector<48x1xf32> to vector<48x32xf32>
    %147 = arith.mulf %137, %146 : vector<48x32xf32>
    %148 = vector.broadcast %130 : vector<1x32xf32> to vector<48x32xf32>
    %149 = arith.mulf %147, %148 : vector<48x32xf32>
    %150 = vector.broadcast %131 : vector<1x32xf32> to vector<48x32xf32>
    %151 = arith.addf %149, %150 : vector<48x32xf32>
    %152 = vector.shape_cast %151 : vector<48x32xf32> to vector<6x8x32xf32>
    %c0_60 = arith.constant 0 : index
    %c0_61 = arith.constant 0 : index
    %c0_62 = arith.constant 0 : index
    %153 = vector.load %arg14[%c0_60, %c0_61, %c0_62] : memref<6x8x32xf32, #tpu.memory_space<vmem>>, vector<6x8x32xf32>
    tpu.vector_store %arg14[%c0_60, %c0_61, %c0_62], %152 {strides = array<i32>} : memref<6x8x32xf32, #tpu.memory_space<vmem>>, vector<6x8x32xf32>,
    return
  }
  func.func @transform_0(%arg0: i32) -> (i32, i32, i32) {
    %c0_i32 = arith.constant 0 : i32
    %c0_i32_0 = arith.constant 0 : i32
    %c0_i32_1 = arith.constant 0 : i32
    return %arg0, %c0_i32, %c0_i32_0 : i32, i32, i32
  }
  func.func @transform_1(%arg0: i32) -> (i32, i32) {
    %c0_i32 = arith.constant 0 : i32
    %c0_i32_0 = arith.constant 0 : i32
    %c0_i32_1 = arith.constant 0 : i32
    return %c0_i32, %c0_i32_0 : i32, i32
  }
  func.func @transform_2(%arg0: i32) -> (i32, i32) {
    %c0_i32 = arith.constant 0 : i32
    %c0_i32_0 = arith.constant 0 : i32
    %c0_i32_1 = arith.constant 0 : i32
    return %c0_i32, %c0_i32_0 : i32, i32
  }
  func.func @transform_3(%arg0: i32) -> (i32, i32) {
    %c0_i32 = arith.constant 0 : i32
    %c0_i32_0 = arith.constant 0 : i32
    %c0_i32_1 = arith.constant 0 : i32
    return %c0_i32, %c0_i32_0 : i32, i32
  }
  func.func @transform_4(%arg0: i32) -> (i32, i32) {
    %c0_i32 = arith.constant 0 : i32
    %c0_i32_0 = arith.constant 0 : i32
    %c0_i32_1 = arith.constant 0 : i32
    return %c0_i32, %c0_i32_0 : i32, i32
  }
  func.func @transform_5(%arg0: i32) -> (i32, i32) {
    %c0_i32 = arith.constant 0 : i32
    %c0_i32_0 = arith.constant 0 : i32
    %c0_i32_1 = arith.constant 0 : i32
    return %c0_i32, %c0_i32_0 : i32, i32
  }
  func.func @transform_6(%arg0: i32) -> (i32, i32) {
    %c0_i32 = arith.constant 0 : i32
    %c0_i32_0 = arith.constant 0 : i32
    %c0_i32_1 = arith.constant 0 : i32
    return %c0_i32, %c0_i32_0 : i32, i32
  }
  func.func @transform_7(%arg0: i32) -> (i32, i32) {
    %c0_i32 = arith.constant 0 : i32
    %c0_i32_0 = arith.constant 0 : i32
    %c0_i32_1 = arith.constant 0 : i32
    return %c0_i32, %c0_i32_0 : i32, i32
  }
  func.func @transform_8(%arg0: i32) -> (i32, i32) {
    %c0_i32 = arith.constant 0 : i32
    %c0_i32_0 = arith.constant 0 : i32
    %c0_i32_1 = arith.constant 0 : i32
    return %c0_i32, %c0_i32_0 : i32, i32
  }
  func.func @transform_9(%arg0: i32) -> (i32, i32) {
    %c0_i32 = arith.constant 0 : i32
    %c0_i32_0 = arith.constant 0 : i32
    %c0_i32_1 = arith.constant 0 : i32
    return %c0_i32, %c0_i32_0 : i32, i32
  }
  func.func @transform_10(%arg0: i32) -> (i32, i32) {
    %c0_i32 = arith.constant 0 : i32
    %c0_i32_0 = arith.constant 0 : i32
    %c0_i32_1 = arith.constant 0 : i32
    return %c0_i32, %c0_i32_0 : i32, i32
  }
  func.func @transform_11(%arg0: i32) -> (i32, i32) {
    %c0_i32 = arith.constant 0 : i32
    %c0_i32_0 = arith.constant 0 : i32
    %c0_i32_1 = arith.constant 0 : i32
    return %c0_i32, %c0_i32_0 : i32, i32
  }
  func.func @transform_12(%arg0: i32) -> (i32, i32) {
    %c0_i32 = arith.constant 0 : i32
    %c0_i32_0 = arith.constant 0 : i32
    %c0_i32_1 = arith.constant 0 : i32
    return %c0_i32, %c0_i32_0 : i32, i32
  }
  func.func @transform_13(%arg0: i32) -> (i32, i32, i32) {
    %c0_i32 = arith.constant 0 : i32
    %c0_i32_0 = arith.constant 0 : i32
    %c0_i32_1 = arith.constant 0 : i32
    return %arg0, %c0_i32, %c0_i32_0 : i32, i32, i32
  }
}

</mosaic_0001>

<llo_original>
// kernel: tpu_custom_call.1
$region0: #{tpu_custom_call.1}
  #allocation0 [shape = 'u32[]', space=smem, size = 0x4, offset = 0x4, fixed_abs, tag = 'smem constant byte address 0x4 - core index']
  #allocation1 [shape = 'u32[144,128]{1,0:T(1,128)}', space=vmem, size = 0x12000, scoped, tag = 'internal scratch']
  %s0 = inlined_call_operand.vmem [shape: f32[6,8,32], index: 0, kind: input, shape index: {}]
  %s1 = inlined_call_operand.vmem [shape: f32[32,96], index: 1, kind: input, shape index: {}]
  %s2 = inlined_call_operand.vmem [shape: f32[1,96], index: 2, kind: input, shape index: {}]
  %s3 = inlined_call_operand.vmem [shape: f32[32,32], index: 3, kind: input, shape index: {}]
  %s4 = inlined_call_operand.vmem [shape: f32[1,32], index: 4, kind: input, shape index: {}]
  %s5 = inlined_call_operand.vmem [shape: f32[1,32], index: 5, kind: input, shape index: {}]
  %s6 = inlined_call_operand.vmem [shape: f32[1,32], index: 6, kind: input, shape index: {}]
  %s7 = inlined_call_operand.vmem [shape: f32[32,256], index: 7, kind: input, shape index: {}]
  %s8 = inlined_call_operand.vmem [shape: f32[1,256], index: 8, kind: input, shape index: {}]
  %s9 = inlined_call_operand.vmem [shape: f32[256,32], index: 9, kind: input, shape index: {}]
  %s10 = inlined_call_operand.vmem [shape: f32[1,32], index: 10, kind: input, shape index: {}]
  %s11 = inlined_call_operand.vmem [shape: f32[1,32], index: 11, kind: input, shape index: {}]
  %s12 = inlined_call_operand.vmem [shape: f32[1,32], index: 12, kind: input, shape index: {}]
  %s13 = inlined_call_operand.hbm [shape: f32[6,8,32], index: 13, kind: output, shape index: {}]
  %s14 = sld [smem:[#allocation0]]
  $region62: #{tpu_custom_call.1} parent=0
    _
  %s16 = ssub.s32 1, %s14
  %s17 = scalar_select 0, %s16, %s14
  $region1: #{tpu_custom_call.1} parent=0
    #allocation2 [shape = 'u8[24576]{0}', space=vmem, size = 0x6000, scoped, tag = 'output window, operand 0, single buffered']
    #allocation3 [shape = 's32[1]{0}', space=sflag, size = 0x4, scoped, tag = 'scoped memory for tpu_custom_call.1']
    %18 = vsyncpa [#allocation3], 0
    // Predicated region
    $region2: #{tpu_custom_call.1} parent=1 // pred_check
      _
    $region3: #{tpu_custom_call.1} parent=1 // pred_check_branch
      %20 = sbr.rel (0) target = $region5
    $region4: #{tpu_custom_call.1} parent=1 // pred_region
      _
    $region5: #{tpu_custom_call.1} parent=1 // pred_fallthru
      _
    // Predicated region
    $region6: #{tpu_custom_call.1} parent=1 // pred_check
      _
    $region7: #{tpu_custom_call.1} parent=1 // pred_check_branch
      %22 = sbr.rel (0) target = $region9
    $region8: #{tpu_custom_call.1} parent=1 // pred_region
      _
    $region9: #{tpu_custom_call.1} parent=1 // pred_fallthru
      _
    // Predicated region
    $region10: #{tpu_custom_call.1} parent=1 // pred_check
      _
    $region11: #{tpu_custom_call.1} parent=1 // pred_check_branch
      %24 = sbr.rel (0) target = $region13
    $region12: #{tpu_custom_call.1} parent=1 // pred_region
      _
    $region13: #{tpu_custom_call.1} parent=1 // pred_fallthru
      _
    // Predicated region
    $region14: #{tpu_custom_call.1} parent=1 // pred_check
      _
    $region15: #{tpu_custom_call.1} parent=1 // pred_check_branch
      %26 = sbr.rel (0) target = $region17
    $region16: #{tpu_custom_call.1} parent=1 // pred_region
      _
    $region17: #{tpu_custom_call.1} parent=1 // pred_fallthru
      _
    // Predicated region
    $region18: #{tpu_custom_call.1} parent=1 // pred_check
      _
    $region19: #{tpu_custom_call.1} parent=1 // pred_check_branch
      %28 = sbr.rel (0) target = $region21
    $region20: #{tpu_custom_call.1} parent=1 // pred_region
      _
    $region21: #{tpu_custom_call.1} parent=1 // pred_fallthru
      _
    // Predicated region
    $region22: #{tpu_custom_call.1} parent=1 // pred_check
      _
    $region23: #{tpu_custom_call.1} parent=1 // pred_check_branch
      %30 = sbr.rel (0) target = $region25
    $region24: #{tpu_custom_call.1} parent=1 // pred_region
      _
    $region25: #{tpu_custom_call.1} parent=1 // pred_fallthru
      _
    // Predicated region
    $region26: #{tpu_custom_call.1} parent=1 // pred_check
      _
    $region27: #{tpu_custom_call.1} parent=1 // pred_check_branch
      %32 = sbr.rel (0) target = $region29
    $region28: #{tpu_custom_call.1} parent=1 // pred_region
      _
    $region29: #{tpu_custom_call.1} parent=1 // pred_fallthru
      _
    // Predicated region
    $region30: #{tpu_custom_call.1} parent=1 // pred_check
      _
    $region31: #{tpu_custom_call.1} parent=1 // pred_check_branch
      %34 = sbr.rel (0) target = $region33
    $region32: #{tpu_custom_call.1} parent=1 // pred_region
      _
    $region33: #{tpu_custom_call.1} parent=1 // pred_fallthru
      _
    // Predicated region
    $region34: #{tpu_custom_call.1} parent=1 // pred_check
      _
    $region35: #{tpu_custom_call.1} parent=1 // pred_check_branch
      %36 = sbr.rel (0) target = $region37
    $region36: #{tpu_custom_call.1} parent=1 // pred_region
      _
    $region37: #{tpu_custom_call.1} parent=1 // pred_fallthru
      _
    // Predicated region
    $region38: #{tpu_custom_call.1} parent=1 // pred_check
      _
    $region39: #{tpu_custom_call.1} parent=1 // pred_check_branch
      %38 = sbr.rel (0) target = $region41
    $region40: #{tpu_custom_call.1} parent=1 // pred_region
      _
    $region41: #{tpu_custom_call.1} parent=1 // pred_fallthru
      _
    // Predicated region
    $region42: #{tpu_custom_call.1} parent=1 // pred_check
      _
    $region43: #{tpu_custom_call.1} parent=1 // pred_check_branch
      %40 = sbr.rel (0) target = $region45
    $region44: #{tpu_custom_call.1} parent=1 // pred_region
      _
    $region45: #{tpu_custom_call.1} parent=1 // pred_fallthru
      _
    // Predicated region
    $region46: #{tpu_custom_call.1} parent=1 // pred_check
      _
    $region47: #{tpu_custom_call.1} parent=1 // pred_check_branch
      %42 = sbr.rel (0) target = $region49
    $region48: #{tpu_custom_call.1} parent=1 // pred_region
      _
    $region49: #{tpu_custom_call.1} parent=1 // pred_fallthru
      _
    // Predicated region
    $region50: #{tpu_custom_call.1} parent=1 // pred_check
      _
    $region51: #{tpu_custom_call.1} parent=1 // pred_check_branch
      %44 = sbr.rel (0) target = $region53
    $region52: #{tpu_custom_call.1} parent=1 // pred_region
      _
    $region53: #{tpu_custom_call.1} parent=1 // pred_fallthru
      _
    %v45 = vld [vmem:[%s0] sm:$0xff]
    %v46 = vld [vmem:[%s0 + $0x8] sm:$0xff]
    %v47 = vld [vmem:[%s0 + $0x10] sm:$0xff]
    %v48 = vld [vmem:[%s0 + $0x18] sm:$0xff]
    %v49 = vld [vmem:[%s0 + $0x20] sm:$0xff]
    %v50 = vld [vmem:[%s0 + $0x28] sm:$0xff]
    %v51 = vld [vmem:[%s1] sm:$0xff]
    %v52 = vld [vmem:[%s1 + $0x8] sm:$0xff]
    %v53 = vld [vmem:[%s1 + $0x10] sm:$0xff]
    %v54 = vld [vmem:[%s1 + $0x18] sm:$0xff]
    %v55 = vld [vmem:[%s2] sm:$0x1]
    %v57 = vlaneseq
    %v58 = vshrl.u32 %v57, 7
    %v59 = vsub.s32 0, %v58
    %v60 = vrot.slane %v55, %v59
    %vm62 = vcmask 261120
    %v64 = vsel %vm62, %v45, 0
    %v67 = vsel %vm62, %v46, 0
    %v70 = vsel %vm62, %v47, 0
    %v73 = vsel %vm62, %v48, 0
    %v76 = vsel %vm62, %v49, 0
    %v79 = vsel %vm62, %v50, 0
    %81 = vmatprep.subr.mxu0 0.0
    %82 = vmatpush1.msra.mxu0 0.0
    %83 = vmatprep.subr.mxu0 0.0
    %84 = vmatpush1.msra.mxu0 0.0
    %85 = vmatprep.subr.mxu0 0.0
    %86 = vmatpush1.msra.mxu0 0.0
    %87 = vmatprep.subr.mxu0 0.0
    %88 = vmatpush1.msra.mxu0 0.0
    %89 = vmatprep.subr.mxu0 0.0
    %90 = vmatpush1.msra.mxu0 0.0
    %91 = vmatprep.subr.mxu0 0.0
    %92 = vmatpush1.msra.mxu0 0.0
    %93 = vmatprep.subr.mxu0 0.0
    %94 = vmatpush1.msra.mxu0 0.0
    %95 = vmatprep.subr.mxu0 0.0
    %96 = vmatpush1.msra.mxu0 0.0
    %97 = vmatprep.subr.mxu0 0.0
    %98 = vmatpush1.msra.mxu0 0.0
    %99 = vmatprep.subr.mxu0 0.0
    %100 = vmatpush1.msra.mxu0 0.0
    %101 = vmatprep.subr.mxu0 0.0
    %102 = vmatpush1.msra.mxu0 0.0
    %103 = vmatprep.subr.mxu0 0.0
    %104 = vmatpush1.msra.mxu0 0.0
    %105 = vmatprep.subr.mxu0 0.0
    %106 = vmatpush1.msra.mxu0 %v54
    %107 = vmatprep.subr.mxu0 0.0
    %108 = vmatpush1.msra.mxu0 %v53
    %109 = vmatprep.subr.mxu0 0.0
    %110 = vmatpush1.msra.mxu0 %v52
    %111 = vmatprep.subr.mxu0 0.0
    %112 = vmatpush1.msra.mxu0 %v51
    %113 = vmatprep.subr.mxu0 0.0
    %114 = vmatpush2.msra.mxu0 0.0
    %115 = vmatprep.subr.mxu0 0.0
    %116 = vmatpush2.msra.mxu0 0.0
    %117 = vmatprep.subr.mxu0 0.0
    %118 = vmatpush2.msra.mxu0 0.0
    %119 = vmatprep.subr.mxu0 0.0
    %120 = vmatpush2.msra.mxu0 0.0
    %121 = vmatprep.subr.mxu0 0.0
    %122 = vmatpush2.msra.mxu0 0.0
    %123 = vmatprep.subr.mxu0 0.0
    %124 = vmatpush2.msra.mxu0 0.0
    %125 = vmatprep.subr.mxu0 0.0
    %126 = vmatpush2.msra.mxu0 0.0
    %127 = vmatprep.subr.mxu0 0.0
    %128 = vmatpush2.msra.mxu0 0.0
    %129 = vmatprep.subr.mxu0 0.0
    %130 = vmatpush2.msra.mxu0 0.0
    %131 = vmatprep.subr.mxu0 0.0
    %132 = vmatpush2.msra.mxu0 0.0
    %133 = vmatprep.subr.mxu0 0.0
    %134 = vmatpush2.msra.mxu0 0.0
    %135 = vmatprep.subr.mxu0 0.0
    %136 = vmatpush2.msra.mxu0 0.0
    %137 = vmatprep.subr.mxu0 0.0
    %138 = vmatpush2.msra.mxu0 0.0
    %139 = vmatprep.subr.mxu0 0.0
    %140 = vmatpush2.msra.mxu0 0.0
    %141 = vmatprep.subr.mxu0 0.0
    %142 = vmatpush2.msra.mxu0 0.0
    %143 = vmatprep.subr.mxu0 0.0
    %144 = vmatpush2.msra.mxu0 0.0
    %145 = vmatprep.mubr.f32.mxu0 0.0
    %146 = vmatmul.mubr.f32.gmra.mxu0 %v64
    %v147 = vpop.f32.mrf.mxu0
    %v148 = vadd.f32 %v60, %v147
    %v149 = vpop.f32.mrf.mxu0
    %150 = vmatprep.mubr.f32.mxu0 0.0
    %151 = vmatmul.mubr.f32.gmra.mxu0 %v67
    %v152 = vpop.f32.mrf.mxu0
    %v153 = vadd.f32 %v60, %v152
    %v154 = vpop.f32.mrf.mxu0
    %155 = vmatprep.mubr.f32.mxu0 0.0
    %156 = vmatmul.mubr.f32.gmra.mxu0 %v70
    %v157 = vpop.f32.mrf.mxu0
    %v158 = vadd.f32 %v60, %v157
    %v159 = vpop.f32.mrf.mxu0
    %160 = vmatprep.mubr.f32.mxu0 0.0
    %161 = vmatmul.mubr.f32.gmra.mxu0 %v73
    %v162 = vpop.f32.mrf.mxu0
    %v163 = vadd.f32 %v60, %v162
    %v164 = vpop.f32.mrf.mxu0
    %165 = vmatprep.mubr.f32.mxu0 0.0
    %166 = vmatmul.mubr.f32.gmra.mxu0 %v76
    %v167 = vpop.f32.mrf.mxu0
    %v168 = vadd.f32 %v60, %v167
    %v169 = vpop.f32.mrf.mxu0
    %170 = vmatprep.mubr.f32.mxu0 0.0
    %171 = vmatmul.mubr.f32.gmra.mxu0 %v79
    %v172 = vpop.f32.mrf.mxu0
    %v173 = vadd.f32 %v60, %v172
    %v174 = vpop.f32.mrf.mxu0
    %175 = vdwg.mxu0
    %177 = vrot.lane.b32.xlu0 %v148, 96
    %v178 = vpop.permute.xlu0 %177
    %vm179 = vcmask 64512
    %v180 = vsel %vm179, %v148, 0
    %v182 = vsel %vm179, %v178, 0
    %184 = vmatprep.subr.mxu0 0.0
    %185 = vmatpush1.xpose.msra.mxu0 0.0
    %186 = vmatprep.subr.mxu0 0.0
    %187 = vmatpush1.xpose.msra.mxu0 0.0
    %188 = vmatprep.subr.mxu0 0.0
    %189 = vmatpush1.xpose.msra.mxu0 0.0
    %190 = vmatprep.subr.mxu0 0.0
    %191 = vmatpush1.xpose.msra.mxu0 0.0
    %192 = vmatprep.subr.mxu0 0.0
    %193 = vmatpush1.xpose.msra.mxu0 0.0
    %194 = vmatprep.subr.mxu0 0.0
    %195 = vmatpush1.xpose.msra.mxu0 0.0
    %196 = vmatprep.subr.mxu0 0.0
    %197 = vmatpush1.xpose.msra.mxu0 0.0
    %198 = vmatprep.subr.mxu0 0.0
    %199 = vmatpush1.xpose.msra.mxu0 0.0
    %200 = vmatprep.subr.mxu0 0.0
    %201 = vmatpush1.xpose.msra.mxu0 0.0
    %202 = vmatprep.subr.mxu0 0.0
    %203 = vmatpush1.xpose.msra.mxu0 0.0
    %204 = vmatprep.subr.mxu0 0.0
    %205 = vmatpush1.xpose.msra.mxu0 0.0
    %206 = vmatprep.subr.mxu0 0.0
    %207 = vmatpush1.xpose.msra.mxu0 0.0
    %208 = vmatprep.subr.mxu0 0.0
    %209 = vmatpush1.xpose.msra.mxu0 0.0
    %210 = vmatprep.subr.mxu0 0.0
    %211 = vmatpush1.xpose.msra.mxu0 0.0
    %212 = vmatprep.subr.mxu0 0.0
    %213 = vmatpush1.xpose.msra.mxu0 0.0
    %214 = vmatprep.subr.mxu0 0.0
    %215 = vmatpush1.xpose.msra.mxu0 %v182
    %216 = vmatprep.subr.mxu0 0.0
    %217 = vmatpush2.xpose.msra.mxu0 0.0
    %218 = vmatprep.subr.mxu0 0.0
    %219 = vmatpush2.xpose.msra.mxu0 0.0
    %220 = vmatprep.subr.mxu0 0.0
    %221 = vmatpush2.xpose.msra.mxu0 0.0
    %222 = vmatprep.subr.mxu0 0.0
    %223 = vmatpush2.xpose.msra.mxu0 0.0
    %224 = vmatprep.subr.mxu0 0.0
    %225 = vmatpush2.xpose.msra.mxu0 0.0
    %226 = vmatprep.subr.mxu0 0.0
    %227 = vmatpush2.xpose.msra.mxu0 0.0
    %228 = vmatprep.subr.mxu0 0.0
    %229 = vmatpush2.xpose.msra.mxu0 0.0
    %230 = vmatprep.subr.mxu0 0.0
    %231 = vmatpush2.xpose.msra.mxu0 0.0
    %232 = vmatprep.subr.mxu0 0.0
    %233 = vmatpush2.xpose.msra.mxu0 0.0
    %234 = vmatprep.subr.mxu0 0.0
    %235 = vmatpush2.xpose.msra.mxu0 0.0
    %236 = vmatprep.subr.mxu0 0.0
    %237 = vmatpush2.xpose.msra.mxu0 0.0
    %238 = vmatprep.subr.mxu0 0.0
    %239 = vmatpush2.xpose.msra.mxu0 0.0
    %240 = vmatprep.subr.mxu0 0.0
    %241 = vmatpush2.xpose.msra.mxu0 0.0
    %242 = vmatprep.subr.mxu0 0.0
    %243 = vmatpush2.xpose.msra.mxu0 0.0
    %244 = vmatprep.subr.mxu0 0.0
    %245 = vmatpush2.xpose.msra.mxu0 0.0
    %246 = vmatprep.subr.mxu0 0.0
    %247 = vmatpush2.xpose.msra.mxu0 0.0
    %248 = vmatprep.mubr.f32.mxu0 0.0
    %249 = vmatmul.mubr.f32.gmra.mxu0 %v180
    %v250 = vpop.f32.mrf.mxu0
    %v251 = vadd.f32 0.0, %v250
    %v252 = vpop.f32.mrf.mxu0
    %253 = vdwg.mxu0
    %255 = vrot.lane.b32.xlu0 %v153, 96
    %v256 = vpop.permute.xlu0 %255
    %v257 = vsel %vm179, %v153, 0
    %v259 = vsel %vm179, %v256, 0
    %261 = vmatprep.subr.mxu0 0.0
    %262 = vmatpush1.xpose.msra.mxu0 0.0
    %263 = vmatprep.subr.mxu0 0.0
    %264 = vmatpush1.xpose.msra.mxu0 0.0
    %265 = vmatprep.subr.mxu0 0.0
    %266 = vmatpush1.xpose.msra.mxu0 0.0
    %267 = vmatprep.subr.mxu0 0.0
    %268 = vmatpush1.xpose.msra.mxu0 0.0
    %269 = vmatprep.subr.mxu0 0.0
    %270 = vmatpush1.xpose.msra.mxu0 0.0
    %271 = vmatprep.subr.mxu0 0.0
    %272 = vmatpush1.xpose.msra.mxu0 0.0
    %273 = vmatprep.subr.mxu0 0.0
    %274 = vmatpush1.xpose.msra.mxu0 0.0
    %275 = vmatprep.subr.mxu0 0.0
    %276 = vmatpush1.xpose.msra.mxu0 0.0
    %277 = vmatprep.subr.mxu0 0.0
    %278 = vmatpush1.xpose.msra.mxu0 0.0
    %279 = vmatprep.subr.mxu0 0.0
    %280 = vmatpush1.xpose.msra.mxu0 0.0
    %281 = vmatprep.subr.mxu0 0.0
    %282 = vmatpush1.xpose.msra.mxu0 0.0
    %283 = vmatprep.subr.mxu0 0.0
    %284 = vmatpush1.xpose.msra.mxu0 0.0
    %285 = vmatprep.subr.mxu0 0.0
    %286 = vmatpush1.xpose.msra.mxu0 0.0
    %287 = vmatprep.subr.mxu0 0.0
    %288 = vmatpush1.xpose.msra.mxu0 0.0
    %289 = vmatprep.subr.mxu0 0.0
    %290 = vmatpush1.xpose.msra.mxu0 0.0
    %291 = vmatprep.subr.mxu0 0.0
    %292 = vmatpush1.xpose.msra.mxu0 %v259
    %293 = vmatprep.subr.mxu0 0.0
    %294 = vmatpush2.xpose.msra.mxu0 0.0
    %295 = vmatprep.subr.mxu0 0.0
    %296 = vmatpush2.xpose.msra.mxu0 0.0
    %297 = vmatprep.subr.mxu0 0.0
    %298 = vmatpush2.xpose.msra.mxu0 0.0
    %299 = vmatprep.subr.mxu0 0.0
    %300 = vmatpush2.xpose.msra.mxu0 0.0
    %301 = vmatprep.subr.mxu0 0.0
    %302 = vmatpush2.xpose.msra.mxu0 0.0
    %303 = vmatprep.subr.mxu0 0.0
    %304 = vmatpush2.xpose.msra.mxu0 0.0
    %305 = vmatprep.subr.mxu0 0.0
    %306 = vmatpush2.xpose.msra.mxu0 0.0
    %307 = vmatprep.subr.mxu0 0.0
    %308 = vmatpush2.xpose.msra.mxu0 0.0
    %309 = vmatprep.subr.mxu0 0.0
    %310 = vmatpush2.xpose.msra.mxu0 0.0
    %311 = vmatprep.subr.mxu0 0.0
    %312 = vmatpush2.xpose.msra.mxu0 0.0
    %313 = vmatprep.subr.mxu0 0.0
    %314 = vmatpush2.xpose.msra.mxu0 0.0
    %315 = vmatprep.subr.mxu0 0.0
    %316 = vmatpush2.xpose.msra.mxu0 0.0
    %317 = vmatprep.subr.mxu0 0.0
    %318 = vmatpush2.xpose.msra.mxu0 0.0
    %319 = vmatprep.subr.mxu0 0.0
    %320 = vmatpush2.xpose.msra.mxu0 0.0
    %321 = vmatprep.subr.mxu0 0.0
    %322 = vmatpush2.xpose.msra.mxu0 0.0
    %323 = vmatprep.subr.mxu0 0.0
    %324 = vmatpush2.xpose.msra.mxu0 0.0
    %325 = vmatprep.mubr.f32.mxu0 0.0
    %326 = vmatmul.mubr.f32.gmra.mxu0 %v257
    %v327 = vpop.f32.mrf.mxu0
    %v328 = vadd.f32 0.0, %v327
    %v329 = vpop.f32.mrf.mxu0
    %330 = vdwg.mxu0
    %332 = vrot.lane.b32.xlu0 %v158, 96
    %v333 = vpop.permute.xlu0 %332
    %v334 = vsel %vm179, %v158, 0
    %v336 = vsel %vm179, %v333, 0
    %338 = vmatprep.subr.mxu0 0.0
    %339 = vmatpush1.xpose.msra.mxu0 0.0
    %340 = vmatprep.subr.mxu0 0.0
    %341 = vmatpush1.xpose.msra.mxu0 0.0
    %342 = vmatprep.subr.mxu0 0.0
    %343 = vmatpush1.xpose.msra.mxu0 0.0
    %344 = vmatprep.subr.mxu0 0.0
    %345 = vmatpush1.xpose.msra.mxu0 0.0
    %346 = vmatprep.subr.mxu0 0.0
    %347 = vmatpush1.xpose.msra.mxu0 0.0
    %348 = vmatprep.subr.mxu0 0.0
    %349 = vmatpush1.xpose.msra.mxu0 0.0
    %350 = vmatprep.subr.mxu0 0.0
    %351 = vmatpush1.xpose.msra.mxu0 0.0
    %352 = vmatprep.subr.mxu0 0.0
    %353 = vmatpush1.xpose.msra.mxu0 0.0
    %354 = vmatprep.subr.mxu0 0.0
    %355 = vmatpush1.xpose.msra.mxu0 0.0
    %356 = vmatprep.subr.mxu0 0.0
    %357 = vmatpush1.xpose.msra.mxu0 0.0
    %358 = vmatprep.subr.mxu0 0.0
    %359 = vmatpush1.xpose.msra.mxu0 0.0
    %360 = vmatprep.subr.mxu0 0.0
    %361 = vmatpush1.xpose.msra.mxu0 0.0
    %362 = vmatprep.subr.mxu0 0.0
    %363 = vmatpush1.xpose.msra.mxu0 0.0
    %364 = vmatprep.subr.mxu0 0.0
    %365 = vmatpush1.xpose.msra.mxu0 0.0
    %366 = vmatprep.subr.mxu0 0.0
    %367 = vmatpush1.xpose.msra.mxu0 0.0
    %368 = vmatprep.subr.mxu0 0.0
    %369 = vmatpush1.xpose.msra.mxu0 %v336
    %370 = vmatprep.subr.mxu0 0.0
    %371 = vmatpush2.xpose.msra.mxu0 0.0
    %372 = vmatprep.subr.mxu0 0.0
    %373 = vmatpush2.xpose.msra.mxu0 0.0
    %374 = vmatprep.subr.mxu0 0.0
    %375 = vmatpush2.xpose.msra.mxu0 0.0
    %376 = vmatprep.subr.mxu0 0.0
    %377 = vmatpush2.xpose.msra.mxu0 0.0
    %378 = vmatprep.subr.mxu0 0.0
    %379 = vmatpush2.xpose.msra.mxu0 0.0
    %380 = vmatprep.subr.mxu0 0.0
    %381 = vmatpush2.xpose.msra.mxu0 0.0
    %382 = vmatprep.subr.mxu0 0.0
    %383 = vmatpush2.xpose.msra.mxu0 0.0
    %384 = vmatprep.subr.mxu0 0.0
    %385 = vmatpush2.xpose.msra.mxu0 0.0
    %386 = vmatprep.subr.mxu0 0.0
    %387 = vmatpush2.xpose.msra.mxu0 0.0
    %388 = vmatprep.subr.mxu0 0.0
    %389 = vmatpush2.xpose.msra.mxu0 0.0
    %390 = vmatprep.subr.mxu0 0.0
    %391 = vmatpush2.xpose.msra.mxu0 0.0
    %392 = vmatprep.subr.mxu0 0.0
    %393 = vmatpush2.xpose.msra.mxu0 0.0
    %394 = vmatprep.subr.mxu0 0.0
    %395 = vmatpush2.xpose.msra.mxu0 0.0
    %396 = vmatprep.subr.mxu0 0.0
    %397 = vmatpush2.xpose.msra.mxu0 0.0
    %398 = vmatprep.subr.mxu0 0.0
    %399 = vmatpush2.xpose.msra.mxu0 0.0
    %400 = vmatprep.subr.mxu0 0.0
    %401 = vmatpush2.xpose.msra.mxu0 0.0
    %402 = vmatprep.mubr.f32.mxu0 0.0
    %403 = vmatmul.mubr.f32.gmra.mxu0 %v334
    %v404 = vpop.f32.mrf.mxu0
    %v405 = vadd.f32 0.0, %v404
    %v406 = vpop.f32.mrf.mxu0
    %407 = vdwg.mxu0
    %409 = vrot.lane.b32.xlu0 %v163, 96
    %v410 = vpop.permute.xlu0 %409
    %v411 = vsel %vm179, %v163, 0
    %v413 = vsel %vm179, %v410, 0
    %415 = vmatprep.subr.mxu0 0.0
    %416 = vmatpush1.xpose.msra.mxu0 0.0
    %417 = vmatprep.subr.mxu0 0.0
    %418 = vmatpush1.xpose.msra.mxu0 0.0
    %419 = vmatprep.subr.mxu0 0.0
    %420 = vmatpush1.xpose.msra.mxu0 0.0
    %421 = vmatprep.subr.mxu0 0.0
    %422 = vmatpush1.xpose.msra.mxu0 0.0
    %423 = vmatprep.subr.mxu0 0.0
    %424 = vmatpush1.xpose.msra.mxu0 0.0
    %425 = vmatprep.subr.mxu0 0.0
    %426 = vmatpush1.xpose.msra.mxu0 0.0
    %427 = vmatprep.subr.mxu0 0.0
    %428 = vmatpush1.xpose.msra.mxu0 0.0
    %429 = vmatprep.subr.mxu0 0.0
    %430 = vmatpush1.xpose.msra.mxu0 0.0
    %431 = vmatprep.subr.mxu0 0.0
    %432 = vmatpush1.xpose.msra.mxu0 0.0
    %433 = vmatprep.subr.mxu0 0.0
    %434 = vmatpush1.xpose.msra.mxu0 0.0
    %435 = vmatprep.subr.mxu0 0.0
    %436 = vmatpush1.xpose.msra.mxu0 0.0
    %437 = vmatprep.subr.mxu0 0.0
    %438 = vmatpush1.xpose.msra.mxu0 0.0
    %439 = vmatprep.subr.mxu0 0.0
    %440 = vmatpush1.xpose.msra.mxu0 0.0
    %441 = vmatprep.subr.mxu0 0.0
    %442 = vmatpush1.xpose.msra.mxu0 0.0
    %443 = vmatprep.subr.mxu0 0.0
    %444 = vmatpush1.xpose.msra.mxu0 0.0
    %445 = vmatprep.subr.mxu0 0.0
    %446 = vmatpush1.xpose.msra.mxu0 %v413
    %447 = vmatprep.subr.mxu0 0.0
    %448 = vmatpush2.xpose.msra.mxu0 0.0
    %449 = vmatprep.subr.mxu0 0.0
    %450 = vmatpush2.xpose.msra.mxu0 0.0
    %451 = vmatprep.subr.mxu0 0.0
    %452 = vmatpush2.xpose.msra.mxu0 0.0
    %453 = vmatprep.subr.mxu0 0.0
    %454 = vmatpush2.xpose.msra.mxu0 0.0
    %455 = vmatprep.subr.mxu0 0.0
    %456 = vmatpush2.xpose.msra.mxu0 0.0
    %457 = vmatprep.subr.mxu0 0.0
    %458 = vmatpush2.xpose.msra.mxu0 0.0
    %459 = vmatprep.subr.mxu0 0.0
    %460 = vmatpush2.xpose.msra.mxu0 0.0
    %461 = vmatprep.subr.mxu0 0.0
    %462 = vmatpush2.xpose.msra.mxu0 0.0
    %463 = vmatprep.subr.mxu0 0.0
    %464 = vmatpush2.xpose.msra.mxu0 0.0
    %465 = vmatprep.subr.mxu0 0.0
    %466 = vmatpush2.xpose.msra.mxu0 0.0
    %467 = vmatprep.subr.mxu0 0.0
    %468 = vmatpush2.xpose.msra.mxu0 0.0
    %469 = vmatprep.subr.mxu0 0.0
    %470 = vmatpush2.xpose.msra.mxu0 0.0
    %471 = vmatprep.subr.mxu0 0.0
    %472 = vmatpush2.xpose.msra.mxu0 0.0
    %473 = vmatprep.subr.mxu0 0.0
    %474 = vmatpush2.xpose.msra.mxu0 0.0
    %475 = vmatprep.subr.mxu0 0.0
    %476 = vmatpush2.xpose.msra.mxu0 0.0
    %477 = vmatprep.subr.mxu0 0.0
    %478 = vmatpush2.xpose.msra.mxu0 0.0
    %479 = vmatprep.mubr.f32.mxu0 0.0
    %480 = vmatmul.mubr.f32.gmra.mxu0 %v411
    %v481 = vpop.f32.mrf.mxu0
    %v482 = vadd.f32 0.0, %v481
    %v483 = vpop.f32.mrf.mxu0
    %484 = vdwg.mxu0
    %486 = vrot.lane.b32.xlu0 %v168, 96
    %v487 = vpop.permute.xlu0 %486
    %v488 = vsel %vm179, %v168, 0
    %v490 = vsel %vm179, %v487, 0
    %492 = vmatprep.subr.mxu0 0.0
    %493 = vmatpush1.xpose.msra.mxu0 0.0
    %494 = vmatprep.subr.mxu0 0.0
    %495 = vmatpush1.xpose.msra.mxu0 0.0
    %496 = vmatprep.subr.mxu0 0.0
    %497 = vmatpush1.xpose.msra.mxu0 0.0
    %498 = vmatprep.subr.mxu0 0.0
    %499 = vmatpush1.xpose.msra.mxu0 0.0
    %500 = vmatprep.subr.mxu0 0.0
    %501 = vmatpush1.xpose.msra.mxu0 0.0
    %502 = vmatprep.subr.mxu0 0.0
    %503 = vmatpush1.xpose.msra.mxu0 0.0
    %504 = vmatprep.subr.mxu0 0.0
    %505 = vmatpush1.xpose.msra.mxu0 0.0
    %506 = vmatprep.subr.mxu0 0.0
    %507 = vmatpush1.xpose.msra.mxu0 0.0
    %508 = vmatprep.subr.mxu0 0.0
    %509 = vmatpush1.xpose.msra.mxu0 0.0
    %510 = vmatprep.subr.mxu0 0.0
    %511 = vmatpush1.xpose.msra.mxu0 0.0
    %512 = vmatprep.subr.mxu0 0.0
    %513 = vmatpush1.xpose.msra.mxu0 0.0
    %514 = vmatprep.subr.mxu0 0.0
    %515 = vmatpush1.xpose.msra.mxu0 0.0
    %516 = vmatprep.subr.mxu0 0.0
    %517 = vmatpush1.xpose.msra.mxu0 0.0
    %518 = vmatprep.subr.mxu0 0.0
    %519 = vmatpush1.xpose.msra.mxu0 0.0
    %520 = vmatprep.subr.mxu0 0.0
    %521 = vmatpush1.xpose.msra.mxu0 0.0
    %522 = vmatprep.subr.mxu0 0.0
    %523 = vmatpush1.xpose.msra.mxu0 %v490
    %524 = vmatprep.subr.mxu0 0.0
    %525 = vmatpush2.xpose.msra.mxu0 0.0
    %526 = vmatprep.subr.mxu0 0.0
    %527 = vmatpush2.xpose.msra.mxu0 0.0
    %528 = vmatprep.subr.mxu0 0.0
    %529 = vmatpush2.xpose.msra.mxu0 0.0
    %530 = vmatprep.subr.mxu0 0.0
    %531 = vmatpush2.xpose.msra.mxu0 0.0
    %532 = vmatprep.subr.mxu0 0.0
    %533 = vmatpush2.xpose.msra.mxu0 0.0
    %534 = vmatprep.subr.mxu0 0.0
    %535 = vmatpush2.xpose.msra.mxu0 0.0
    %536 = vmatprep.subr.mxu0 0.0
    %537 = vmatpush2.xpose.msra.mxu0 0.0
    %538 = vmatprep.subr.mxu0 0.0
    %539 = vmatpush2.xpose.msra.mxu0 0.0
    %540 = vmatprep.subr.mxu0 0.0
    %541 = vmatpush2.xpose.msra.mxu0 0.0
    %542 = vmatprep.subr.mxu0 0.0
    %543 = vmatpush2.xpose.msra.mxu0 0.0
    %544 = vmatprep.subr.mxu0 0.0
    %545 = vmatpush2.xpose.msra.mxu0 0.0
    %546 = vmatprep.subr.mxu0 0.0
    %547 = vmatpush2.xpose.msra.mxu0 0.0
    %548 = vmatprep.subr.mxu0 0.0
    %549 = vmatpush2.xpose.msra.mxu0 0.0
    %550 = vmatprep.subr.mxu0 0.0
    %551 = vmatpush2.xpose.msra.mxu0 0.0
    %552 = vmatprep.subr.mxu0 0.0
    %553 = vmatpush2.xpose.msra.mxu0 0.0
    %554 = vmatprep.subr.mxu0 0.0
    %555 = vmatpush2.xpose.msra.mxu0 0.0
    %556 = vmatprep.mubr.f32.mxu0 0.0
    %557 = vmatmul.mubr.f32.gmra.mxu0 %v488
    %v558 = vpop.f32.mrf.mxu0
    %v559 = vadd.f32 0.0, %v558
    %v560 = vpop.f32.mrf.mxu0
    %561 = vdwg.mxu0
    %563 = vrot.lane.b32.xlu0 %v173, 96
    %v564 = vpop.permute.xlu0 %563
    %v565 = vsel %vm179, %v173, 0
    %v567 = vsel %vm179, %v564, 0
    %569 = vmatprep.subr.mxu0 0.0
    %570 = vmatpush1.xpose.msra.mxu0 0.0
    %571 = vmatprep.subr.mxu0 0.0
    %572 = vmatpush1.xpose.msra.mxu0 0.0
    %573 = vmatprep.subr.mxu0 0.0
    %574 = vmatpush1.xpose.msra.mxu0 0.0
    %575 = vmatprep.subr.mxu0 0.0
    %576 = vmatpush1.xpose.msra.mxu0 0.0
    %577 = vmatprep.subr.mxu0 0.0
    %578 = vmatpush1.xpose.msra.mxu0 0.0
    %579 = vmatprep.subr.mxu0 0.0
    %580 = vmatpush1.xpose.msra.mxu0 0.0
    %581 = vmatprep.subr.mxu0 0.0
    %582 = vmatpush1.xpose.msra.mxu0 0.0
    %583 = vmatprep.subr.mxu0 0.0
    %584 = vmatpush1.xpose.msra.mxu0 0.0
    %585 = vmatprep.subr.mxu0 0.0
    %586 = vmatpush1.xpose.msra.mxu0 0.0
    %587 = vmatprep.subr.mxu0 0.0
    %588 = vmatpush1.xpose.msra.mxu0 0.0
    %589 = vmatprep.subr.mxu0 0.0
    %590 = vmatpush1.xpose.msra.mxu0 0.0
    %591 = vmatprep.subr.mxu0 0.0
    %592 = vmatpush1.xpose.msra.mxu0 0.0
    %593 = vmatprep.subr.mxu0 0.0
    %594 = vmatpush1.xpose.msra.mxu0 0.0
    %595 = vmatprep.subr.mxu0 0.0
    %596 = vmatpush1.xpose.msra.mxu0 0.0
    %597 = vmatprep.subr.mxu0 0.0
    %598 = vmatpush1.xpose.msra.mxu0 0.0
    %599 = vmatprep.subr.mxu0 0.0
    %600 = vmatpush1.xpose.msra.mxu0 %v567
    %601 = vmatprep.subr.mxu0 0.0
    %602 = vmatpush2.xpose.msra.mxu0 0.0
    %603 = vmatprep.subr.mxu0 0.0
    %604 = vmatpush2.xpose.msra.mxu0 0.0
    %605 = vmatprep.subr.mxu0 0.0
    %606 = vmatpush2.xpose.msra.mxu0 0.0
    %607 = vmatprep.subr.mxu0 0.0
    %608 = vmatpush2.xpose.msra.mxu0 0.0
    %609 = vmatprep.subr.mxu0 0.0
    %610 = vmatpush2.xpose.msra.mxu0 0.0
    %611 = vmatprep.subr.mxu0 0.0
    %612 = vmatpush2.xpose.msra.mxu0 0.0
    %613 = vmatprep.subr.mxu0 0.0
    %614 = vmatpush2.xpose.msra.mxu0 0.0
    %615 = vmatprep.subr.mxu0 0.0
    %616 = vmatpush2.xpose.msra.mxu0 0.0
    %617 = vmatprep.subr.mxu0 0.0
    %618 = vmatpush2.xpose.msra.mxu0 0.0
    %619 = vmatprep.subr.mxu0 0.0
    %620 = vmatpush2.xpose.msra.mxu0 0.0
    %621 = vmatprep.subr.mxu0 0.0
    %622 = vmatpush2.xpose.msra.mxu0 0.0
    %623 = vmatprep.subr.mxu0 0.0
    %624 = vmatpush2.xpose.msra.mxu0 0.0
    %625 = vmatprep.subr.mxu0 0.0
    %626 = vmatpush2.xpose.msra.mxu0 0.0
    %627 = vmatprep.subr.mxu0 0.0
    %628 = vmatpush2.xpose.msra.mxu0 0.0
    %629 = vmatprep.subr.mxu0 0.0
    %630 = vmatpush2.xpose.msra.mxu0 0.0
    %631 = vmatprep.subr.mxu0 0.0
    %632 = vmatpush2.xpose.msra.mxu0 0.0
    %633 = vmatprep.mubr.f32.mxu0 0.0
    %634 = vmatmul.mubr.f32.gmra.mxu0 %v565
    %v635 = vpop.f32.mrf.mxu0
    %v636 = vadd.f32 0.0, %v635
    %v637 = vpop.f32.mrf.mxu0
    %638 = vdwg.mxu0
    %v639 = vmul.f32 %v251, 0.35355338
    %v640 = vmul.f32 %v328, 0.35355338
    %v641 = vmul.f32 %v405, 0.35355338
    %v642 = vmul.f32 %v482, 0.35355338
    %v643 = vmul.f32 %v559, 0.35355338
    %v644 = vmul.f32 %v636, 0.35355338
    %v645 = vsel %vm179, %v639, -inf
    %646 = vmax.xlane.f32.xlu0 %v645
    %v647 = vpop.xlane.xlu0 %646
    %v648 = vsel %vm179, %v640, -inf
    %649 = vmax.xlane.f32.xlu0 %v648
    %v650 = vpop.xlane.xlu0 %649
    %v651 = vsel %vm179, %v641, -inf
    %652 = vmax.xlane.f32.xlu0 %v651
    %v653 = vpop.xlane.xlu0 %652
    %v654 = vsel %vm179, %v642, -inf
    %655 = vmax.xlane.f32.xlu0 %v654
    %v656 = vpop.xlane.xlu0 %655
    %v657 = vsel %vm179, %v643, -inf
    %658 = vmax.xlane.f32.xlu0 %v657
    %v659 = vpop.xlane.xlu0 %658
    %v660 = vsel %vm179, %v644, -inf
    %661 = vmax.xlane.f32.xlu0 %v660
    %v662 = vpop.xlane.xlu0 %661
    %v663 = vsub.f32 %v639, %v647
    %v664 = vsub.f32 %v640, %v650
    %v665 = vsub.f32 %v641, %v653
    %v666 = vsub.f32 %v642, %v656
    %v667 = vsub.f32 %v643, %v659
    %v668 = vsub.f32 %v644, %v662
    %v669 = vmul.f32 %v663, 1.442695
    %v670 = vpow.pop %v669
    %v671 = vmul.f32 %v664, 1.442695
    %v672 = vpow.pop %v671
    %v673 = vmul.f32 %v665, 1.442695
    %v674 = vpow.pop %v673
    %v675 = vmul.f32 %v666, 1.442695
    %v676 = vpow.pop %v675
    %v677 = vmul.f32 %v667, 1.442695
    %v678 = vpow.pop %v677
    %v679 = vmul.f32 %v668, 1.442695
    %v680 = vpow.pop %v679
    %v681 = vsel %vm179, %v670, 0.0
    %682 = vadd.xlane.f32.xlu0 %v681
    %v683 = vpop.xlane.xlu0 %682
    %v684 = vsel %vm179, %v672, 0.0
    %685 = vadd.xlane.f32.xlu0 %v684
    %v686 = vpop.xlane.xlu0 %685
    %v687 = vsel %vm179, %v674, 0.0
    %688 = vadd.xlane.f32.xlu0 %v687
    %v689 = vpop.xlane.xlu0 %688
    %v690 = vsel %vm179, %v676, 0.0
    %691 = vadd.xlane.f32.xlu0 %v690
    %v692 = vpop.xlane.xlu0 %691
    %v693 = vsel %vm179, %v678, 0.0
    %694 = vadd.xlane.f32.xlu0 %v693
    %v695 = vpop.xlane.xlu0 %694
    %v696 = vsel %vm179, %v680, 0.0
    %697 = vadd.xlane.f32.xlu0 %v696
    %v698 = vpop.xlane.xlu0 %697
    %v699 = vrcp.pop %v683
    %v700 = vrcp.pop %v686
    %v701 = vrcp.pop %v689
    %v702 = vrcp.pop %v692
    %v703 = vrcp.pop %v695
    %v704 = vrcp.pop %v698
    %v705 = vmul.f32 %v670, %v699
    %v706 = vmul.f32 %v672, %v700
    %v707 = vmul.f32 %v674, %v701
    %v708 = vmul.f32 %v676, %v702
    %v709 = vmul.f32 %v678, %v703
    %v710 = vmul.f32 %v680, %v704
    %711 = vrot.lane.b32.xlu0 %v148, 64
    %v712 = vpop.permute.xlu0 %711
    %v715 = vsel %vm179, %v705, 0
    %717 = vmatprep.subr.mxu0 0.0
    %718 = vmatpush1.msra.mxu0 0.0
    %719 = vmatprep.subr.mxu0 0.0
    %720 = vmatpush1.msra.mxu0 0.0
    %721 = vmatprep.subr.mxu0 0.0
    %722 = vmatpush1.msra.mxu0 0.0
    %723 = vmatprep.subr.mxu0 0.0
    %724 = vmatpush1.msra.mxu0 0.0
    %725 = vmatprep.subr.mxu0 0.0
    %726 = vmatpush1.msra.mxu0 0.0
    %727 = vmatprep.subr.mxu0 0.0
    %728 = vmatpush1.msra.mxu0 0.0
    %729 = vmatprep.subr.mxu0 0.0
    %730 = vmatpush1.msra.mxu0 0.0
    %731 = vmatprep.subr.mxu0 0.0
    %732 = vmatpush1.msra.mxu0 0.0
    %733 = vmatprep.subr.mxu0 0.0
    %734 = vmatpush1.msra.mxu0 0.0
    %735 = vmatprep.subr.mxu0 0.0
    %736 = vmatpush1.msra.mxu0 0.0
    %737 = vmatprep.subr.mxu0 0.0
    %738 = vmatpush1.msra.mxu0 0.0
    %739 = vmatprep.subr.mxu0 0.0
    %740 = vmatpush1.msra.mxu0 0.0
    %741 = vmatprep.subr.mxu0 0.0
    %742 = vmatpush1.msra.mxu0 0.0
    %743 = vmatprep.subr.mxu0 0.0
    %744 = vmatpush1.msra.mxu0 0.0
    %745 = vmatprep.subr.mxu0 0.0
    %746 = vmatpush1.msra.mxu0 0.0
    %747 = vmatprep.subr.mxu0 0.0
    %748 = vmatpush1.msra.mxu0 %v712
    %749 = vmatprep.subr.mxu0 0.0
    %750 = vmatpush2.msra.mxu0 0.0
    %751 = vmatprep.subr.mxu0 0.0
    %752 = vmatpush2.msra.mxu0 0.0
    %753 = vmatprep.subr.mxu0 0.0
    %754 = vmatpush2.msra.mxu0 0.0
    %755 = vmatprep.subr.mxu0 0.0
    %756 = vmatpush2.msra.mxu0 0.0
    %757 = vmatprep.subr.mxu0 0.0
    %758 = vmatpush2.msra.mxu0 0.0
    %759 = vmatprep.subr.mxu0 0.0
    %760 = vmatpush2.msra.mxu0 0.0
    %761 = vmatprep.subr.mxu0 0.0
    %762 = vmatpush2.msra.mxu0 0.0
    %763 = vmatprep.subr.mxu0 0.0
    %764 = vmatpush2.msra.mxu0 0.0
    %765 = vmatprep.subr.mxu0 0.0
    %766 = vmatpush2.msra.mxu0 0.0
    %767 = vmatprep.subr.mxu0 0.0
    %768 = vmatpush2.msra.mxu0 0.0
    %769 = vmatprep.subr.mxu0 0.0
    %770 = vmatpush2.msra.mxu0 0.0
    %771 = vmatprep.subr.mxu0 0.0
    %772 = vmatpush2.msra.mxu0 0.0
    %773 = vmatprep.subr.mxu0 0.0
    %774 = vmatpush2.msra.mxu0 0.0
    %775 = vmatprep.subr.mxu0 0.0
    %776 = vmatpush2.msra.mxu0 0.0
    %777 = vmatprep.subr.mxu0 0.0
    %778 = vmatpush2.msra.mxu0 0.0
    %779 = vmatprep.subr.mxu0 0.0
    %780 = vmatpush2.msra.mxu0 0.0
    %781 = vmatprep.mubr.f32.mxu0 0.0
    %782 = vmatmul.mubr.f32.gmra.mxu0 %v715
    %v783 = vpop.f32.mrf.mxu0
    %v784 = vadd.f32 0.0, %v783
    %v785 = vpop.f32.mrf.mxu0
    %786 = vdwg.mxu0
    %787 = vrot.lane.b32.xlu0 %v153, 64
    %v788 = vpop.permute.xlu0 %787
    %v791 = vsel %vm179, %v706, 0
    %793 = vmatprep.subr.mxu0 0.0
    %794 = vmatpush1.msra.mxu0 0.0
    %795 = vmatprep.subr.mxu0 0.0
    %796 = vmatpush1.msra.mxu0 0.0
    %797 = vmatprep.subr.mxu0 0.0
    %798 = vmatpush1.msra.mxu0 0.0
    %799 = vmatprep.subr.mxu0 0.0
    %800 = vmatpush1.msra.mxu0 0.0
    %801 = vmatprep.subr.mxu0 0.0
    %802 = vmatpush1.msra.mxu0 0.0
    %803 = vmatprep.subr.mxu0 0.0
    %804 = vmatpush1.msra.mxu0 0.0
    %805 = vmatprep.subr.mxu0 0.0
    %806 = vmatpush1.msra.mxu0 0.0
    %807 = vmatprep.subr.mxu0 0.0
    %808 = vmatpush1.msra.mxu0 0.0
    %809 = vmatprep.subr.mxu0 0.0
    %810 = vmatpush1.msra.mxu0 0.0
    %811 = vmatprep.subr.mxu0 0.0
    %812 = vmatpush1.msra.mxu0 0.0
    %813 = vmatprep.subr.mxu0 0.0
    %814 = vmatpush1.msra.mxu0 0.0
    %815 = vmatprep.subr.mxu0 0.0
    %816 = vmatpush1.msra.mxu0 0.0
    %817 = vmatprep.subr.mxu0 0.0
    %818 = vmatpush1.msra.mxu0 0.0
    %819 = vmatprep.subr.mxu0 0.0
    %820 = vmatpush1.msra.mxu0 0.0
    %821 = vmatprep.subr.mxu0 0.0
    %822 = vmatpush1.msra.mxu0 0.0
    %823 = vmatprep.subr.mxu0 0.0
    %824 = vmatpush1.msra.mxu0 %v788
    %825 = vmatprep.subr.mxu0 0.0
    %826 = vmatpush2.msra.mxu0 0.0
    %827 = vmatprep.subr.mxu0 0.0
    %828 = vmatpush2.msra.mxu0 0.0
    %829 = vmatprep.subr.mxu0 0.0
    %830 = vmatpush2.msra.mxu0 0.0
    %831 = vmatprep.subr.mxu0 0.0
    %832 = vmatpush2.msra.mxu0 0.0
    %833 = vmatprep.subr.mxu0 0.0
    %834 = vmatpush2.msra.mxu0 0.0
    %835 = vmatprep.subr.mxu0 0.0
    %836 = vmatpush2.msra.mxu0 0.0
    %837 = vmatprep.subr.mxu0 0.0
    %838 = vmatpush2.msra.mxu0 0.0
    %839 = vmatprep.subr.mxu0 0.0
    %840 = vmatpush2.msra.mxu0 0.0
    %841 = vmatprep.subr.mxu0 0.0
    %842 = vmatpush2.msra.mxu0 0.0
    %843 = vmatprep.subr.mxu0 0.0
    %844 = vmatpush2.msra.mxu0 0.0
    %845 = vmatprep.subr.mxu0 0.0
    %846 = vmatpush2.msra.mxu0 0.0
    %847 = vmatprep.subr.mxu0 0.0
    %848 = vmatpush2.msra.mxu0 0.0
    %849 = vmatprep.subr.mxu0 0.0
    %850 = vmatpush2.msra.mxu0 0.0
    %851 = vmatprep.subr.mxu0 0.0
    %852 = vmatpush2.msra.mxu0 0.0
    %853 = vmatprep.subr.mxu0 0.0
    %854 = vmatpush2.msra.mxu0 0.0
    %855 = vmatprep.subr.mxu0 0.0
    %856 = vmatpush2.msra.mxu0 0.0
    %857 = vmatprep.mubr.f32.mxu0 0.0
    %858 = vmatmul.mubr.f32.gmra.mxu0 %v791
    %v859 = vpop.f32.mrf.mxu0
    %v860 = vadd.f32 0.0, %v859
    %v861 = vpop.f32.mrf.mxu0
    %862 = vdwg.mxu0
    %863 = vrot.lane.b32.xlu0 %v158, 64
    %v864 = vpop.permute.xlu0 %863
    %v867 = vsel %vm179, %v707, 0
    %869 = vmatprep.subr.mxu0 0.0
    %870 = vmatpush1.msra.mxu0 0.0
    %871 = vmatprep.subr.mxu0 0.0
    %872 = vmatpush1.msra.mxu0 0.0
    %873 = vmatprep.subr.mxu0 0.0
    %874 = vmatpush1.msra.mxu0 0.0
    %875 = vmatprep.subr.mxu0 0.0
    %876 = vmatpush1.msra.mxu0 0.0
    %877 = vmatprep.subr.mxu0 0.0
    %878 = vmatpush1.msra.mxu0 0.0
    %879 = vmatprep.subr.mxu0 0.0
    %880 = vmatpush1.msra.mxu0 0.0
    %881 = vmatprep.subr.mxu0 0.0
    %882 = vmatpush1.msra.mxu0 0.0
    %883 = vmatprep.subr.mxu0 0.0
    %884 = vmatpush1.msra.mxu0 0.0
    %885 = vmatprep.subr.mxu0 0.0
    %886 = vmatpush1.msra.mxu0 0.0
    %887 = vmatprep.subr.mxu0 0.0
    %888 = vmatpush1.msra.mxu0 0.0
    %889 = vmatprep.subr.mxu0 0.0
    %890 = vmatpush1.msra.mxu0 0.0
    %891 = vmatprep.subr.mxu0 0.0
    %892 = vmatpush1.msra.mxu0 0.0
    %893 = vmatprep.subr.mxu0 0.0
    %894 = vmatpush1.msra.mxu0 0.0
    %895 = vmatprep.subr.mxu0 0.0
    %896 = vmatpush1.msra.mxu0 0.0
    %897 = vmatprep.subr.mxu0 0.0
    %898 = vmatpush1.msra.mxu0 0.0
    %899 = vmatprep.subr.mxu0 0.0
    %900 = vmatpush1.msra.mxu0 %v864
    %901 = vmatprep.subr.mxu0 0.0
    %902 = vmatpush2.msra.mxu0 0.0
    %903 = vmatprep.subr.mxu0 0.0
    %904 = vmatpush2.msra.mxu0 0.0
    %905 = vmatprep.subr.mxu0 0.0
    %906 = vmatpush2.msra.mxu0 0.0
    %907 = vmatprep.subr.mxu0 0.0
    %908 = vmatpush2.msra.mxu0 0.0
    %909 = vmatprep.subr.mxu0 0.0
    %910 = vmatpush2.msra.mxu0 0.0
    %911 = vmatprep.subr.mxu0 0.0
    %912 = vmatpush2.msra.mxu0 0.0
    %913 = vmatprep.subr.mxu0 0.0
    %914 = vmatpush2.msra.mxu0 0.0
    %915 = vmatprep.subr.mxu0 0.0
    %916 = vmatpush2.msra.mxu0 0.0
    %917 = vmatprep.subr.mxu0 0.0
    %918 = vmatpush2.msra.mxu0 0.0
    %919 = vmatprep.subr.mxu0 0.0
    %920 = vmatpush2.msra.mxu0 0.0
    %921 = vmatprep.subr.mxu0 0.0
    %922 = vmatpush2.msra.mxu0 0.0
    %923 = vmatprep.subr.mxu0 0.0
    %924 = vmatpush2.msra.mxu0 0.0
    %925 = vmatprep.subr.mxu0 0.0
    %926 = vmatpush2.msra.mxu0 0.0
    %927 = vmatprep.subr.mxu0 0.0
    %928 = vmatpush2.msra.mxu0 0.0
    %929 = vmatprep.subr.mxu0 0.0
    %930 = vmatpush2.msra.mxu0 0.0
    %931 = vmatprep.subr.mxu0 0.0
    %932 = vmatpush2.msra.mxu0 0.0
    %933 = vmatprep.mubr.f32.mxu0 0.0
    %934 = vmatmul.mubr.f32.gmra.mxu0 %v867
    %v935 = vpop.f32.mrf.mxu0
    %v936 = vadd.f32 0.0, %v935
    %v937 = vpop.f32.mrf.mxu0
    %938 = vdwg.mxu0
    %939 = vrot.lane.b32.xlu0 %v163, 64
    %v940 = vpop.permute.xlu0 %939
    %v943 = vsel %vm179, %v708, 0
    %945 = vmatprep.subr.mxu0 0.0
    %946 = vmatpush1.msra.mxu0 0.0
    %947 = vmatprep.subr.mxu0 0.0
    %948 = vmatpush1.msra.mxu0 0.0
    %949 = vmatprep.subr.mxu0 0.0
    %950 = vmatpush1.msra.mxu0 0.0
    %951 = vmatprep.subr.mxu0 0.0
    %952 = vmatpush1.msra.mxu0 0.0
    %953 = vmatprep.subr.mxu0 0.0
    %954 = vmatpush1.msra.mxu0 0.0
    %955 = vmatprep.subr.mxu0 0.0
    %956 = vmatpush1.msra.mxu0 0.0
    %957 = vmatprep.subr.mxu0 0.0
    %958 = vmatpush1.msra.mxu0 0.0
    %959 = vmatprep.subr.mxu0 0.0
    %960 = vmatpush1.msra.mxu0 0.0
    %961 = vmatprep.subr.mxu0 0.0
    %962 = vmatpush1.msra.mxu0 0.0
    %963 = vmatprep.subr.mxu0 0.0
    %964 = vmatpush1.msra.mxu0 0.0
    %965 = vmatprep.subr.mxu0 0.0
    %966 = vmatpush1.msra.mxu0 0.0
    %967 = vmatprep.subr.mxu0 0.0
    %968 = vmatpush1.msra.mxu0 0.0
    %969 = vmatprep.subr.mxu0 0.0
    %970 = vmatpush1.msra.mxu0 0.0
    %971 = vmatprep.subr.mxu0 0.0
    %972 = vmatpush1.msra.mxu0 0.0
    %973 = vmatprep.subr.mxu0 0.0
    %974 = vmatpush1.msra.mxu0 0.0
    %975 = vmatprep.subr.mxu0 0.0
    %976 = vmatpush1.msra.mxu0 %v940
    %977 = vmatprep.subr.mxu0 0.0
    %978 = vmatpush2.msra.mxu0 0.0
    %979 = vmatprep.subr.mxu0 0.0
    %980 = vmatpush2.msra.mxu0 0.0
    %981 = vmatprep.subr.mxu0 0.0
    %982 = vmatpush2.msra.mxu0 0.0
    %983 = vmatprep.subr.mxu0 0.0
    %984 = vmatpush2.msra.mxu0 0.0
    %985 = vmatprep.subr.mxu0 0.0
    %986 = vmatpush2.msra.mxu0 0.0
    %987 = vmatprep.subr.mxu0 0.0
    %988 = vmatpush2.msra.mxu0 0.0
    %989 = vmatprep.subr.mxu0 0.0
    %990 = vmatpush2.msra.mxu0 0.0
    %991 = vmatprep.subr.mxu0 0.0
    %992 = vmatpush2.msra.mxu0 0.0
    %993 = vmatprep.subr.mxu0 0.0
    %994 = vmatpush2.msra.mxu0 0.0
    %995 = vmatprep.subr.mxu0 0.0
    %996 = vmatpush2.msra.mxu0 0.0
    %997 = vmatprep.subr.mxu0 0.0
    %998 = vmatpush2.msra.mxu0 0.0
    %999 = vmatprep.subr.mxu0 0.0
    %1000 = vmatpush2.msra.mxu0 0.0
    %1001 = vmatprep.subr.mxu0 0.0
    %1002 = vmatpush2.msra.mxu0 0.0
    %1003 = vmatprep.subr.mxu0 0.0
    %1004 = vmatpush2.msra.mxu0 0.0
    %1005 = vmatprep.subr.mxu0 0.0
    %1006 = vmatpush2.msra.mxu0 0.0
    %1007 = vmatprep.subr.mxu0 0.0
    %1008 = vmatpush2.msra.mxu0 0.0
    %1009 = vmatprep.mubr.f32.mxu0 0.0
    %1010 = vmatmul.mubr.f32.gmra.mxu0 %v943
    %v1011 = vpop.f32.mrf.mxu0
    %v1012 = vadd.f32 0.0, %v1011
    %v1013 = vpop.f32.mrf.mxu0
    %1014 = vdwg.mxu0
    %1015 = vrot.lane.b32.xlu0 %v168, 64
    %v1016 = vpop.permute.xlu0 %1015
    %v1019 = vsel %vm179, %v709, 0
    %1021 = vmatprep.subr.mxu0 0.0
    %1022 = vmatpush1.msra.mxu0 0.0
    %1023 = vmatprep.subr.mxu0 0.0
    %1024 = vmatpush1.msra.mxu0 0.0
    %1025 = vmatprep.subr.mxu0 0.0
    %1026 = vmatpush1.msra.mxu0 0.0
    %1027 = vmatprep.subr.mxu0 0.0
    %1028 = vmatpush1.msra.mxu0 0.0
    %1029 = vmatprep.subr.mxu0 0.0
    %1030 = vmatpush1.msra.mxu0 0.0
    %1031 = vmatprep.subr.mxu0 0.0
    %1032 = vmatpush1.msra.mxu0 0.0
    %1033 = vmatprep.subr.mxu0 0.0
    %1034 = vmatpush1.msra.mxu0 0.0
    %1035 = vmatprep.subr.mxu0 0.0
    %1036 = vmatpush1.msra.mxu0 0.0
    %1037 = vmatprep.subr.mxu0 0.0
    %1038 = vmatpush1.msra.mxu0 0.0
    %1039 = vmatprep.subr.mxu0 0.0
    %1040 = vmatpush1.msra.mxu0 0.0
    %1041 = vmatprep.subr.mxu0 0.0
    %1042 = vmatpush1.msra.mxu0 0.0
    %1043 = vmatprep.subr.mxu0 0.0
    %1044 = vmatpush1.msra.mxu0 0.0
    %1045 = vmatprep.subr.mxu0 0.0
    %1046 = vmatpush1.msra.mxu0 0.0
    %1047 = vmatprep.subr.mxu0 0.0
    %1048 = vmatpush1.msra.mxu0 0.0
    %1049 = vmatprep.subr.mxu0 0.0
    %1050 = vmatpush1.msra.mxu0 0.0
    %1051 = vmatprep.subr.mxu0 0.0
    %1052 = vmatpush1.msra.mxu0 %v1016
    %1053 = vmatprep.subr.mxu0 0.0
    %1054 = vmatpush2.msra.mxu0 0.0
    %1055 = vmatprep.subr.mxu0 0.0
    %1056 = vmatpush2.msra.mxu0 0.0
    %1057 = vmatprep.subr.mxu0 0.0
    %1058 = vmatpush2.msra.mxu0 0.0
    %1059 = vmatprep.subr.mxu0 0.0
    %1060 = vmatpush2.msra.mxu0 0.0
    %1061 = vmatprep.subr.mxu0 0.0
    %1062 = vmatpush2.msra.mxu0 0.0
    %1063 = vmatprep.subr.mxu0 0.0
    %1064 = vmatpush2.msra.mxu0 0.0
    %1065 = vmatprep.subr.mxu0 0.0
    %1066 = vmatpush2.msra.mxu0 0.0
    %1067 = vmatprep.subr.mxu0 0.0
    %1068 = vmatpush2.msra.mxu0 0.0
    %1069 = vmatprep.subr.mxu0 0.0
    %1070 = vmatpush2.msra.mxu0 0.0
    %1071 = vmatprep.subr.mxu0 0.0
    %1072 = vmatpush2.msra.mxu0 0.0
    %1073 = vmatprep.subr.mxu0 0.0
    %1074 = vmatpush2.msra.mxu0 0.0
    %1075 = vmatprep.subr.mxu0 0.0
    %1076 = vmatpush2.msra.mxu0 0.0
    %1077 = vmatprep.subr.mxu0 0.0
    %1078 = vmatpush2.msra.mxu0 0.0
    %1079 = vmatprep.subr.mxu0 0.0
    %1080 = vmatpush2.msra.mxu0 0.0
    %1081 = vmatprep.subr.mxu0 0.0
    %1082 = vmatpush2.msra.mxu0 0.0
    %1083 = vmatprep.subr.mxu0 0.0
    %1084 = vmatpush2.msra.mxu0 0.0
    %1085 = vmatprep.mubr.f32.mxu0 0.0
    %1086 = vmatmul.mubr.f32.gmra.mxu0 %v1019
    %v1087 = vpop.f32.mrf.mxu0
    %v1088 = vadd.f32 0.0, %v1087
    %v1089 = vpop.f32.mrf.mxu0
    %1090 = vdwg.mxu0
    %1091 = vrot.lane.b32.xlu0 %v173, 64
    %v1092 = vpop.permute.xlu0 %1091
    %v1095 = vsel %vm179, %v710, 0
    %1097 = vmatprep.subr.mxu0 0.0
    %1098 = vmatpush1.msra.mxu0 0.0
    %1099 = vmatprep.subr.mxu0 0.0
    %1100 = vmatpush1.msra.mxu0 0.0
    %1101 = vmatprep.subr.mxu0 0.0
    %1102 = vmatpush1.msra.mxu0 0.0
    %1103 = vmatprep.subr.mxu0 0.0
    %1104 = vmatpush1.msra.mxu0 0.0
    %1105 = vmatprep.subr.mxu0 0.0
    %1106 = vmatpush1.msra.mxu0 0.0
    %1107 = vmatprep.subr.mxu0 0.0
    %1108 = vmatpush1.msra.mxu0 0.0
    %1109 = vmatprep.subr.mxu0 0.0
    %1110 = vmatpush1.msra.mxu0 0.0
    %1111 = vmatprep.subr.mxu0 0.0
    %1112 = vmatpush1.msra.mxu0 0.0
    %1113 = vmatprep.subr.mxu0 0.0
    %1114 = vmatpush1.msra.mxu0 0.0
    %1115 = vmatprep.subr.mxu0 0.0
    %1116 = vmatpush1.msra.mxu0 0.0
    %1117 = vmatprep.subr.mxu0 0.0
    %1118 = vmatpush1.msra.mxu0 0.0
    %1119 = vmatprep.subr.mxu0 0.0
    %1120 = vmatpush1.msra.mxu0 0.0
    %1121 = vmatprep.subr.mxu0 0.0
    %1122 = vmatpush1.msra.mxu0 0.0
    %1123 = vmatprep.subr.mxu0 0.0
    %1124 = vmatpush1.msra.mxu0 0.0
    %1125 = vmatprep.subr.mxu0 0.0
    %1126 = vmatpush1.msra.mxu0 0.0
    %1127 = vmatprep.subr.mxu0 0.0
    %1128 = vmatpush1.msra.mxu0 %v1092
    %1129 = vmatprep.subr.mxu0 0.0
    %1130 = vmatpush2.msra.mxu0 0.0
    %1131 = vmatprep.subr.mxu0 0.0
    %1132 = vmatpush2.msra.mxu0 0.0
    %1133 = vmatprep.subr.mxu0 0.0
    %1134 = vmatpush2.msra.mxu0 0.0
    %1135 = vmatprep.subr.mxu0 0.0
    %1136 = vmatpush2.msra.mxu0 0.0
    %1137 = vmatprep.subr.mxu0 0.0
    %1138 = vmatpush2.msra.mxu0 0.0
    %1139 = vmatprep.subr.mxu0 0.0
    %1140 = vmatpush2.msra.mxu0 0.0
    %1141 = vmatprep.subr.mxu0 0.0
    %1142 = vmatpush2.msra.mxu0 0.0
    %1143 = vmatprep.subr.mxu0 0.0
    %1144 = vmatpush2.msra.mxu0 0.0
    %1145 = vmatprep.subr.mxu0 0.0
    %1146 = vmatpush2.msra.mxu0 0.0
    %1147 = vmatprep.subr.mxu0 0.0
    %1148 = vmatpush2.msra.mxu0 0.0
    %1149 = vmatprep.subr.mxu0 0.0
    %1150 = vmatpush2.msra.mxu0 0.0
    %1151 = vmatprep.subr.mxu0 0.0
    %1152 = vmatpush2.msra.mxu0 0.0
    %1153 = vmatprep.subr.mxu0 0.0
    %1154 = vmatpush2.msra.mxu0 0.0
    %1155 = vmatprep.subr.mxu0 0.0
    %1156 = vmatpush2.msra.mxu0 0.0
    %1157 = vmatprep.subr.mxu0 0.0
    %1158 = vmatpush2.msra.mxu0 0.0
    %1159 = vmatprep.subr.mxu0 0.0
    %1160 = vmatpush2.msra.mxu0 0.0
    %1161 = vmatprep.mubr.f32.mxu0 0.0
    %1162 = vmatmul.mubr.f32.gmra.mxu0 %v1095
    %v1163 = vpop.f32.mrf.mxu0
    %v1164 = vadd.f32 0.0, %v1163
    %v1165 = vpop.f32.mrf.mxu0
    %1166 = vdwg.mxu0
    %1167 = vrot.lane.b32.xlu0 %v148, 120
    %v1168 = vpop.permute.xlu0 %1167
    %1169 = vrot.lane.b32.xlu0 %v148, 88
    %v1170 = vpop.permute.xlu0 %1169
    %v1171 = vsel %vm179, %v1168, 0
    %v1173 = vsel %vm179, %v1170, 0
    %1175 = vmatprep.subr.mxu0 0.0
    %1176 = vmatpush1.xpose.msra.mxu0 0.0
    %1177 = vmatprep.subr.mxu0 0.0
    %1178 = vmatpush1.xpose.msra.mxu0 0.0
    %1179 = vmatprep.subr.mxu0 0.0
    %1180 = vmatpush1.xpose.msra.mxu0 0.0
    %1181 = vmatprep.subr.mxu0 0.0
    %1182 = vmatpush1.xpose.msra.mxu0 0.0
    %1183 = vmatprep.subr.mxu0 0.0
    %1184 = vmatpush1.xpose.msra.mxu0 0.0
    %1185 = vmatprep.subr.mxu0 0.0
    %1186 = vmatpush1.xpose.msra.mxu0 0.0
    %1187 = vmatprep.subr.mxu0 0.0
    %1188 = vmatpush1.xpose.msra.mxu0 0.0
    %1189 = vmatprep.subr.mxu0 0.0
    %1190 = vmatpush1.xpose.msra.mxu0 0.0
    %1191 = vmatprep.subr.mxu0 0.0
    %1192 = vmatpush1.xpose.msra.mxu0 0.0
    %1193 = vmatprep.subr.mxu0 0.0
    %1194 = vmatpush1.xpose.msra.mxu0 0.0
    %1195 = vmatprep.subr.mxu0 0.0
    %1196 = vmatpush1.xpose.msra.mxu0 0.0
    %1197 = vmatprep.subr.mxu0 0.0
    %1198 = vmatpush1.xpose.msra.mxu0 0.0
    %1199 = vmatprep.subr.mxu0 0.0
    %1200 = vmatpush1.xpose.msra.mxu0 0.0
    %1201 = vmatprep.subr.mxu0 0.0
    %1202 = vmatpush1.xpose.msra.mxu0 0.0
    %1203 = vmatprep.subr.mxu0 0.0
    %1204 = vmatpush1.xpose.msra.mxu0 0.0
    %1205 = vmatprep.subr.mxu0 0.0
    %1206 = vmatpush1.xpose.msra.mxu0 %v1173
    %1207 = vmatprep.subr.mxu0 0.0
    %1208 = vmatpush2.xpose.msra.mxu0 0.0
    %1209 = vmatprep.subr.mxu0 0.0
    %1210 = vmatpush2.xpose.msra.mxu0 0.0
    %1211 = vmatprep.subr.mxu0 0.0
    %1212 = vmatpush2.xpose.msra.mxu0 0.0
    %1213 = vmatprep.subr.mxu0 0.0
    %1214 = vmatpush2.xpose.msra.mxu0 0.0
    %1215 = vmatprep.subr.mxu0 0.0
    %1216 = vmatpush2.xpose.msra.mxu0 0.0
    %1217 = vmatprep.subr.mxu0 0.0
    %1218 = vmatpush2.xpose.msra.mxu0 0.0
    %1219 = vmatprep.subr.mxu0 0.0
    %1220 = vmatpush2.xpose.msra.mxu0 0.0
    %1221 = vmatprep.subr.mxu0 0.0
    %1222 = vmatpush2.xpose.msra.mxu0 0.0
    %1223 = vmatprep.subr.mxu0 0.0
    %1224 = vmatpush2.xpose.msra.mxu0 0.0
    %1225 = vmatprep.subr.mxu0 0.0
    %1226 = vmatpush2.xpose.msra.mxu0 0.0
    %1227 = vmatprep.subr.mxu0 0.0
    %1228 = vmatpush2.xpose.msra.mxu0 0.0
    %1229 = vmatprep.subr.mxu0 0.0
    %1230 = vmatpush2.xpose.msra.mxu0 0.0
    %1231 = vmatprep.subr.mxu0 0.0
    %1232 = vmatpush2.xpose.msra.mxu0 0.0
    %1233 = vmatprep.subr.mxu0 0.0
    %1234 = vmatpush2.xpose.msra.mxu0 0.0
    %1235 = vmatprep.subr.mxu0 0.0
    %1236 = vmatpush2.xpose.msra.mxu0 0.0
    %1237 = vmatprep.subr.mxu0 0.0
    %1238 = vmatpush2.xpose.msra.mxu0 0.0
    %1239 = vmatprep.mubr.f32.mxu0 0.0
    %1240 = vmatmul.mubr.f32.gmra.mxu0 %v1171
    %v1241 = vpop.f32.mrf.mxu0
    %v1242 = vadd.f32 0.0, %v1241
    %v1243 = vpop.f32.mrf.mxu0
    %1244 = vdwg.mxu0
    %1245 = vrot.lane.b32.xlu0 %v153, 120
    %v1246 = vpop.permute.xlu0 %1245
    %1247 = vrot.lane.b32.xlu0 %v153, 88
    %v1248 = vpop.permute.xlu0 %1247
    %v1249 = vsel %vm179, %v1246, 0
    %v1251 = vsel %vm179, %v1248, 0
    %1253 = vmatprep.subr.mxu0 0.0
    %1254 = vmatpush1.xpose.msra.mxu0 0.0
    %1255 = vmatprep.subr.mxu0 0.0
    %1256 = vmatpush1.xpose.msra.mxu0 0.0
    %1257 = vmatprep.subr.mxu0 0.0
    %1258 = vmatpush1.xpose.msra.mxu0 0.0
    %1259 = vmatprep.subr.mxu0 0.0
    %1260 = vmatpush1.xpose.msra.mxu0 0.0
    %1261 = vmatprep.subr.mxu0 0.0
    %1262 = vmatpush1.xpose.msra.mxu0 0.0
    %1263 = vmatprep.subr.mxu0 0.0
    %1264 = vmatpush1.xpose.msra.mxu0 0.0
    %1265 = vmatprep.subr.mxu0 0.0
    %1266 = vmatpush1.xpose.msra.mxu0 0.0
    %1267 = vmatprep.subr.mxu0 0.0
    %1268 = vmatpush1.xpose.msra.mxu0 0.0
    %1269 = vmatprep.subr.mxu0 0.0
    %1270 = vmatpush1.xpose.msra.mxu0 0.0
    %1271 = vmatprep.subr.mxu0 0.0
    %1272 = vmatpush1.xpose.msra.mxu0 0.0
    %1273 = vmatprep.subr.mxu0 0.0
    %1274 = vmatpush1.xpose.msra.mxu0 0.0
    %1275 = vmatprep.subr.mxu0 0.0
    %1276 = vmatpush1.xpose.msra.mxu0 0.0
    %1277 = vmatprep.subr.mxu0 0.0
    %1278 = vmatpush1.xpose.msra.mxu0 0.0
    %1279 = vmatprep.subr.mxu0 0.0
    %1280 = vmatpush1.xpose.msra.mxu0 0.0
    %1281 = vmatprep.subr.mxu0 0.0
    %1282 = vmatpush1.xpose.msra.mxu0 0.0
    %1283 = vmatprep.subr.mxu0 0.0
    %1284 = vmatpush1.xpose.msra.mxu0 %v1251
    %1285 = vmatprep.subr.mxu0 0.0
    %1286 = vmatpush2.xpose.msra.mxu0 0.0
    %1287 = vmatprep.subr.mxu0 0.0
    %1288 = vmatpush2.xpose.msra.mxu0 0.0
    %1289 = vmatprep.subr.mxu0 0.0
    %1290 = vmatpush2.xpose.msra.mxu0 0.0
    %1291 = vmatprep.subr.mxu0 0.0
    %1292 = vmatpush2.xpose.msra.mxu0 0.0
    %1293 = vmatprep.subr.mxu0 0.0
    %1294 = vmatpush2.xpose.msra.mxu0 0.0
    %1295 = vmatprep.subr.mxu0 0.0
    %1296 = vmatpush2.xpose.msra.mxu0 0.0
    %1297 = vmatprep.subr.mxu0 0.0
    %1298 = vmatpush2.xpose.msra.mxu0 0.0
    %1299 = vmatprep.subr.mxu0 0.0
    %1300 = vmatpush2.xpose.msra.mxu0 0.0
    %1301 = vmatprep.subr.mxu0 0.0
    %1302 = vmatpush2.xpose.msra.mxu0 0.0
    %1303 = vmatprep.subr.mxu0 0.0
    %1304 = vmatpush2.xpose.msra.mxu0 0.0
    %1305 = vmatprep.subr.mxu0 0.0
    %1306 = vmatpush2.xpose.msra.mxu0 0.0
    %1307 = vmatprep.subr.mxu0 0.0
    %1308 = vmatpush2.xpose.msra.mxu0 0.0
    %1309 = vmatprep.subr.mxu0 0.0
    %1310 = vmatpush2.xpose.msra.mxu0 0.0
    %1311 = vmatprep.subr.mxu0 0.0
    %1312 = vmatpush2.xpose.msra.mxu0 0.0
    %1313 = vmatprep.subr.mxu0 0.0
    %1314 = vmatpush2.xpose.msra.mxu0 0.0
    %1315 = vmatprep.subr.mxu0 0.0
    %1316 = vmatpush2.xpose.msra.mxu0 0.0
    %1317 = vmatprep.mubr.f32.mxu0 0.0
    %1318 = vmatmul.mubr.f32.gmra.mxu0 %v1249
    %v1319 = vpop.f32.mrf.mxu0
    %v1320 = vadd.f32 0.0, %v1319
    %v1321 = vpop.f32.mrf.mxu0
    %1322 = vdwg.mxu0
    %1323 = vrot.lane.b32.xlu0 %v158, 120
    %v1324 = vpop.permute.xlu0 %1323
    %1325 = vrot.lane.b32.xlu0 %v158, 88
    %v1326 = vpop.permute.xlu0 %1325
    %v1327 = vsel %vm179, %v1324, 0
    %v1329 = vsel %vm179, %v1326, 0
    %1331 = vmatprep.subr.mxu0 0.0
    %1332 = vmatpush1.xpose.msra.mxu0 0.0
    %1333 = vmatprep.subr.mxu0 0.0
    %1334 = vmatpush1.xpose.msra.mxu0 0.0
    %1335 = vmatprep.subr.mxu0 0.0
    %1336 = vmatpush1.xpose.msra.mxu0 0.0
    %1337 = vmatprep.subr.mxu0 0.0
    %1338 = vmatpush1.xpose.msra.mxu0 0.0
    %1339 = vmatprep.subr.mxu0 0.0
    %1340 = vmatpush1.xpose.msra.mxu0 0.0
    %1341 = vmatprep.subr.mxu0 0.0
    %1342 = vmatpush1.xpose.msra.mxu0 0.0
    %1343 = vmatprep.subr.mxu0 0.0
    %1344 = vmatpush1.xpose.msra.mxu0 0.0
    %1345 = vmatprep.subr.mxu0 0.0
    %1346 = vmatpush1.xpose.msra.mxu0 0.0
    %1347 = vmatprep.subr.mxu0 0.0
    %1348 = vmatpush1.xpose.msra.mxu0 0.0
    %1349 = vmatprep.subr.mxu0 0.0
    %1350 = vmatpush1.xpose.msra.mxu0 0.0
    %1351 = vmatprep.subr.mxu0 0.0
    %1352 = vmatpush1.xpose.msra.mxu0 0.0
    %1353 = vmatprep.subr.mxu0 0.0
    %1354 = vmatpush1.xpose.msra.mxu0 0.0
    %1355 = vmatprep.subr.mxu0 0.0
    %1356 = vmatpush1.xpose.msra.mxu0 0.0
    %1357 = vmatprep.subr.mxu0 0.0
    %1358 = vmatpush1.xpose.msra.mxu0 0.0
    %1359 = vmatprep.subr.mxu0 0.0
    %1360 = vmatpush1.xpose.msra.mxu0 0.0
    %1361 = vmatprep.subr.mxu0 0.0
    %1362 = vmatpush1.xpose.msra.mxu0 %v1329
    %1363 = vmatprep.subr.mxu0 0.0
    %1364 = vmatpush2.xpose.msra.mxu0 0.0
    %1365 = vmatprep.subr.mxu0 0.0
    %1366 = vmatpush2.xpose.msra.mxu0 0.0
    %1367 = vmatprep.subr.mxu0 0.0
    %1368 = vmatpush2.xpose.msra.mxu0 0.0
    %1369 = vmatprep.subr.mxu0 0.0
    %1370 = vmatpush2.xpose.msra.mxu0 0.0
    %1371 = vmatprep.subr.mxu0 0.0
    %1372 = vmatpush2.xpose.msra.mxu0 0.0
    %1373 = vmatprep.subr.mxu0 0.0
    %1374 = vmatpush2.xpose.msra.mxu0 0.0
    %1375 = vmatprep.subr.mxu0 0.0
    %1376 = vmatpush2.xpose.msra.mxu0 0.0
    %1377 = vmatprep.subr.mxu0 0.0
    %1378 = vmatpush2.xpose.msra.mxu0 0.0
    %1379 = vmatprep.subr.mxu0 0.0
    %1380 = vmatpush2.xpose.msra.mxu0 0.0
    %1381 = vmatprep.subr.mxu0 0.0
    %1382 = vmatpush2.xpose.msra.mxu0 0.0
    %1383 = vmatprep.subr.mxu0 0.0
    %1384 = vmatpush2.xpose.msra.mxu0 0.0
    %1385 = vmatprep.subr.mxu0 0.0
    %1386 = vmatpush2.xpose.msra.mxu0 0.0
    %1387 = vmatprep.subr.mxu0 0.0
    %1388 = vmatpush2.xpose.msra.mxu0 0.0
    %1389 = vmatprep.subr.mxu0 0.0
    %1390 = vmatpush2.xpose.msra.mxu0 0.0
    %1391 = vmatprep.subr.mxu0 0.0
    %1392 = vmatpush2.xpose.msra.mxu0 0.0
    %1393 = vmatprep.subr.mxu0 0.0
    %1394 = vmatpush2.xpose.msra.mxu0 0.0
    %1395 = vmatprep.mubr.f32.mxu0 0.0
    %1396 = vmatmul.mubr.f32.gmra.mxu0 %v1327
    %v1397 = vpop.f32.mrf.mxu0
    %v1398 = vadd.f32 0.0, %v1397
    %v1399 = vpop.f32.mrf.mxu0
    %1400 = vdwg.mxu0
    %1401 = vrot.lane.b32.xlu0 %v163, 120
    %v1402 = vpop.permute.xlu0 %1401
    %1403 = vrot.lane.b32.xlu0 %v163, 88
    %v1404 = vpop.permute.xlu0 %1403
    %v1405 = vsel %vm179, %v1402, 0
    %v1407 = vsel %vm179, %v1404, 0
    %1409 = vmatprep.subr.mxu0 0.0
    %1410 = vmatpush1.xpose.msra.mxu0 0.0
    %1411 = vmatprep.subr.mxu0 0.0
    %1412 = vmatpush1.xpose.msra.mxu0 0.0
    %1413 = vmatprep.subr.mxu0 0.0
    %1414 = vmatpush1.xpose.msra.mxu0 0.0
    %1415 = vmatprep.subr.mxu0 0.0
    %1416 = vmatpush1.xpose.msra.mxu0 0.0
    %1417 = vmatprep.subr.mxu0 0.0
    %1418 = vmatpush1.xpose.msra.mxu0 0.0
    %1419 = vmatprep.subr.mxu0 0.0
    %1420 = vmatpush1.xpose.msra.mxu0 0.0
    %1421 = vmatprep.subr.mxu0 0.0
    %1422 = vmatpush1.xpose.msra.mxu0 0.0
    %1423 = vmatprep.subr.mxu0 0.0
    %1424 = vmatpush1.xpose.msra.mxu0 0.0
    %1425 = vmatprep.subr.mxu0 0.0
    %1426 = vmatpush1.xpose.msra.mxu0 0.0
    %1427 = vmatprep.subr.mxu0 0.0
    %1428 = vmatpush1.xpose.msra.mxu0 0.0
    %1429 = vmatprep.subr.mxu0 0.0
    %1430 = vmatpush1.xpose.msra.mxu0 0.0
    %1431 = vmatprep.subr.mxu0 0.0
    %1432 = vmatpush1.xpose.msra.mxu0 0.0
    %1433 = vmatprep.subr.mxu0 0.0
    %1434 = vmatpush1.xpose.msra.mxu0 0.0
    %1435 = vmatprep.subr.mxu0 0.0
    %1436 = vmatpush1.xpose.msra.mxu0 0.0
    %1437 = vmatprep.subr.mxu0 0.0
    %1438 = vmatpush1.xpose.msra.mxu0 0.0
    %1439 = vmatprep.subr.mxu0 0.0
    %1440 = vmatpush1.xpose.msra.mxu0 %v1407
    %1441 = vmatprep.subr.mxu0 0.0
    %1442 = vmatpush2.xpose.msra.mxu0 0.0
    %1443 = vmatprep.subr.mxu0 0.0
    %1444 = vmatpush2.xpose.msra.mxu0 0.0
    %1445 = vmatprep.subr.mxu0 0.0
    %1446 = vmatpush2.xpose.msra.mxu0 0.0
    %1447 = vmatprep.subr.mxu0 0.0
    %1448 = vmatpush2.xpose.msra.mxu0 0.0
    %1449 = vmatprep.subr.mxu0 0.0
    %1450 = vmatpush2.xpose.msra.mxu0 0.0
    %1451 = vmatprep.subr.mxu0 0.0
    %1452 = vmatpush2.xpose.msra.mxu0 0.0
    %1453 = vmatprep.subr.mxu0 0.0
    %1454 = vmatpush2.xpose.msra.mxu0 0.0
    %1455 = vmatprep.subr.mxu0 0.0
    %1456 = vmatpush2.xpose.msra.mxu0 0.0
    %1457 = vmatprep.subr.mxu0 0.0
    %1458 = vmatpush2.xpose.msra.mxu0 0.0
    %1459 = vmatprep.subr.mxu0 0.0
    %1460 = vmatpush2.xpose.msra.mxu0 0.0
    %1461 = vmatprep.subr.mxu0 0.0
    %1462 = vmatpush2.xpose.msra.mxu0 0.0
    %1463 = vmatprep.subr.mxu0 0.0
    %1464 = vmatpush2.xpose.msra.mxu0 0.0
    %1465 = vmatprep.subr.mxu0 0.0
    %1466 = vmatpush2.xpose.msra.mxu0 0.0
    %1467 = vmatprep.subr.mxu0 0.0
    %1468 = vmatpush2.xpose.msra.mxu0 0.0
    %1469 = vmatprep.subr.mxu0 0.0
    %1470 = vmatpush2.xpose.msra.mxu0 0.0
    %1471 = vmatprep.subr.mxu0 0.0
    %1472 = vmatpush2.xpose.msra.mxu0 0.0
    %1473 = vmatprep.mubr.f32.mxu0 0.0
    %1474 = vmatmul.mubr.f32.gmra.mxu0 %v1405
    %v1475 = vpop.f32.mrf.mxu0
    %v1476 = vadd.f32 0.0, %v1475
    %v1477 = vpop.f32.mrf.mxu0
    %1478 = vdwg.mxu0
    %1479 = vrot.lane.b32.xlu0 %v168, 120
    %v1480 = vpop.permute.xlu0 %1479
    %1481 = vrot.lane.b32.xlu0 %v168, 88
    %v1482 = vpop.permute.xlu0 %1481
    %v1483 = vsel %vm179, %v1480, 0
    %v1485 = vsel %vm179, %v1482, 0
    %1487 = vmatprep.subr.mxu0 0.0
    %1488 = vmatpush1.xpose.msra.mxu0 0.0
    %1489 = vmatprep.subr.mxu0 0.0
    %1490 = vmatpush1.xpose.msra.mxu0 0.0
    %1491 = vmatprep.subr.mxu0 0.0
    %1492 = vmatpush1.xpose.msra.mxu0 0.0
    %1493 = vmatprep.subr.mxu0 0.0
    %1494 = vmatpush1.xpose.msra.mxu0 0.0
    %1495 = vmatprep.subr.mxu0 0.0
    %1496 = vmatpush1.xpose.msra.mxu0 0.0
    %1497 = vmatprep.subr.mxu0 0.0
    %1498 = vmatpush1.xpose.msra.mxu0 0.0
    %1499 = vmatprep.subr.mxu0 0.0
    %1500 = vmatpush1.xpose.msra.mxu0 0.0
    %1501 = vmatprep.subr.mxu0 0.0
    %1502 = vmatpush1.xpose.msra.mxu0 0.0
    %1503 = vmatprep.subr.mxu0 0.0
    %1504 = vmatpush1.xpose.msra.mxu0 0.0
    %1505 = vmatprep.subr.mxu0 0.0
    %1506 = vmatpush1.xpose.msra.mxu0 0.0
    %1507 = vmatprep.subr.mxu0 0.0
    %1508 = vmatpush1.xpose.msra.mxu0 0.0
    %1509 = vmatprep.subr.mxu0 0.0
    %1510 = vmatpush1.xpose.msra.mxu0 0.0
    %1511 = vmatprep.subr.mxu0 0.0
    %1512 = vmatpush1.xpose.msra.mxu0 0.0
    %1513 = vmatprep.subr.mxu0 0.0
    %1514 = vmatpush1.xpose.msra.mxu0 0.0
    %1515 = vmatprep.subr.mxu0 0.0
    %1516 = vmatpush1.xpose.msra.mxu0 0.0
    %1517 = vmatprep.subr.mxu0 0.0
    %1518 = vmatpush1.xpose.msra.mxu0 %v1485
    %1519 = vmatprep.subr.mxu0 0.0
    %1520 = vmatpush2.xpose.msra.mxu0 0.0
    %1521 = vmatprep.subr.mxu0 0.0
    %1522 = vmatpush2.xpose.msra.mxu0 0.0
    %1523 = vmatprep.subr.mxu0 0.0
    %1524 = vmatpush2.xpose.msra.mxu0 0.0
    %1525 = vmatprep.subr.mxu0 0.0
    %1526 = vmatpush2.xpose.msra.mxu0 0.0
    %1527 = vmatprep.subr.mxu0 0.0
    %1528 = vmatpush2.xpose.msra.mxu0 0.0
    %1529 = vmatprep.subr.mxu0 0.0
    %1530 = vmatpush2.xpose.msra.mxu0 0.0
    %1531 = vmatprep.subr.mxu0 0.0
    %1532 = vmatpush2.xpose.msra.mxu0 0.0
    %1533 = vmatprep.subr.mxu0 0.0
    %1534 = vmatpush2.xpose.msra.mxu0 0.0
    %1535 = vmatprep.subr.mxu0 0.0
    %1536 = vmatpush2.xpose.msra.mxu0 0.0
    %1537 = vmatprep.subr.mxu0 0.0
    %1538 = vmatpush2.xpose.msra.mxu0 0.0
    %1539 = vmatprep.subr.mxu0 0.0
    %1540 = vmatpush2.xpose.msra.mxu0 0.0
    %1541 = vmatprep.subr.mxu0 0.0
    %1542 = vmatpush2.xpose.msra.mxu0 0.0
    %1543 = vmatprep.subr.mxu0 0.0
    %1544 = vmatpush2.xpose.msra.mxu0 0.0
    %1545 = vmatprep.subr.mxu0 0.0
    %1546 = vmatpush2.xpose.msra.mxu0 0.0
    %1547 = vmatprep.subr.mxu0 0.0
    %1548 = vmatpush2.xpose.msra.mxu0 0.0
    %1549 = vmatprep.subr.mxu0 0.0
    %1550 = vmatpush2.xpose.msra.mxu0 0.0
    %1551 = vmatprep.mubr.f32.mxu0 0.0
    %1552 = vmatmul.mubr.f32.gmra.mxu0 %v1483
    %v1553 = vpop.f32.mrf.mxu0
    %v1554 = vadd.f32 0.0, %v1553
    %v1555 = vpop.f32.mrf.mxu0
    %1556 = vdwg.mxu0
    %1557 = vrot.lane.b32.xlu0 %v173, 120
    %v1558 = vpop.permute.xlu0 %1557
    %1559 = vrot.lane.b32.xlu0 %v173, 88
    %v1560 = vpop.permute.xlu0 %1559
    %v1561 = vsel %vm179, %v1558, 0
    %v1563 = vsel %vm179, %v1560, 0
    %1565 = vmatprep.subr.mxu0 0.0
    %1566 = vmatpush1.xpose.msra.mxu0 0.0
    %1567 = vmatprep.subr.mxu0 0.0
    %1568 = vmatpush1.xpose.msra.mxu0 0.0
    %1569 = vmatprep.subr.mxu0 0.0
    %1570 = vmatpush1.xpose.msra.mxu0 0.0
    %1571 = vmatprep.subr.mxu0 0.0
    %1572 = vmatpush1.xpose.msra.mxu0 0.0
    %1573 = vmatprep.subr.mxu0 0.0
    %1574 = vmatpush1.xpose.msra.mxu0 0.0
    %1575 = vmatprep.subr.mxu0 0.0
    %1576 = vmatpush1.xpose.msra.mxu0 0.0
    %1577 = vmatprep.subr.mxu0 0.0
    %1578 = vmatpush1.xpose.msra.mxu0 0.0
    %1579 = vmatprep.subr.mxu0 0.0
    %1580 = vmatpush1.xpose.msra.mxu0 0.0
    %1581 = vmatprep.subr.mxu0 0.0
    %1582 = vmatpush1.xpose.msra.mxu0 0.0
    %1583 = vmatprep.subr.mxu0 0.0
    %1584 = vmatpush1.xpose.msra.mxu0 0.0
    %1585 = vmatprep.subr.mxu0 0.0
    %1586 = vmatpush1.xpose.msra.mxu0 0.0
    %1587 = vmatprep.subr.mxu0 0.0
    %1588 = vmatpush1.xpose.msra.mxu0 0.0
    %1589 = vmatprep.subr.mxu0 0.0
    %1590 = vmatpush1.xpose.msra.mxu0 0.0
    %1591 = vmatprep.subr.mxu0 0.0
    %1592 = vmatpush1.xpose.msra.mxu0 0.0
    %1593 = vmatprep.subr.mxu0 0.0
    %1594 = vmatpush1.xpose.msra.mxu0 0.0
    %1595 = vmatprep.subr.mxu0 0.0
    %1596 = vmatpush1.xpose.msra.mxu0 %v1563
    %1597 = vmatprep.subr.mxu0 0.0
    %1598 = vmatpush2.xpose.msra.mxu0 0.0
    %1599 = vmatprep.subr.mxu0 0.0
    %1600 = vmatpush2.xpose.msra.mxu0 0.0
    %1601 = vmatprep.subr.mxu0 0.0
    %1602 = vmatpush2.xpose.msra.mxu0 0.0
    %1603 = vmatprep.subr.mxu0 0.0
    %1604 = vmatpush2.xpose.msra.mxu0 0.0
    %1605 = vmatprep.subr.mxu0 0.0
    %1606 = vmatpush2.xpose.msra.mxu0 0.0
    %1607 = vmatprep.subr.mxu0 0.0
    %1608 = vmatpush2.xpose.msra.mxu0 0.0
    %1609 = vmatprep.subr.mxu0 0.0
    %1610 = vmatpush2.xpose.msra.mxu0 0.0
    %1611 = vmatprep.subr.mxu0 0.0
    %1612 = vmatpush2.xpose.msra.mxu0 0.0
    %1613 = vmatprep.subr.mxu0 0.0
    %1614 = vmatpush2.xpose.msra.mxu0 0.0
    %1615 = vmatprep.subr.mxu0 0.0
    %1616 = vmatpush2.xpose.msra.mxu0 0.0
    %1617 = vmatprep.subr.mxu0 0.0
    %1618 = vmatpush2.xpose.msra.mxu0 0.0
    %1619 = vmatprep.subr.mxu0 0.0
    %1620 = vmatpush2.xpose.msra.mxu0 0.0
    %1621 = vmatprep.subr.mxu0 0.0
    %1622 = vmatpush2.xpose.msra.mxu0 0.0
    %1623 = vmatprep.subr.mxu0 0.0
    %1624 = vmatpush2.xpose.msra.mxu0 0.0
    %1625 = vmatprep.subr.mxu0 0.0
    %1626 = vmatpush2.xpose.msra.mxu0 0.0
    %1627 = vmatprep.subr.mxu0 0.0
    %1628 = vmatpush2.xpose.msra.mxu0 0.0
    %1629 = vmatprep.mubr.f32.mxu0 0.0
    %1630 = vmatmul.mubr.f32.gmra.mxu0 %v1561
    %v1631 = vpop.f32.mrf.mxu0
    %v1632 = vadd.f32 0.0, %v1631
    %v1633 = vpop.f32.mrf.mxu0
    %1634 = vdwg.mxu0
    %v1635 = vmul.f32 %v1242, 0.35355338
    %v1636 = vmul.f32 %v1320, 0.35355338
    %v1637 = vmul.f32 %v1398, 0.35355338
    %v1638 = vmul.f32 %v1476, 0.35355338
    %v1639 = vmul.f32 %v1554, 0.35355338
    %v1640 = vmul.f32 %v1632, 0.35355338
    %v1641 = vsel %vm179, %v1635, -inf
    %1642 = vmax.xlane.f32.xlu0 %v1641
    %v1643 = vpop.xlane.xlu0 %1642
    %v1644 = vsel %vm179, %v1636, -inf
    %1645 = vmax.xlane.f32.xlu0 %v1644
    %v1646 = vpop.xlane.xlu0 %1645
    %v1647 = vsel %vm179, %v1637, -inf
    %1648 = vmax.xlane.f32.xlu0 %v1647
    %v1649 = vpop.xlane.xlu0 %1648
    %v1650 = vsel %vm179, %v1638, -inf
    %1651 = vmax.xlane.f32.xlu0 %v1650
    %v1652 = vpop.xlane.xlu0 %1651
    %v1653 = vsel %vm179, %v1639, -inf
    %1654 = vmax.xlane.f32.xlu0 %v1653
    %v1655 = vpop.xlane.xlu0 %1654
    %v1656 = vsel %vm179, %v1640, -inf
    %1657 = vmax.xlane.f32.xlu0 %v1656
    %v1658 = vpop.xlane.xlu0 %1657
    %v1659 = vsub.f32 %v1635, %v1643
    %v1660 = vsub.f32 %v1636, %v1646
    %v1661 = vsub.f32 %v1637, %v1649
    %v1662 = vsub.f32 %v1638, %v1652
    %v1663 = vsub.f32 %v1639, %v1655
    %v1664 = vsub.f32 %v1640, %v1658
    %v1665 = vmul.f32 %v1659, 1.442695
    %v1666 = vpow.pop %v1665
    %v1667 = vmul.f32 %v1660, 1.442695
    %v1668 = vpow.pop %v1667
    %v1669 = vmul.f32 %v1661, 1.442695
    %v1670 = vpow.pop %v1669
    %v1671 = vmul.f32 %v1662, 1.442695
    %v1672 = vpow.pop %v1671
    %v1673 = vmul.f32 %v1663, 1.442695
    %v1674 = vpow.pop %v1673
    %v1675 = vmul.f32 %v1664, 1.442695
    %v1676 = vpow.pop %v1675
    %v1677 = vsel %vm179, %v1666, 0.0
    %1678 = vadd.xlane.f32.xlu0 %v1677
    %v1679 = vpop.xlane.xlu0 %1678
    %v1680 = vsel %vm179, %v1668, 0.0
    %1681 = vadd.xlane.f32.xlu0 %v1680
    %v1682 = vpop.xlane.xlu0 %1681
    %v1683 = vsel %vm179, %v1670, 0.0
    %1684 = vadd.xlane.f32.xlu0 %v1683
    %v1685 = vpop.xlane.xlu0 %1684
    %v1686 = vsel %vm179, %v1672, 0.0
    %1687 = vadd.xlane.f32.xlu0 %v1686
    %v1688 = vpop.xlane.xlu0 %1687
    %v1689 = vsel %vm179, %v1674, 0.0
    %1690 = vadd.xlane.f32.xlu0 %v1689
    %v1691 = vpop.xlane.xlu0 %1690
    %v1692 = vsel %vm179, %v1676, 0.0
    %1693 = vadd.xlane.f32.xlu0 %v1692
    %v1694 = vpop.xlane.xlu0 %1693
    %v1695 = vrcp.pop %v1679
    %v1696 = vrcp.pop %v1682
    %v1697 = vrcp.pop %v1685
    %v1698 = vrcp.pop %v1688
    %v1699 = vrcp.pop %v1691
    %v1700 = vrcp.pop %v1694
    %v1701 = vmul.f32 %v1666, %v1695
    %v1702 = vmul.f32 %v1668, %v1696
    %v1703 = vmul.f32 %v1670, %v1697
    %v1704 = vmul.f32 %v1672, %v1698
    %v1705 = vmul.f32 %v1674, %v1699
    %v1706 = vmul.f32 %v1676, %v1700
    %1707 = vrot.lane.b32.xlu0 %v148, 56
    %v1708 = vpop.permute.xlu0 %1707
    %v1711 = vsel %vm179, %v1701, 0
    %1713 = vmatprep.subr.mxu0 0.0
    %1714 = vmatpush1.msra.mxu0 0.0
    %1715 = vmatprep.subr.mxu0 0.0
    %1716 = vmatpush1.msra.mxu0 0.0
    %1717 = vmatprep.subr.mxu0 0.0
    %1718 = vmatpush1.msra.mxu0 0.0
    %1719 = vmatprep.subr.mxu0 0.0
    %1720 = vmatpush1.msra.mxu0 0.0
    %1721 = vmatprep.subr.mxu0 0.0
    %1722 = vmatpush1.msra.mxu0 0.0
    %1723 = vmatprep.subr.mxu0 0.0
    %1724 = vmatpush1.msra.mxu0 0.0
    %1725 = vmatprep.subr.mxu0 0.0
    %1726 = vmatpush1.msra.mxu0 0.0
    %1727 = vmatprep.subr.mxu0 0.0
    %1728 = vmatpush1.msra.mxu0 0.0
    %1729 = vmatprep.subr.mxu0 0.0
    %1730 = vmatpush1.msra.mxu0 0.0
    %1731 = vmatprep.subr.mxu0 0.0
    %1732 = vmatpush1.msra.mxu0 0.0
    %1733 = vmatprep.subr.mxu0 0.0
    %1734 = vmatpush1.msra.mxu0 0.0
    %1735 = vmatprep.subr.mxu0 0.0
    %1736 = vmatpush1.msra.mxu0 0.0
    %1737 = vmatprep.subr.mxu0 0.0
    %1738 = vmatpush1.msra.mxu0 0.0
    %1739 = vmatprep.subr.mxu0 0.0
    %1740 = vmatpush1.msra.mxu0 0.0
    %1741 = vmatprep.subr.mxu0 0.0
    %1742 = vmatpush1.msra.mxu0 0.0
    %1743 = vmatprep.subr.mxu0 0.0
    %1744 = vmatpush1.msra.mxu0 %v1708
    %1745 = vmatprep.subr.mxu0 0.0
    %1746 = vmatpush2.msra.mxu0 0.0
    %1747 = vmatprep.subr.mxu0 0.0
    %1748 = vmatpush2.msra.mxu0 0.0
    %1749 = vmatprep.subr.mxu0 0.0
    %1750 = vmatpush2.msra.mxu0 0.0
    %1751 = vmatprep.subr.mxu0 0.0
    %1752 = vmatpush2.msra.mxu0 0.0
    %1753 = vmatprep.subr.mxu0 0.0
    %1754 = vmatpush2.msra.mxu0 0.0
    %1755 = vmatprep.subr.mxu0 0.0
    %1756 = vmatpush2.msra.mxu0 0.0
    %1757 = vmatprep.subr.mxu0 0.0
    %1758 = vmatpush2.msra.mxu0 0.0
    %1759 = vmatprep.subr.mxu0 0.0
    %1760 = vmatpush2.msra.mxu0 0.0
    %1761 = vmatprep.subr.mxu0 0.0
    %1762 = vmatpush2.msra.mxu0 0.0
    %1763 = vmatprep.subr.mxu0 0.0
    %1764 = vmatpush2.msra.mxu0 0.0
    %1765 = vmatprep.subr.mxu0 0.0
    %1766 = vmatpush2.msra.mxu0 0.0
    %1767 = vmatprep.subr.mxu0 0.0
    %1768 = vmatpush2.msra.mxu0 0.0
    %1769 = vmatprep.subr.mxu0 0.0
    %1770 = vmatpush2.msra.mxu0 0.0
    %1771 = vmatprep.subr.mxu0 0.0
    %1772 = vmatpush2.msra.mxu0 0.0
    %1773 = vmatprep.subr.mxu0 0.0
    %1774 = vmatpush2.msra.mxu0 0.0
    %1775 = vmatprep.subr.mxu0 0.0
    %1776 = vmatpush2.msra.mxu0 0.0
    %1777 = vmatprep.mubr.f32.mxu0 0.0
    %1778 = vmatmul.mubr.f32.gmra.mxu0 %v1711
    %v1779 = vpop.f32.mrf.mxu0
    %v1780 = vadd.f32 0.0, %v1779
    %v1781 = vpop.f32.mrf.mxu0
    %1782 = vdwg.mxu0
    %1783 = vrot.lane.b32.xlu0 %v153, 56
    %v1784 = vpop.permute.xlu0 %1783
    %v1787 = vsel %vm179, %v1702, 0
    %1789 = vmatprep.subr.mxu0 0.0
    %1790 = vmatpush1.msra.mxu0 0.0
    %1791 = vmatprep.subr.mxu0 0.0
    %1792 = vmatpush1.msra.mxu0 0.0
    %1793 = vmatprep.subr.mxu0 0.0
    %1794 = vmatpush1.msra.mxu0 0.0
    %1795 = vmatprep.subr.mxu0 0.0
    %1796 = vmatpush1.msra.mxu0 0.0
    %1797 = vmatprep.subr.mxu0 0.0
    %1798 = vmatpush1.msra.mxu0 0.0
    %1799 = vmatprep.subr.mxu0 0.0
    %1800 = vmatpush1.msra.mxu0 0.0
    %1801 = vmatprep.subr.mxu0 0.0
    %1802 = vmatpush1.msra.mxu0 0.0
    %1803 = vmatprep.subr.mxu0 0.0
    %1804 = vmatpush1.msra.mxu0 0.0
    %1805 = vmatprep.subr.mxu0 0.0
    %1806 = vmatpush1.msra.mxu0 0.0
    %1807 = vmatprep.subr.mxu0 0.0
    %1808 = vmatpush1.msra.mxu0 0.0
    %1809 = vmatprep.subr.mxu0 0.0
    %1810 = vmatpush1.msra.mxu0 0.0
    %1811 = vmatprep.subr.mxu0 0.0
    %1812 = vmatpush1.msra.mxu0 0.0
    %1813 = vmatprep.subr.mxu0 0.0
    %1814 = vmatpush1.msra.mxu0 0.0
    %1815 = vmatprep.subr.mxu0 0.0
    %1816 = vmatpush1.msra.mxu0 0.0
    %1817 = vmatprep.subr.mxu0 0.0
    %1818 = vmatpush1.msra.mxu0 0.0
    %1819 = vmatprep.subr.mxu0 0.0
    %1820 = vmatpush1.msra.mxu0 %v1784
    %1821 = vmatprep.subr.mxu0 0.0
    %1822 = vmatpush2.msra.mxu0 0.0
    %1823 = vmatprep.subr.mxu0 0.0
    %1824 = vmatpush2.msra.mxu0 0.0
    %1825 = vmatprep.subr.mxu0 0.0
    %1826 = vmatpush2.msra.mxu0 0.0
    %1827 = vmatprep.subr.mxu0 0.0
    %1828 = vmatpush2.msra.mxu0 0.0
    %1829 = vmatprep.subr.mxu0 0.0
    %1830 = vmatpush2.msra.mxu0 0.0
    %1831 = vmatprep.subr.mxu0 0.0
    %1832 = vmatpush2.msra.mxu0 0.0
    %1833 = vmatprep.subr.mxu0 0.0
    %1834 = vmatpush2.msra.mxu0 0.0
    %1835 = vmatprep.subr.mxu0 0.0
    %1836 = vmatpush2.msra.mxu0 0.0
    %1837 = vmatprep.subr.mxu0 0.0
    %1838 = vmatpush2.msra.mxu0 0.0
    %1839 = vmatprep.subr.mxu0 0.0
    %1840 = vmatpush2.msra.mxu0 0.0
    %1841 = vmatprep.subr.mxu0 0.0
    %1842 = vmatpush2.msra.mxu0 0.0
    %1843 = vmatprep.subr.mxu0 0.0
    %1844 = vmatpush2.msra.mxu0 0.0
    %1845 = vmatprep.subr.mxu0 0.0
    %1846 = vmatpush2.msra.mxu0 0.0
    %1847 = vmatprep.subr.mxu0 0.0
    %1848 = vmatpush2.msra.mxu0 0.0
    %1849 = vmatprep.subr.mxu0 0.0
    %1850 = vmatpush2.msra.mxu0 0.0
    %1851 = vmatprep.subr.mxu0 0.0
    %1852 = vmatpush2.msra.mxu0 0.0
    %1853 = vmatprep.mubr.f32.mxu0 0.0
    %1854 = vmatmul.mubr.f32.gmra.mxu0 %v1787
    %v1855 = vpop.f32.mrf.mxu0
    %v1856 = vadd.f32 0.0, %v1855
    %v1857 = vpop.f32.mrf.mxu0
    %1858 = vdwg.mxu0
    %1859 = vrot.lane.b32.xlu0 %v158, 56
    %v1860 = vpop.permute.xlu0 %1859
    %v1863 = vsel %vm179, %v1703, 0
    %1865 = vmatprep.subr.mxu0 0.0
    %1866 = vmatpush1.msra.mxu0 0.0
    %1867 = vmatprep.subr.mxu0 0.0
    %1868 = vmatpush1.msra.mxu0 0.0
    %1869 = vmatprep.subr.mxu0 0.0
    %1870 = vmatpush1.msra.mxu0 0.0
    %1871 = vmatprep.subr.mxu0 0.0
    %1872 = vmatpush1.msra.mxu0 0.0
    %1873 = vmatprep.subr.mxu0 0.0
    %1874 = vmatpush1.msra.mxu0 0.0
    %1875 = vmatprep.subr.mxu0 0.0
    %1876 = vmatpush1.msra.mxu0 0.0
    %1877 = vmatprep.subr.mxu0 0.0
    %1878 = vmatpush1.msra.mxu0 0.0
    %1879 = vmatprep.subr.mxu0 0.0
    %1880 = vmatpush1.msra.mxu0 0.0
    %1881 = vmatprep.subr.mxu0 0.0
    %1882 = vmatpush1.msra.mxu0 0.0
    %1883 = vmatprep.subr.mxu0 0.0
    %1884 = vmatpush1.msra.mxu0 0.0
    %1885 = vmatprep.subr.mxu0 0.0
    %1886 = vmatpush1.msra.mxu0 0.0
    %1887 = vmatprep.subr.mxu0 0.0
    %1888 = vmatpush1.msra.mxu0 0.0
    %1889 = vmatprep.subr.mxu0 0.0
    %1890 = vmatpush1.msra.mxu0 0.0
    %1891 = vmatprep.subr.mxu0 0.0
    %1892 = vmatpush1.msra.mxu0 0.0
    %1893 = vmatprep.subr.mxu0 0.0
    %1894 = vmatpush1.msra.mxu0 0.0
    %1895 = vmatprep.subr.mxu0 0.0
    %1896 = vmatpush1.msra.mxu0 %v1860
    %1897 = vmatprep.subr.mxu0 0.0
    %1898 = vmatpush2.msra.mxu0 0.0
    %1899 = vmatprep.subr.mxu0 0.0
    %1900 = vmatpush2.msra.mxu0 0.0
    %1901 = vmatprep.subr.mxu0 0.0
    %1902 = vmatpush2.msra.mxu0 0.0
    %1903 = vmatprep.subr.mxu0 0.0
    %1904 = vmatpush2.msra.mxu0 0.0
    %1905 = vmatprep.subr.mxu0 0.0
    %1906 = vmatpush2.msra.mxu0 0.0
    %1907 = vmatprep.subr.mxu0 0.0
    %1908 = vmatpush2.msra.mxu0 0.0
    %1909 = vmatprep.subr.mxu0 0.0
    %1910 = vmatpush2.msra.mxu0 0.0
    %1911 = vmatprep.subr.mxu0 0.0
    %1912 = vmatpush2.msra.mxu0 0.0
    %1913 = vmatprep.subr.mxu0 0.0
    %1914 = vmatpush2.msra.mxu0 0.0
    %1915 = vmatprep.subr.mxu0 0.0
    %1916 = vmatpush2.msra.mxu0 0.0
    %1917 = vmatprep.subr.mxu0 0.0
    %1918 = vmatpush2.msra.mxu0 0.0
    %1919 = vmatprep.subr.mxu0 0.0
    %1920 = vmatpush2.msra.mxu0 0.0
    %1921 = vmatprep.subr.mxu0 0.0
    %1922 = vmatpush2.msra.mxu0 0.0
    %1923 = vmatprep.subr.mxu0 0.0
    %1924 = vmatpush2.msra.mxu0 0.0
    %1925 = vmatprep.subr.mxu0 0.0
    %1926 = vmatpush2.msra.mxu0 0.0
    %1927 = vmatprep.subr.mxu0 0.0
    %1928 = vmatpush2.msra.mxu0 0.0
    %1929 = vmatprep.mubr.f32.mxu0 0.0
    %1930 = vmatmul.mubr.f32.gmra.mxu0 %v1863
    %v1931 = vpop.f32.mrf.mxu0
    %v1932 = vadd.f32 0.0, %v1931
    %v1933 = vpop.f32.mrf.mxu0
    %1934 = vdwg.mxu0
    %1935 = vrot.lane.b32.xlu0 %v163, 56
    %v1936 = vpop.permute.xlu0 %1935
    %v1939 = vsel %vm179, %v1704, 0
    %1941 = vmatprep.subr.mxu0 0.0
    %1942 = vmatpush1.msra.mxu0 0.0
    %1943 = vmatprep.subr.mxu0 0.0
    %1944 = vmatpush1.msra.mxu0 0.0
    %1945 = vmatprep.subr.mxu0 0.0
    %1946 = vmatpush1.msra.mxu0 0.0
    %1947 = vmatprep.subr.mxu0 0.0
    %1948 = vmatpush1.msra.mxu0 0.0
    %1949 = vmatprep.subr.mxu0 0.0
    %1950 = vmatpush1.msra.mxu0 0.0
    %1951 = vmatprep.subr.mxu0 0.0
    %1952 = vmatpush1.msra.mxu0 0.0
    %1953 = vmatprep.subr.mxu0 0.0
    %1954 = vmatpush1.msra.mxu0 0.0
    %1955 = vmatprep.subr.mxu0 0.0
    %1956 = vmatpush1.msra.mxu0 0.0
    %1957 = vmatprep.subr.mxu0 0.0
    %1958 = vmatpush1.msra.mxu0 0.0
    %1959 = vmatprep.subr.mxu0 0.0
    %1960 = vmatpush1.msra.mxu0 0.0
    %1961 = vmatprep.subr.mxu0 0.0
    %1962 = vmatpush1.msra.mxu0 0.0
    %1963 = vmatprep.subr.mxu0 0.0
    %1964 = vmatpush1.msra.mxu0 0.0
    %1965 = vmatprep.subr.mxu0 0.0
    %1966 = vmatpush1.msra.mxu0 0.0
    %1967 = vmatprep.subr.mxu0 0.0
    %1968 = vmatpush1.msra.mxu0 0.0
    %1969 = vmatprep.subr.mxu0 0.0
    %1970 = vmatpush1.msra.mxu0 0.0
    %1971 = vmatprep.subr.mxu0 0.0
    %1972 = vmatpush1.msra.mxu0 %v1936
    %1973 = vmatprep.subr.mxu0 0.0
    %1974 = vmatpush2.msra.mxu0 0.0
    %1975 = vmatprep.subr.mxu0 0.0
    %1976 = vmatpush2.msra.mxu0 0.0
    %1977 = vmatprep.subr.mxu0 0.0
    %1978 = vmatpush2.msra.mxu0 0.0
    %1979 = vmatprep.subr.mxu0 0.0
    %1980 = vmatpush2.msra.mxu0 0.0
    %1981 = vmatprep.subr.mxu0 0.0
    %1982 = vmatpush2.msra.mxu0 0.0
    %1983 = vmatprep.subr.mxu0 0.0
    %1984 = vmatpush2.msra.mxu0 0.0
    %1985 = vmatprep.subr.mxu0 0.0
    %1986 = vmatpush2.msra.mxu0 0.0
    %1987 = vmatprep.subr.mxu0 0.0
    %1988 = vmatpush2.msra.mxu0 0.0
    %1989 = vmatprep.subr.mxu0 0.0
    %1990 = vmatpush2.msra.mxu0 0.0
    %1991 = vmatprep.subr.mxu0 0.0
    %1992 = vmatpush2.msra.mxu0 0.0
    %1993 = vmatprep.subr.mxu0 0.0
    %1994 = vmatpush2.msra.mxu0 0.0
    %1995 = vmatprep.subr.mxu0 0.0
    %1996 = vmatpush2.msra.mxu0 0.0
    %1997 = vmatprep.subr.mxu0 0.0
    %1998 = vmatpush2.msra.mxu0 0.0
    %1999 = vmatprep.subr.mxu0 0.0
    %2000 = vmatpush2.msra.mxu0 0.0
    %2001 = vmatprep.subr.mxu0 0.0
    %2002 = vmatpush2.msra.mxu0 0.0
    %2003 = vmatprep.subr.mxu0 0.0
    %2004 = vmatpush2.msra.mxu0 0.0
    %2005 = vmatprep.mubr.f32.mxu0 0.0
    %2006 = vmatmul.mubr.f32.gmra.mxu0 %v1939
    %v2007 = vpop.f32.mrf.mxu0
    %v2008 = vadd.f32 0.0, %v2007
    %v2009 = vpop.f32.mrf.mxu0
    %2010 = vdwg.mxu0
    %2011 = vrot.lane.b32.xlu0 %v168, 56
    %v2012 = vpop.permute.xlu0 %2011
    %v2015 = vsel %vm179, %v1705, 0
    %2017 = vmatprep.subr.mxu0 0.0
    %2018 = vmatpush1.msra.mxu0 0.0
    %2019 = vmatprep.subr.mxu0 0.0
    %2020 = vmatpush1.msra.mxu0 0.0
    %2021 = vmatprep.subr.mxu0 0.0
    %2022 = vmatpush1.msra.mxu0 0.0
    %2023 = vmatprep.subr.mxu0 0.0
    %2024 = vmatpush1.msra.mxu0 0.0
    %2025 = vmatprep.subr.mxu0 0.0
    %2026 = vmatpush1.msra.mxu0 0.0
    %2027 = vmatprep.subr.mxu0 0.0
    %2028 = vmatpush1.msra.mxu0 0.0
    %2029 = vmatprep.subr.mxu0 0.0
    %2030 = vmatpush1.msra.mxu0 0.0
    %2031 = vmatprep.subr.mxu0 0.0
    %2032 = vmatpush1.msra.mxu0 0.0
    %2033 = vmatprep.subr.mxu0 0.0
    %2034 = vmatpush1.msra.mxu0 0.0
    %2035 = vmatprep.subr.mxu0 0.0
    %2036 = vmatpush1.msra.mxu0 0.0
    %2037 = vmatprep.subr.mxu0 0.0
    %2038 = vmatpush1.msra.mxu0 0.0
    %2039 = vmatprep.subr.mxu0 0.0
    %2040 = vmatpush1.msra.mxu0 0.0
    %2041 = vmatprep.subr.mxu0 0.0
    %2042 = vmatpush1.msra.mxu0 0.0
    %2043 = vmatprep.subr.mxu0 0.0
    %2044 = vmatpush1.msra.mxu0 0.0
    %2045 = vmatprep.subr.mxu0 0.0
    %2046 = vmatpush1.msra.mxu0 0.0
    %2047 = vmatprep.subr.mxu0 0.0
    %2048 = vmatpush1.msra.mxu0 %v2012
    %2049 = vmatprep.subr.mxu0 0.0
    %2050 = vmatpush2.msra.mxu0 0.0
    %2051 = vmatprep.subr.mxu0 0.0
    %2052 = vmatpush2.msra.mxu0 0.0
    %2053 = vmatprep.subr.mxu0 0.0
    %2054 = vmatpush2.msra.mxu0 0.0
    %2055 = vmatprep.subr.mxu0 0.0
    %2056 = vmatpush2.msra.mxu0 0.0
    %2057 = vmatprep.subr.mxu0 0.0
    %2058 = vmatpush2.msra.mxu0 0.0
    %2059 = vmatprep.subr.mxu0 0.0
    %2060 = vmatpush2.msra.mxu0 0.0
    %2061 = vmatprep.subr.mxu0 0.0
    %2062 = vmatpush2.msra.mxu0 0.0
    %2063 = vmatprep.subr.mxu0 0.0
    %2064 = vmatpush2.msra.mxu0 0.0
    %2065 = vmatprep.subr.mxu0 0.0
    %2066 = vmatpush2.msra.mxu0 0.0
    %2067 = vmatprep.subr.mxu0 0.0
    %2068 = vmatpush2.msra.mxu0 0.0
    %2069 = vmatprep.subr.mxu0 0.0
    %2070 = vmatpush2.msra.mxu0 0.0
    %2071 = vmatprep.subr.mxu0 0.0
    %2072 = vmatpush2.msra.mxu0 0.0
    %2073 = vmatprep.subr.mxu0 0.0
    %2074 = vmatpush2.msra.mxu0 0.0
    %2075 = vmatprep.subr.mxu0 0.0
    %2076 = vmatpush2.msra.mxu0 0.0
    %2077 = vmatprep.subr.mxu0 0.0
    %2078 = vmatpush2.msra.mxu0 0.0
    %2079 = vmatprep.subr.mxu0 0.0
    %2080 = vmatpush2.msra.mxu0 0.0
    %2081 = vmatprep.mubr.f32.mxu0 0.0
    %2082 = vmatmul.mubr.f32.gmra.mxu0 %v2015
    %v2083 = vpop.f32.mrf.mxu0
    %v2084 = vadd.f32 0.0, %v2083
    %v2085 = vpop.f32.mrf.mxu0
    %2086 = vdwg.mxu0
    %2087 = vrot.lane.b32.xlu0 %v173, 56
    %v2088 = vpop.permute.xlu0 %2087
    %v2091 = vsel %vm179, %v1706, 0
    %2093 = vmatprep.subr.mxu0 0.0
    %2094 = vmatpush1.msra.mxu0 0.0
    %2095 = vmatprep.subr.mxu0 0.0
    %2096 = vmatpush1.msra.mxu0 0.0
    %2097 = vmatprep.subr.mxu0 0.0
    %2098 = vmatpush1.msra.mxu0 0.0
    %2099 = vmatprep.subr.mxu0 0.0
    %2100 = vmatpush1.msra.mxu0 0.0
    %2101 = vmatprep.subr.mxu0 0.0
    %2102 = vmatpush1.msra.mxu0 0.0
    %2103 = vmatprep.subr.mxu0 0.0
    %2104 = vmatpush1.msra.mxu0 0.0
    %2105 = vmatprep.subr.mxu0 0.0
    %2106 = vmatpush1.msra.mxu0 0.0
    %2107 = vmatprep.subr.mxu0 0.0
    %2108 = vmatpush1.msra.mxu0 0.0
    %2109 = vmatprep.subr.mxu0 0.0
    %2110 = vmatpush1.msra.mxu0 0.0
    %2111 = vmatprep.subr.mxu0 0.0
    %2112 = vmatpush1.msra.mxu0 0.0
    %2113 = vmatprep.subr.mxu0 0.0
    %2114 = vmatpush1.msra.mxu0 0.0
    %2115 = vmatprep.subr.mxu0 0.0
    %2116 = vmatpush1.msra.mxu0 0.0
    %2117 = vmatprep.subr.mxu0 0.0
    %2118 = vmatpush1.msra.mxu0 0.0
    %2119 = vmatprep.subr.mxu0 0.0
    %2120 = vmatpush1.msra.mxu0 0.0
    %2121 = vmatprep.subr.mxu0 0.0
    %2122 = vmatpush1.msra.mxu0 0.0
    %2123 = vmatprep.subr.mxu0 0.0
    %2124 = vmatpush1.msra.mxu0 %v2088
    %2125 = vmatprep.subr.mxu0 0.0
    %2126 = vmatpush2.msra.mxu0 0.0
    %2127 = vmatprep.subr.mxu0 0.0
    %2128 = vmatpush2.msra.mxu0 0.0
    %2129 = vmatprep.subr.mxu0 0.0
    %2130 = vmatpush2.msra.mxu0 0.0
    %2131 = vmatprep.subr.mxu0 0.0
    %2132 = vmatpush2.msra.mxu0 0.0
    %2133 = vmatprep.subr.mxu0 0.0
    %2134 = vmatpush2.msra.mxu0 0.0
    %2135 = vmatprep.subr.mxu0 0.0
    %2136 = vmatpush2.msra.mxu0 0.0
    %2137 = vmatprep.subr.mxu0 0.0
    %2138 = vmatpush2.msra.mxu0 0.0
    %2139 = vmatprep.subr.mxu0 0.0
    %2140 = vmatpush2.msra.mxu0 0.0
    %2141 = vmatprep.subr.mxu0 0.0
    %2142 = vmatpush2.msra.mxu0 0.0
    %2143 = vmatprep.subr.mxu0 0.0
    %2144 = vmatpush2.msra.mxu0 0.0
    %2145 = vmatprep.subr.mxu0 0.0
    %2146 = vmatpush2.msra.mxu0 0.0
    %2147 = vmatprep.subr.mxu0 0.0
    %2148 = vmatpush2.msra.mxu0 0.0
    %2149 = vmatprep.subr.mxu0 0.0
    %2150 = vmatpush2.msra.mxu0 0.0
    %2151 = vmatprep.subr.mxu0 0.0
    %2152 = vmatpush2.msra.mxu0 0.0
    %2153 = vmatprep.subr.mxu0 0.0
    %2154 = vmatpush2.msra.mxu0 0.0
    %2155 = vmatprep.subr.mxu0 0.0
    %2156 = vmatpush2.msra.mxu0 0.0
    %2157 = vmatprep.mubr.f32.mxu0 0.0
    %2158 = vmatmul.mubr.f32.gmra.mxu0 %v2091
    %v2159 = vpop.f32.mrf.mxu0
    %v2160 = vadd.f32 0.0, %v2159
    %v2161 = vpop.f32.mrf.mxu0
    %2162 = vdwg.mxu0
    %2163 = vrot.lane.b32.xlu0 %v148, 112
    %v2164 = vpop.permute.xlu0 %2163
    %2165 = vrot.lane.b32.xlu0 %v148, 80
    %v2166 = vpop.permute.xlu0 %2165
    %v2167 = vsel %vm179, %v2164, 0
    %v2169 = vsel %vm179, %v2166, 0
    %2171 = vmatprep.subr.mxu0 0.0
    %2172 = vmatpush1.xpose.msra.mxu0 0.0
    %2173 = vmatprep.subr.mxu0 0.0
    %2174 = vmatpush1.xpose.msra.mxu0 0.0
    %2175 = vmatprep.subr.mxu0 0.0
    %2176 = vmatpush1.xpose.msra.mxu0 0.0
    %2177 = vmatprep.subr.mxu0 0.0
    %2178 = vmatpush1.xpose.msra.mxu0 0.0
    %2179 = vmatprep.subr.mxu0 0.0
    %2180 = vmatpush1.xpose.msra.mxu0 0.0
    %2181 = vmatprep.subr.mxu0 0.0
    %2182 = vmatpush1.xpose.msra.mxu0 0.0
    %2183 = vmatprep.subr.mxu0 0.0
    %2184 = vmatpush1.xpose.msra.mxu0 0.0
    %2185 = vmatprep.subr.mxu0 0.0
    %2186 = vmatpush1.xpose.msra.mxu0 0.0
    %2187 = vmatprep.subr.mxu0 0.0
    %2188 = vmatpush1.xpose.msra.mxu0 0.0
    %2189 = vmatprep.subr.mxu0 0.0
    %2190 = vmatpush1.xpose.msra.mxu0 0.0
    %2191 = vmatprep.subr.mxu0 0.0
    %2192 = vmatpush1.xpose.msra.mxu0 0.0
    %2193 = vmatprep.subr.mxu0 0.0
    %2194 = vmatpush1.xpose.msra.mxu0 0.0
    %2195 = vmatprep.subr.mxu0 0.0
    %2196 = vmatpush1.xpose.msra.mxu0 0.0
    %2197 = vmatprep.subr.mxu0 0.0
    %2198 = vmatpush1.xpose.msra.mxu0 0.0
    %2199 = vmatprep.subr.mxu0 0.0
    %2200 = vmatpush1.xpose.msra.mxu0 0.0
    %2201 = vmatprep.subr.mxu0 0.0
    %2202 = vmatpush1.xpose.msra.mxu0 %v2169
    %2203 = vmatprep.subr.mxu0 0.0
    %2204 = vmatpush2.xpose.msra.mxu0 0.0
    %2205 = vmatprep.subr.mxu0 0.0
    %2206 = vmatpush2.xpose.msra.mxu0 0.0
    %2207 = vmatprep.subr.mxu0 0.0
    %2208 = vmatpush2.xpose.msra.mxu0 0.0
    %2209 = vmatprep.subr.mxu0 0.0
    %2210 = vmatpush2.xpose.msra.mxu0 0.0
    %2211 = vmatprep.subr.mxu0 0.0
    %2212 = vmatpush2.xpose.msra.mxu0 0.0
    %2213 = vmatprep.subr.mxu0 0.0
    %2214 = vmatpush2.xpose.msra.mxu0 0.0
    %2215 = vmatprep.subr.mxu0 0.0
    %2216 = vmatpush2.xpose.msra.mxu0 0.0
    %2217 = vmatprep.subr.mxu0 0.0
    %2218 = vmatpush2.xpose.msra.mxu0 0.0
    %2219 = vmatprep.subr.mxu0 0.0
    %2220 = vmatpush2.xpose.msra.mxu0 0.0
    %2221 = vmatprep.subr.mxu0 0.0
    %2222 = vmatpush2.xpose.msra.mxu0 0.0
    %2223 = vmatprep.subr.mxu0 0.0
    %2224 = vmatpush2.xpose.msra.mxu0 0.0
    %2225 = vmatprep.subr.mxu0 0.0
    %2226 = vmatpush2.xpose.msra.mxu0 0.0
    %2227 = vmatprep.subr.mxu0 0.0
    %2228 = vmatpush2.xpose.msra.mxu0 0.0
    %2229 = vmatprep.subr.mxu0 0.0
    %2230 = vmatpush2.xpose.msra.mxu0 0.0
    %2231 = vmatprep.subr.mxu0 0.0
    %2232 = vmatpush2.xpose.msra.mxu0 0.0
    %2233 = vmatprep.subr.mxu0 0.0
    %2234 = vmatpush2.xpose.msra.mxu0 0.0
    %2235 = vmatprep.mubr.f32.mxu0 0.0
    %2236 = vmatmul.mubr.f32.gmra.mxu0 %v2167
    %v2237 = vpop.f32.mrf.mxu0
    %v2238 = vadd.f32 0.0, %v2237
    %v2239 = vpop.f32.mrf.mxu0
    %2240 = vdwg.mxu0
    %2241 = vrot.lane.b32.xlu0 %v153, 112
    %v2242 = vpop.permute.xlu0 %2241
    %2243 = vrot.lane.b32.xlu0 %v153, 80
    %v2244 = vpop.permute.xlu0 %2243
    %v2245 = vsel %vm179, %v2242, 0
    %v2247 = vsel %vm179, %v2244, 0
    %2249 = vmatprep.subr.mxu0 0.0
    %2250 = vmatpush1.xpose.msra.mxu0 0.0
    %2251 = vmatprep.subr.mxu0 0.0
    %2252 = vmatpush1.xpose.msra.mxu0 0.0
    %2253 = vmatprep.subr.mxu0 0.0
    %2254 = vmatpush1.xpose.msra.mxu0 0.0
    %2255 = vmatprep.subr.mxu0 0.0
    %2256 = vmatpush1.xpose.msra.mxu0 0.0
    %2257 = vmatprep.subr.mxu0 0.0
    %2258 = vmatpush1.xpose.msra.mxu0 0.0
    %2259 = vmatprep.subr.mxu0 0.0
    %2260 = vmatpush1.xpose.msra.mxu0 0.0
    %2261 = vmatprep.subr.mxu0 0.0
    %2262 = vmatpush1.xpose.msra.mxu0 0.0
    %2263 = vmatprep.subr.mxu0 0.0
    %2264 = vmatpush1.xpose.msra.mxu0 0.0
    %2265 = vmatprep.subr.mxu0 0.0
    %2266 = vmatpush1.xpose.msra.mxu0 0.0
    %2267 = vmatprep.subr.mxu0 0.0
    %2268 = vmatpush1.xpose.msra.mxu0 0.0
    %2269 = vmatprep.subr.mxu0 0.0
    %2270 = vmatpush1.xpose.msra.mxu0 0.0
    %2271 = vmatprep.subr.mxu0 0.0
    %2272 = vmatpush1.xpose.msra.mxu0 0.0
    %2273 = vmatprep.subr.mxu0 0.0
    %2274 = vmatpush1.xpose.msra.mxu0 0.0
    %2275 = vmatprep.subr.mxu0 0.0
    %2276 = vmatpush1.xpose.msra.mxu0 0.0
    %2277 = vmatprep.subr.mxu0 0.0
    %2278 = vmatpush1.xpose.msra.mxu0 0.0
    %2279 = vmatprep.subr.mxu0 0.0
    %2280 = vmatpush1.xpose.msra.mxu0 %v2247
    %2281 = vmatprep.subr.mxu0 0.0
    %2282 = vmatpush2.xpose.msra.mxu0 0.0
    %2283 = vmatprep.subr.mxu0 0.0
    %2284 = vmatpush2.xpose.msra.mxu0 0.0
    %2285 = vmatprep.subr.mxu0 0.0
    %2286 = vmatpush2.xpose.msra.mxu0 0.0
    %2287 = vmatprep.subr.mxu0 0.0
    %2288 = vmatpush2.xpose.msra.mxu0 0.0
    %2289 = vmatprep.subr.mxu0 0.0
    %2290 = vmatpush2.xpose.msra.mxu0 0.0
    %2291 = vmatprep.subr.mxu0 0.0
    %2292 = vmatpush2.xpose.msra.mxu0 0.0
    %2293 = vmatprep.subr.mxu0 0.0
    %2294 = vmatpush2.xpose.msra.mxu0 0.0
    %2295 = vmatprep.subr.mxu0 0.0
    %2296 = vmatpush2.xpose.msra.mxu0 0.0
    %2297 = vmatprep.subr.mxu0 0.0
    %2298 = vmatpush2.xpose.msra.mxu0 0.0
    %2299 = vmatprep.subr.mxu0 0.0
    %2300 = vmatpush2.xpose.msra.mxu0 0.0
    %2301 = vmatprep.subr.mxu0 0.0
    %2302 = vmatpush2.xpose.msra.mxu0 0.0
    %2303 = vmatprep.subr.mxu0 0.0
    %2304 = vmatpush2.xpose.msra.mxu0 0.0
    %2305 = vmatprep.subr.mxu0 0.0
    %2306 = vmatpush2.xpose.msra.mxu0 0.0
    %2307 = vmatprep.subr.mxu0 0.0
    %2308 = vmatpush2.xpose.msra.mxu0 0.0
    %2309 = vmatprep.subr.mxu0 0.0
    %2310 = vmatpush2.xpose.msra.mxu0 0.0
    %2311 = vmatprep.subr.mxu0 0.0
    %2312 = vmatpush2.xpose.msra.mxu0 0.0
    %2313 = vmatprep.mubr.f32.mxu0 0.0
    %2314 = vmatmul.mubr.f32.gmra.mxu0 %v2245
    %v2315 = vpop.f32.mrf.mxu0
    %v2316 = vadd.f32 0.0, %v2315
    %v2317 = vpop.f32.mrf.mxu0
    %2318 = vdwg.mxu0
    %2319 = vrot.lane.b32.xlu0 %v158, 112
    %v2320 = vpop.permute.xlu0 %2319
    %2321 = vrot.lane.b32.xlu0 %v158, 80
    %v2322 = vpop.permute.xlu0 %2321
    %v2323 = vsel %vm179, %v2320, 0
    %v2325 = vsel %vm179, %v2322, 0
    %2327 = vmatprep.subr.mxu0 0.0
    %2328 = vmatpush1.xpose.msra.mxu0 0.0
    %2329 = vmatprep.subr.mxu0 0.0
    %2330 = vmatpush1.xpose.msra.mxu0 0.0
    %2331 = vmatprep.subr.mxu0 0.0
    %2332 = vmatpush1.xpose.msra.mxu0 0.0
    %2333 = vmatprep.subr.mxu0 0.0
    %2334 = vmatpush1.xpose.msra.mxu0 0.0
    %2335 = vmatprep.subr.mxu0 0.0
    %2336 = vmatpush1.xpose.msra.mxu0 0.0
    %2337 = vmatprep.subr.mxu0 0.0
    %2338 = vmatpush1.xpose.msra.mxu0 0.0
    %2339 = vmatprep.subr.mxu0 0.0
    %2340 = vmatpush1.xpose.msra.mxu0 0.0
    %2341 = vmatprep.subr.mxu0 0.0
    %2342 = vmatpush1.xpose.msra.mxu0 0.0
    %2343 = vmatprep.subr.mxu0 0.0
    %2344 = vmatpush1.xpose.msra.mxu0 0.0
    %2345 = vmatprep.subr.mxu0 0.0
    %2346 = vmatpush1.xpose.msra.mxu0 0.0
    %2347 = vmatprep.subr.mxu0 0.0
    %2348 = vmatpush1.xpose.msra.mxu0 0.0
    %2349 = vmatprep.subr.mxu0 0.0
    %2350 = vmatpush1.xpose.msra.mxu0 0.0
    %2351 = vmatprep.subr.mxu0 0.0
    %2352 = vmatpush1.xpose.msra.mxu0 0.0
    %2353 = vmatprep.subr.mxu0 0.0
    %2354 = vmatpush1.xpose.msra.mxu0 0.0
    %2355 = vmatprep.subr.mxu0 0.0
    %2356 = vmatpush1.xpose.msra.mxu0 0.0
    %2357 = vmatprep.subr.mxu0 0.0
    %2358 = vmatpush1.xpose.msra.mxu0 %v2325
    %2359 = vmatprep.subr.mxu0 0.0
    %2360 = vmatpush2.xpose.msra.mxu0 0.0
    %2361 = vmatprep.subr.mxu0 0.0
    %2362 = vmatpush2.xpose.msra.mxu0 0.0
    %2363 = vmatprep.subr.mxu0 0.0
    %2364 = vmatpush2.xpose.msra.mxu0 0.0
    %2365 = vmatprep.subr.mxu0 0.0
    %2366 = vmatpush2.xpose.msra.mxu0 0.0
    %2367 = vmatprep.subr.mxu0 0.0
    %2368 = vmatpush2.xpose.msra.mxu0 0.0
    %2369 = vmatprep.subr.mxu0 0.0
    %2370 = vmatpush2.xpose.msra.mxu0 0.0
    %2371 = vmatprep.subr.mxu0 0.0
    %2372 = vmatpush2.xpose.msra.mxu0 0.0
    %2373 = vmatprep.subr.mxu0 0.0
    %2374 = vmatpush2.xpose.msra.mxu0 0.0
    %2375 = vmatprep.subr.mxu0 0.0
    %2376 = vmatpush2.xpose.msra.mxu0 0.0
    %2377 = vmatprep.subr.mxu0 0.0
    %2378 = vmatpush2.xpose.msra.mxu0 0.0
    %2379 = vmatprep.subr.mxu0 0.0
    %2380 = vmatpush2.xpose.msra.mxu0 0.0
    %2381 = vmatprep.subr.mxu0 0.0
    %2382 = vmatpush2.xpose.msra.mxu0 0.0
    %2383 = vmatprep.subr.mxu0 0.0
    %2384 = vmatpush2.xpose.msra.mxu0 0.0
    %2385 = vmatprep.subr.mxu0 0.0
    %2386 = vmatpush2.xpose.msra.mxu0 0.0
    %2387 = vmatprep.subr.mxu0 0.0
    %2388 = vmatpush2.xpose.msra.mxu0 0.0
    %2389 = vmatprep.subr.mxu0 0.0
    %2390 = vmatpush2.xpose.msra.mxu0 0.0
    %2391 = vmatprep.mubr.f32.mxu0 0.0
    %2392 = vmatmul.mubr.f32.gmra.mxu0 %v2323
    %v2393 = vpop.f32.mrf.mxu0
    %v2394 = vadd.f32 0.0, %v2393
    %v2395 = vpop.f32.mrf.mxu0
    %2396 = vdwg.mxu0
    %2397 = vrot.lane.b32.xlu0 %v163, 112
    %v2398 = vpop.permute.xlu0 %2397
    %2399 = vrot.lane.b32.xlu0 %v163, 80
    %v2400 = vpop.permute.xlu0 %2399
    %v2401 = vsel %vm179, %v2398, 0
    %v2403 = vsel %vm179, %v2400, 0
    %2405 = vmatprep.subr.mxu0 0.0
    %2406 = vmatpush1.xpose.msra.mxu0 0.0
    %2407 = vmatprep.subr.mxu0 0.0
    %2408 = vmatpush1.xpose.msra.mxu0 0.0
    %2409 = vmatprep.subr.mxu0 0.0
    %2410 = vmatpush1.xpose.msra.mxu0 0.0
    %2411 = vmatprep.subr.mxu0 0.0
    %2412 = vmatpush1.xpose.msra.mxu0 0.0
    %2413 = vmatprep.subr.mxu0 0.0
    %2414 = vmatpush1.xpose.msra.mxu0 0.0
    %2415 = vmatprep.subr.mxu0 0.0
    %2416 = vmatpush1.xpose.msra.mxu0 0.0
    %2417 = vmatprep.subr.mxu0 0.0
    %2418 = vmatpush1.xpose.msra.mxu0 0.0
    %2419 = vmatprep.subr.mxu0 0.0
    %2420 = vmatpush1.xpose.msra.mxu0 0.0
    %2421 = vmatprep.subr.mxu0 0.0
    %2422 = vmatpush1.xpose.msra.mxu0 0.0
    %2423 = vmatprep.subr.mxu0 0.0
    %2424 = vmatpush1.xpose.msra.mxu0 0.0
    %2425 = vmatprep.subr.mxu0 0.0
    %2426 = vmatpush1.xpose.msra.mxu0 0.0
    %2427 = vmatprep.subr.mxu0 0.0
    %2428 = vmatpush1.xpose.msra.mxu0 0.0
    %2429 = vmatprep.subr.mxu0 0.0
    %2430 = vmatpush1.xpose.msra.mxu0 0.0
    %2431 = vmatprep.subr.mxu0 0.0
    %2432 = vmatpush1.xpose.msra.mxu0 0.0
    %2433 = vmatprep.subr.mxu0 0.0
    %2434 = vmatpush1.xpose.msra.mxu0 0.0
    %2435 = vmatprep.subr.mxu0 0.0
    %2436 = vmatpush1.xpose.msra.mxu0 %v2403
    %2437 = vmatprep.subr.mxu0 0.0
    %2438 = vmatpush2.xpose.msra.mxu0 0.0
    %2439 = vmatprep.subr.mxu0 0.0
    %2440 = vmatpush2.xpose.msra.mxu0 0.0
    %2441 = vmatprep.subr.mxu0 0.0
    %2442 = vmatpush2.xpose.msra.mxu0 0.0
    %2443 = vmatprep.subr.mxu0 0.0
    %2444 = vmatpush2.xpose.msra.mxu0 0.0
    %2445 = vmatprep.subr.mxu0 0.0
    %2446 = vmatpush2.xpose.msra.mxu0 0.0
    %2447 = vmatprep.subr.mxu0 0.0
    %2448 = vmatpush2.xpose.msra.mxu0 0.0
    %2449 = vmatprep.subr.mxu0 0.0
    %2450 = vmatpush2.xpose.msra.mxu0 0.0
    %2451 = vmatprep.subr.mxu0 0.0
    %2452 = vmatpush2.xpose.msra.mxu0 0.0
    %2453 = vmatprep.subr.mxu0 0.0
    %2454 = vmatpush2.xpose.msra.mxu0 0.0
    %2455 = vmatprep.subr.mxu0 0.0
    %2456 = vmatpush2.xpose.msra.mxu0 0.0
    %2457 = vmatprep.subr.mxu0 0.0
    %2458 = vmatpush2.xpose.msra.mxu0 0.0
    %2459 = vmatprep.subr.mxu0 0.0
    %2460 = vmatpush2.xpose.msra.mxu0 0.0
    %2461 = vmatprep.subr.mxu0 0.0
    %2462 = vmatpush2.xpose.msra.mxu0 0.0
    %2463 = vmatprep.subr.mxu0 0.0
    %2464 = vmatpush2.xpose.msra.mxu0 0.0
    %2465 = vmatprep.subr.mxu0 0.0
    %2466 = vmatpush2.xpose.msra.mxu0 0.0
    %2467 = vmatprep.subr.mxu0 0.0
    %2468 = vmatpush2.xpose.msra.mxu0 0.0
    %2469 = vmatprep.mubr.f32.mxu0 0.0
    %2470 = vmatmul.mubr.f32.gmra.mxu0 %v2401
    %v2471 = vpop.f32.mrf.mxu0
    %v2472 = vadd.f32 0.0, %v2471
    %v2473 = vpop.f32.mrf.mxu0
    %2474 = vdwg.mxu0
    %2475 = vrot.lane.b32.xlu0 %v168, 112
    %v2476 = vpop.permute.xlu0 %2475
    %2477 = vrot.lane.b32.xlu0 %v168, 80
    %v2478 = vpop.permute.xlu0 %2477
    %v2479 = vsel %vm179, %v2476, 0
    %v2481 = vsel %vm179, %v2478, 0
    %2483 = vmatprep.subr.mxu0 0.0
    %2484 = vmatpush1.xpose.msra.mxu0 0.0
    %2485 = vmatprep.subr.mxu0 0.0
    %2486 = vmatpush1.xpose.msra.mxu0 0.0
    %2487 = vmatprep.subr.mxu0 0.0
    %2488 = vmatpush1.xpose.msra.mxu0 0.0
    %2489 = vmatprep.subr.mxu0 0.0
    %2490 = vmatpush1.xpose.msra.mxu0 0.0
    %2491 = vmatprep.subr.mxu0 0.0
    %2492 = vmatpush1.xpose.msra.mxu0 0.0
    %2493 = vmatprep.subr.mxu0 0.0
    %2494 = vmatpush1.xpose.msra.mxu0 0.0
    %2495 = vmatprep.subr.mxu0 0.0
    %2496 = vmatpush1.xpose.msra.mxu0 0.0
    %2497 = vmatprep.subr.mxu0 0.0
    %2498 = vmatpush1.xpose.msra.mxu0 0.0
    %2499 = vmatprep.subr.mxu0 0.0
    %2500 = vmatpush1.xpose.msra.mxu0 0.0
    %2501 = vmatprep.subr.mxu0 0.0
    %2502 = vmatpush1.xpose.msra.mxu0 0.0
    %2503 = vmatprep.subr.mxu0 0.0
    %2504 = vmatpush1.xpose.msra.mxu0 0.0
    %2505 = vmatprep.subr.mxu0 0.0
    %2506 = vmatpush1.xpose.msra.mxu0 0.0
    %2507 = vmatprep.subr.mxu0 0.0
    %2508 = vmatpush1.xpose.msra.mxu0 0.0
    %2509 = vmatprep.subr.mxu0 0.0
    %2510 = vmatpush1.xpose.msra.mxu0 0.0
    %2511 = vmatprep.subr.mxu0 0.0
    %2512 = vmatpush1.xpose.msra.mxu0 0.0
    %2513 = vmatprep.subr.mxu0 0.0
    %2514 = vmatpush1.xpose.msra.mxu0 %v2481
    %2515 = vmatprep.subr.mxu0 0.0
    %2516 = vmatpush2.xpose.msra.mxu0 0.0
    %2517 = vmatprep.subr.mxu0 0.0
    %2518 = vmatpush2.xpose.msra.mxu0 0.0
    %2519 = vmatprep.subr.mxu0 0.0
    %2520 = vmatpush2.xpose.msra.mxu0 0.0
    %2521 = vmatprep.subr.mxu0 0.0
    %2522 = vmatpush2.xpose.msra.mxu0 0.0
    %2523 = vmatprep.subr.mxu0 0.0
    %2524 = vmatpush2.xpose.msra.mxu0 0.0
    %2525 = vmatprep.subr.mxu0 0.0
    %2526 = vmatpush2.xpose.msra.mxu0 0.0
    %2527 = vmatprep.subr.mxu0 0.0
    %2528 = vmatpush2.xpose.msra.mxu0 0.0
    %2529 = vmatprep.subr.mxu0 0.0
    %2530 = vmatpush2.xpose.msra.mxu0 0.0
    %2531 = vmatprep.subr.mxu0 0.0
    %2532 = vmatpush2.xpose.msra.mxu0 0.0
    %2533 = vmatprep.subr.mxu0 0.0
    %2534 = vmatpush2.xpose.msra.mxu0 0.0
    %2535 = vmatprep.subr.mxu0 0.0
    %2536 = vmatpush2.xpose.msra.mxu0 0.0
    %2537 = vmatprep.subr.mxu0 0.0
    %2538 = vmatpush2.xpose.msra.mxu0 0.0
    %2539 = vmatprep.subr.mxu0 0.0
    %2540 = vmatpush2.xpose.msra.mxu0 0.0
    %2541 = vmatprep.subr.mxu0 0.0
    %2542 = vmatpush2.xpose.msra.mxu0 0.0
    %2543 = vmatprep.subr.mxu0 0.0
    %2544 = vmatpush2.xpose.msra.mxu0 0.0
    %2545 = vmatprep.subr.mxu0 0.0
    %2546 = vmatpush2.xpose.msra.mxu0 0.0
    %2547 = vmatprep.mubr.f32.mxu0 0.0
    %2548 = vmatmul.mubr.f32.gmra.mxu0 %v2479
    %v2549 = vpop.f32.mrf.mxu0
    %v2550 = vadd.f32 0.0, %v2549
    %v2551 = vpop.f32.mrf.mxu0
    %2552 = vdwg.mxu0
    %2553 = vrot.lane.b32.xlu0 %v173, 112
    %v2554 = vpop.permute.xlu0 %2553
    %2555 = vrot.lane.b32.xlu0 %v173, 80
    %v2556 = vpop.permute.xlu0 %2555
    %v2557 = vsel %vm179, %v2554, 0
    %v2559 = vsel %vm179, %v2556, 0
    %2561 = vmatprep.subr.mxu0 0.0
    %2562 = vmatpush1.xpose.msra.mxu0 0.0
    %2563 = vmatprep.subr.mxu0 0.0
    %2564 = vmatpush1.xpose.msra.mxu0 0.0
    %2565 = vmatprep.subr.mxu0 0.0
    %2566 = vmatpush1.xpose.msra.mxu0 0.0
    %2567 = vmatprep.subr.mxu0 0.0
    %2568 = vmatpush1.xpose.msra.mxu0 0.0
    %2569 = vmatprep.subr.mxu0 0.0
    %2570 = vmatpush1.xpose.msra.mxu0 0.0
    %2571 = vmatprep.subr.mxu0 0.0
    %2572 = vmatpush1.xpose.msra.mxu0 0.0
    %2573 = vmatprep.subr.mxu0 0.0
    %2574 = vmatpush1.xpose.msra.mxu0 0.0
    %2575 = vmatprep.subr.mxu0 0.0
    %2576 = vmatpush1.xpose.msra.mxu0 0.0
    %2577 = vmatprep.subr.mxu0 0.0
    %2578 = vmatpush1.xpose.msra.mxu0 0.0
    %2579 = vmatprep.subr.mxu0 0.0
    %2580 = vmatpush1.xpose.msra.mxu0 0.0
    %2581 = vmatprep.subr.mxu0 0.0
    %2582 = vmatpush1.xpose.msra.mxu0 0.0
    %2583 = vmatprep.subr.mxu0 0.0
    %2584 = vmatpush1.xpose.msra.mxu0 0.0
    %2585 = vmatprep.subr.mxu0 0.0
    %2586 = vmatpush1.xpose.msra.mxu0 0.0
    %2587 = vmatprep.subr.mxu0 0.0
    %2588 = vmatpush1.xpose.msra.mxu0 0.0
    %2589 = vmatprep.subr.mxu0 0.0
    %2590 = vmatpush1.xpose.msra.mxu0 0.0
    %2591 = vmatprep.subr.mxu0 0.0
    %2592 = vmatpush1.xpose.msra.mxu0 %v2559
    %2593 = vmatprep.subr.mxu0 0.0
    %2594 = vmatpush2.xpose.msra.mxu0 0.0
    %2595 = vmatprep.subr.mxu0 0.0
    %2596 = vmatpush2.xpose.msra.mxu0 0.0
    %2597 = vmatprep.subr.mxu0 0.0
    %2598 = vmatpush2.xpose.msra.mxu0 0.0
    %2599 = vmatprep.subr.mxu0 0.0
    %2600 = vmatpush2.xpose.msra.mxu0 0.0
    %2601 = vmatprep.subr.mxu0 0.0
    %2602 = vmatpush2.xpose.msra.mxu0 0.0
    %2603 = vmatprep.subr.mxu0 0.0
    %2604 = vmatpush2.xpose.msra.mxu0 0.0
    %2605 = vmatprep.subr.mxu0 0.0
    %2606 = vmatpush2.xpose.msra.mxu0 0.0
    %2607 = vmatprep.subr.mxu0 0.0
    %2608 = vmatpush2.xpose.msra.mxu0 0.0
    %2609 = vmatprep.subr.mxu0 0.0
    %2610 = vmatpush2.xpose.msra.mxu0 0.0
    %2611 = vmatprep.subr.mxu0 0.0
    %2612 = vmatpush2.xpose.msra.mxu0 0.0
    %2613 = vmatprep.subr.mxu0 0.0
    %2614 = vmatpush2.xpose.msra.mxu0 0.0
    %2615 = vmatprep.subr.mxu0 0.0
    %2616 = vmatpush2.xpose.msra.mxu0 0.0
    %2617 = vmatprep.subr.mxu0 0.0
    %2618 = vmatpush2.xpose.msra.mxu0 0.0
    %2619 = vmatprep.subr.mxu0 0.0
    %2620 = vmatpush2.xpose.msra.mxu0 0.0
    %2621 = vmatprep.subr.mxu0 0.0
    %2622 = vmatpush2.xpose.msra.mxu0 0.0
    %2623 = vmatprep.subr.mxu0 0.0
    %2624 = vmatpush2.xpose.msra.mxu0 0.0
    %2625 = vmatprep.mubr.f32.mxu0 0.0
    %2626 = vmatmul.mubr.f32.gmra.mxu0 %v2557
    %v2627 = vpop.f32.mrf.mxu0
    %v2628 = vadd.f32 0.0, %v2627
    %v2629 = vpop.f32.mrf.mxu0
    %2630 = vdwg.mxu0
    %v2631 = vmul.f32 %v2238, 0.35355338
    %v2632 = vmul.f32 %v2316, 0.35355338
    %v2633 = vmul.f32 %v2394, 0.35355338
    %v2634 = vmul.f32 %v2472, 0.35355338
    %v2635 = vmul.f32 %v2550, 0.35355338
    %v2636 = vmul.f32 %v2628, 0.35355338
    %v2637 = vsel %vm179, %v2631, -inf
    %2638 = vmax.xlane.f32.xlu0 %v2637
    %v2639 = vpop.xlane.xlu0 %2638
    %v2640 = vsel %vm179, %v2632, -inf
    %2641 = vmax.xlane.f32.xlu0 %v2640
    %v2642 = vpop.xlane.xlu0 %2641
    %v2643 = vsel %vm179, %v2633, -inf
    %2644 = vmax.xlane.f32.xlu0 %v2643
    %v2645 = vpop.xlane.xlu0 %2644
    %v2646 = vsel %vm179, %v2634, -inf
    %2647 = vmax.xlane.f32.xlu0 %v2646
    %v2648 = vpop.xlane.xlu0 %2647
    %v2649 = vsel %vm179, %v2635, -inf
    %2650 = vmax.xlane.f32.xlu0 %v2649
    %v2651 = vpop.xlane.xlu0 %2650
    %v2652 = vsel %vm179, %v2636, -inf
    %2653 = vmax.xlane.f32.xlu0 %v2652
    %v2654 = vpop.xlane.xlu0 %2653
    %v2655 = vsub.f32 %v2631, %v2639
    %v2656 = vsub.f32 %v2632, %v2642
    %v2657 = vsub.f32 %v2633, %v2645
    %v2658 = vsub.f32 %v2634, %v2648
    %v2659 = vsub.f32 %v2635, %v2651
    %v2660 = vsub.f32 %v2636, %v2654
    %v2661 = vmul.f32 %v2655, 1.442695
    %v2662 = vpow.pop %v2661
    %v2663 = vmul.f32 %v2656, 1.442695
    %v2664 = vpow.pop %v2663
    %v2665 = vmul.f32 %v2657, 1.442695
    %v2666 = vpow.pop %v2665
    %v2667 = vmul.f32 %v2658, 1.442695
    %v2668 = vpow.pop %v2667
    %v2669 = vmul.f32 %v2659, 1.442695
    %v2670 = vpow.pop %v2669
    %v2671 = vmul.f32 %v2660, 1.442695
    %v2672 = vpow.pop %v2671
    %v2673 = vsel %vm179, %v2662, 0.0
    %2674 = vadd.xlane.f32.xlu0 %v2673
    %v2675 = vpop.xlane.xlu0 %2674
    %v2676 = vsel %vm179, %v2664, 0.0
    %2677 = vadd.xlane.f32.xlu0 %v2676
    %v2678 = vpop.xlane.xlu0 %2677
    %v2679 = vsel %vm179, %v2666, 0.0
    %2680 = vadd.xlane.f32.xlu0 %v2679
    %v2681 = vpop.xlane.xlu0 %2680
    %v2682 = vsel %vm179, %v2668, 0.0
    %2683 = vadd.xlane.f32.xlu0 %v2682
    %v2684 = vpop.xlane.xlu0 %2683
    %v2685 = vsel %vm179, %v2670, 0.0
    %2686 = vadd.xlane.f32.xlu0 %v2685
    %v2687 = vpop.xlane.xlu0 %2686
    %v2688 = vsel %vm179, %v2672, 0.0
    %2689 = vadd.xlane.f32.xlu0 %v2688
    %v2690 = vpop.xlane.xlu0 %2689
    %v2691 = vrcp.pop %v2675
    %v2692 = vrcp.pop %v2678
    %v2693 = vrcp.pop %v2681
    %v2694 = vrcp.pop %v2684
    %v2695 = vrcp.pop %v2687
    %v2696 = vrcp.pop %v2690
    %v2697 = vmul.f32 %v2662, %v2691
    %v2698 = vmul.f32 %v2664, %v2692
    %v2699 = vmul.f32 %v2666, %v2693
    %v2700 = vmul.f32 %v2668, %v2694
    %v2701 = vmul.f32 %v2670, %v2695
    %v2702 = vmul.f32 %v2672, %v2696
    %2703 = vrot.lane.b32.xlu0 %v148, 48
    %v2704 = vpop.permute.xlu0 %2703
    %v2707 = vsel %vm179, %v2697, 0
    %2709 = vmatprep.subr.mxu0 0.0
    %2710 = vmatpush1.msra.mxu0 0.0
    %2711 = vmatprep.subr.mxu0 0.0
    %2712 = vmatpush1.msra.mxu0 0.0
    %2713 = vmatprep.subr.mxu0 0.0
    %2714 = vmatpush1.msra.mxu0 0.0
    %2715 = vmatprep.subr.mxu0 0.0
    %2716 = vmatpush1.msra.mxu0 0.0
    %2717 = vmatprep.subr.mxu0 0.0
    %2718 = vmatpush1.msra.mxu0 0.0
    %2719 = vmatprep.subr.mxu0 0.0
    %2720 = vmatpush1.msra.mxu0 0.0
    %2721 = vmatprep.subr.mxu0 0.0
    %2722 = vmatpush1.msra.mxu0 0.0
    %2723 = vmatprep.subr.mxu0 0.0
    %2724 = vmatpush1.msra.mxu0 0.0
    %2725 = vmatprep.subr.mxu0 0.0
    %2726 = vmatpush1.msra.mxu0 0.0
    %2727 = vmatprep.subr.mxu0 0.0
    %2728 = vmatpush1.msra.mxu0 0.0
    %2729 = vmatprep.subr.mxu0 0.0
    %2730 = vmatpush1.msra.mxu0 0.0
    %2731 = vmatprep.subr.mxu0 0.0
    %2732 = vmatpush1.msra.mxu0 0.0
    %2733 = vmatprep.subr.mxu0 0.0
    %2734 = vmatpush1.msra.mxu0 0.0
    %2735 = vmatprep.subr.mxu0 0.0
    %2736 = vmatpush1.msra.mxu0 0.0
    %2737 = vmatprep.subr.mxu0 0.0
    %2738 = vmatpush1.msra.mxu0 0.0
    %2739 = vmatprep.subr.mxu0 0.0
    %2740 = vmatpush1.msra.mxu0 %v2704
    %2741 = vmatprep.subr.mxu0 0.0
    %2742 = vmatpush2.msra.mxu0 0.0
    %2743 = vmatprep.subr.mxu0 0.0
    %2744 = vmatpush2.msra.mxu0 0.0
    %2745 = vmatprep.subr.mxu0 0.0
    %2746 = vmatpush2.msra.mxu0 0.0
    %2747 = vmatprep.subr.mxu0 0.0
    %2748 = vmatpush2.msra.mxu0 0.0
    %2749 = vmatprep.subr.mxu0 0.0
    %2750 = vmatpush2.msra.mxu0 0.0
    %2751 = vmatprep.subr.mxu0 0.0
    %2752 = vmatpush2.msra.mxu0 0.0
    %2753 = vmatprep.subr.mxu0 0.0
    %2754 = vmatpush2.msra.mxu0 0.0
    %2755 = vmatprep.subr.mxu0 0.0
    %2756 = vmatpush2.msra.mxu0 0.0
    %2757 = vmatprep.subr.mxu0 0.0
    %2758 = vmatpush2.msra.mxu0 0.0
    %2759 = vmatprep.subr.mxu0 0.0
    %2760 = vmatpush2.msra.mxu0 0.0
    %2761 = vmatprep.subr.mxu0 0.0
    %2762 = vmatpush2.msra.mxu0 0.0
    %2763 = vmatprep.subr.mxu0 0.0
    %2764 = vmatpush2.msra.mxu0 0.0
    %2765 = vmatprep.subr.mxu0 0.0
    %2766 = vmatpush2.msra.mxu0 0.0
    %2767 = vmatprep.subr.mxu0 0.0
    %2768 = vmatpush2.msra.mxu0 0.0
    %2769 = vmatprep.subr.mxu0 0.0
    %2770 = vmatpush2.msra.mxu0 0.0
    %2771 = vmatprep.subr.mxu0 0.0
    %2772 = vmatpush2.msra.mxu0 0.0
    %2773 = vmatprep.mubr.f32.mxu0 0.0
    %2774 = vmatmul.mubr.f32.gmra.mxu0 %v2707
    %v2775 = vpop.f32.mrf.mxu0
    %v2776 = vadd.f32 0.0, %v2775
    %v2777 = vpop.f32.mrf.mxu0
    %2778 = vdwg.mxu0
    %2779 = vrot.lane.b32.xlu0 %v153, 48
    %v2780 = vpop.permute.xlu0 %2779
    %v2783 = vsel %vm179, %v2698, 0
    %2785 = vmatprep.subr.mxu0 0.0
    %2786 = vmatpush1.msra.mxu0 0.0
    %2787 = vmatprep.subr.mxu0 0.0
    %2788 = vmatpush1.msra.mxu0 0.0
    %2789 = vmatprep.subr.mxu0 0.0
    %2790 = vmatpush1.msra.mxu0 0.0
    %2791 = vmatprep.subr.mxu0 0.0
    %2792 = vmatpush1.msra.mxu0 0.0
    %2793 = vmatprep.subr.mxu0 0.0
    %2794 = vmatpush1.msra.mxu0 0.0
    %2795 = vmatprep.subr.mxu0 0.0
    %2796 = vmatpush1.msra.mxu0 0.0
    %2797 = vmatprep.subr.mxu0 0.0
    %2798 = vmatpush1.msra.mxu0 0.0
    %2799 = vmatprep.subr.mxu0 0.0
    %2800 = vmatpush1.msra.mxu0 0.0
    %2801 = vmatprep.subr.mxu0 0.0
    %2802 = vmatpush1.msra.mxu0 0.0
    %2803 = vmatprep.subr.mxu0 0.0
    %2804 = vmatpush1.msra.mxu0 0.0
    %2805 = vmatprep.subr.mxu0 0.0
    %2806 = vmatpush1.msra.mxu0 0.0
    %2807 = vmatprep.subr.mxu0 0.0
    %2808 = vmatpush1.msra.mxu0 0.0
    %2809 = vmatprep.subr.mxu0 0.0
    %2810 = vmatpush1.msra.mxu0 0.0
    %2811 = vmatprep.subr.mxu0 0.0
    %2812 = vmatpush1.msra.mxu0 0.0
    %2813 = vmatprep.subr.mxu0 0.0
    %2814 = vmatpush1.msra.mxu0 0.0
    %2815 = vmatprep.subr.mxu0 0.0
    %2816 = vmatpush1.msra.mxu0 %v2780
    %2817 = vmatprep.subr.mxu0 0.0
    %2818 = vmatpush2.msra.mxu0 0.0
    %2819 = vmatprep.subr.mxu0 0.0
    %2820 = vmatpush2.msra.mxu0 0.0
    %2821 = vmatprep.subr.mxu0 0.0
    %2822 = vmatpush2.msra.mxu0 0.0
    %2823 = vmatprep.subr.mxu0 0.0
    %2824 = vmatpush2.msra.mxu0 0.0
    %2825 = vmatprep.subr.mxu0 0.0
    %2826 = vmatpush2.msra.mxu0 0.0
    %2827 = vmatprep.subr.mxu0 0.0
    %2828 = vmatpush2.msra.mxu0 0.0
    %2829 = vmatprep.subr.mxu0 0.0
    %2830 = vmatpush2.msra.mxu0 0.0
    %2831 = vmatprep.subr.mxu0 0.0
    %2832 = vmatpush2.msra.mxu0 0.0
    %2833 = vmatprep.subr.mxu0 0.0
    %2834 = vmatpush2.msra.mxu0 0.0
    %2835 = vmatprep.subr.mxu0 0.0
    %2836 = vmatpush2.msra.mxu0 0.0
    %2837 = vmatprep.subr.mxu0 0.0
    %2838 = vmatpush2.msra.mxu0 0.0
    %2839 = vmatprep.subr.mxu0 0.0
    %2840 = vmatpush2.msra.mxu0 0.0
    %2841 = vmatprep.subr.mxu0 0.0
    %2842 = vmatpush2.msra.mxu0 0.0
    %2843 = vmatprep.subr.mxu0 0.0
    %2844 = vmatpush2.msra.mxu0 0.0
    %2845 = vmatprep.subr.mxu0 0.0
    %2846 = vmatpush2.msra.mxu0 0.0
    %2847 = vmatprep.subr.mxu0 0.0
    %2848 = vmatpush2.msra.mxu0 0.0
    %2849 = vmatprep.mubr.f32.mxu0 0.0
    %2850 = vmatmul.mubr.f32.gmra.mxu0 %v2783
    %v2851 = vpop.f32.mrf.mxu0
    %v2852 = vadd.f32 0.0, %v2851
    %v2853 = vpop.f32.mrf.mxu0
    %2854 = vdwg.mxu0
    %2855 = vrot.lane.b32.xlu0 %v158, 48
    %v2856 = vpop.permute.xlu0 %2855
    %v2859 = vsel %vm179, %v2699, 0
    %2861 = vmatprep.subr.mxu0 0.0
    %2862 = vmatpush1.msra.mxu0 0.0
    %2863 = vmatprep.subr.mxu0 0.0
    %2864 = vmatpush1.msra.mxu0 0.0
    %2865 = vmatprep.subr.mxu0 0.0
    %2866 = vmatpush1.msra.mxu0 0.0
    %2867 = vmatprep.subr.mxu0 0.0
    %2868 = vmatpush1.msra.mxu0 0.0
    %2869 = vmatprep.subr.mxu0 0.0
    %2870 = vmatpush1.msra.mxu0 0.0
    %2871 = vmatprep.subr.mxu0 0.0
    %2872 = vmatpush1.msra.mxu0 0.0
    %2873 = vmatprep.subr.mxu0 0.0
    %2874 = vmatpush1.msra.mxu0 0.0
    %2875 = vmatprep.subr.mxu0 0.0
    %2876 = vmatpush1.msra.mxu0 0.0
    %2877 = vmatprep.subr.mxu0 0.0
    %2878 = vmatpush1.msra.mxu0 0.0
    %2879 = vmatprep.subr.mxu0 0.0
    %2880 = vmatpush1.msra.mxu0 0.0
    %2881 = vmatprep.subr.mxu0 0.0
    %2882 = vmatpush1.msra.mxu0 0.0
    %2883 = vmatprep.subr.mxu0 0.0
    %2884 = vmatpush1.msra.mxu0 0.0
    %2885 = vmatprep.subr.mxu0 0.0
    %2886 = vmatpush1.msra.mxu0 0.0
    %2887 = vmatprep.subr.mxu0 0.0
    %2888 = vmatpush1.msra.mxu0 0.0
    %2889 = vmatprep.subr.mxu0 0.0
    %2890 = vmatpush1.msra.mxu0 0.0
    %2891 = vmatprep.subr.mxu0 0.0
    %2892 = vmatpush1.msra.mxu0 %v2856
    %2893 = vmatprep.subr.mxu0 0.0
    %2894 = vmatpush2.msra.mxu0 0.0
    %2895 = vmatprep.subr.mxu0 0.0
    %2896 = vmatpush2.msra.mxu0 0.0
    %2897 = vmatprep.subr.mxu0 0.0
    %2898 = vmatpush2.msra.mxu0 0.0
    %2899 = vmatprep.subr.mxu0 0.0
    %2900 = vmatpush2.msra.mxu0 0.0
    %2901 = vmatprep.subr.mxu0 0.0
    %2902 = vmatpush2.msra.mxu0 0.0
    %2903 = vmatprep.subr.mxu0 0.0
    %2904 = vmatpush2.msra.mxu0 0.0
    %2905 = vmatprep.subr.mxu0 0.0
    %2906 = vmatpush2.msra.mxu0 0.0
    %2907 = vmatprep.subr.mxu0 0.0
    %2908 = vmatpush2.msra.mxu0 0.0
    %2909 = vmatprep.subr.mxu0 0.0
    %2910 = vmatpush2.msra.mxu0 0.0
    %2911 = vmatprep.subr.mxu0 0.0
    %2912 = vmatpush2.msra.mxu0 0.0
    %2913 = vmatprep.subr.mxu0 0.0
    %2914 = vmatpush2.msra.mxu0 0.0
    %2915 = vmatprep.subr.mxu0 0.0
    %2916 = vmatpush2.msra.mxu0 0.0
    %2917 = vmatprep.subr.mxu0 0.0
    %2918 = vmatpush2.msra.mxu0 0.0
    %2919 = vmatprep.subr.mxu0 0.0
    %2920 = vmatpush2.msra.mxu0 0.0
    %2921 = vmatprep.subr.mxu0 0.0
    %2922 = vmatpush2.msra.mxu0 0.0
    %2923 = vmatprep.subr.mxu0 0.0
    %2924 = vmatpush2.msra.mxu0 0.0
    %2925 = vmatprep.mubr.f32.mxu0 0.0
    %2926 = vmatmul.mubr.f32.gmra.mxu0 %v2859
    %v2927 = vpop.f32.mrf.mxu0
    %v2928 = vadd.f32 0.0, %v2927
    %v2929 = vpop.f32.mrf.mxu0
    %2930 = vdwg.mxu0
    %2931 = vrot.lane.b32.xlu0 %v163, 48
    %v2932 = vpop.permute.xlu0 %2931
    %v2935 = vsel %vm179, %v2700, 0
    %2937 = vmatprep.subr.mxu0 0.0
    %2938 = vmatpush1.msra.mxu0 0.0
    %2939 = vmatprep.subr.mxu0 0.0
    %2940 = vmatpush1.msra.mxu0 0.0
    %2941 = vmatprep.subr.mxu0 0.0
    %2942 = vmatpush1.msra.mxu0 0.0
    %2943 = vmatprep.subr.mxu0 0.0
    %2944 = vmatpush1.msra.mxu0 0.0
    %2945 = vmatprep.subr.mxu0 0.0
    %2946 = vmatpush1.msra.mxu0 0.0
    %2947 = vmatprep.subr.mxu0 0.0
    %2948 = vmatpush1.msra.mxu0 0.0
    %2949 = vmatprep.subr.mxu0 0.0
    %2950 = vmatpush1.msra.mxu0 0.0
    %2951 = vmatprep.subr.mxu0 0.0
    %2952 = vmatpush1.msra.mxu0 0.0
    %2953 = vmatprep.subr.mxu0 0.0
    %2954 = vmatpush1.msra.mxu0 0.0
    %2955 = vmatprep.subr.mxu0 0.0
    %2956 = vmatpush1.msra.mxu0 0.0
    %2957 = vmatprep.subr.mxu0 0.0
    %2958 = vmatpush1.msra.mxu0 0.0
    %2959 = vmatprep.subr.mxu0 0.0
    %2960 = vmatpush1.msra.mxu0 0.0
    %2961 = vmatprep.subr.mxu0 0.0
    %2962 = vmatpush1.msra.mxu0 0.0
    %2963 = vmatprep.subr.mxu0 0.0
    %2964 = vmatpush1.msra.mxu0 0.0
    %2965 = vmatprep.subr.mxu0 0.0
    %2966 = vmatpush1.msra.mxu0 0.0
    %2967 = vmatprep.subr.mxu0 0.0
    %2968 = vmatpush1.msra.mxu0 %v2932
    %2969 = vmatprep.subr.mxu0 0.0
    %2970 = vmatpush2.msra.mxu0 0.0
    %2971 = vmatprep.subr.mxu0 0.0
    %2972 = vmatpush2.msra.mxu0 0.0
    %2973 = vmatprep.subr.mxu0 0.0
    %2974 = vmatpush2.msra.mxu0 0.0
    %2975 = vmatprep.subr.mxu0 0.0
    %2976 = vmatpush2.msra.mxu0 0.0
    %2977 = vmatprep.subr.mxu0 0.0
    %2978 = vmatpush2.msra.mxu0 0.0
    %2979 = vmatprep.subr.mxu0 0.0
    %2980 = vmatpush2.msra.mxu0 0.0
    %2981 = vmatprep.subr.mxu0 0.0
    %2982 = vmatpush2.msra.mxu0 0.0
    %2983 = vmatprep.subr.mxu0 0.0
    %2984 = vmatpush2.msra.mxu0 0.0
    %2985 = vmatprep.subr.mxu0 0.0
    %2986 = vmatpush2.msra.mxu0 0.0
    %2987 = vmatprep.subr.mxu0 0.0
    %2988 = vmatpush2.msra.mxu0 0.0
    %2989 = vmatprep.subr.mxu0 0.0
    %2990 = vmatpush2.msra.mxu0 0.0
    %2991 = vmatprep.subr.mxu0 0.0
    %2992 = vmatpush2.msra.mxu0 0.0
    %2993 = vmatprep.subr.mxu0 0.0
    %2994 = vmatpush2.msra.mxu0 0.0
    %2995 = vmatprep.subr.mxu0 0.0
    %2996 = vmatpush2.msra.mxu0 0.0
    %2997 = vmatprep.subr.mxu0 0.0
    %2998 = vmatpush2.msra.mxu0 0.0
    %2999 = vmatprep.subr.mxu0 0.0
    %3000 = vmatpush2.msra.mxu0 0.0
    %3001 = vmatprep.mubr.f32.mxu0 0.0
    %3002 = vmatmul.mubr.f32.gmra.mxu0 %v2935
    %v3003 = vpop.f32.mrf.mxu0
    %v3004 = vadd.f32 0.0, %v3003
    %v3005 = vpop.f32.mrf.mxu0
    %3006 = vdwg.mxu0
    %3007 = vrot.lane.b32.xlu0 %v168, 48
    %v3008 = vpop.permute.xlu0 %3007
    %v3011 = vsel %vm179, %v2701, 0
    %3013 = vmatprep.subr.mxu0 0.0
    %3014 = vmatpush1.msra.mxu0 0.0
    %3015 = vmatprep.subr.mxu0 0.0
    %3016 = vmatpush1.msra.mxu0 0.0
    %3017 = vmatprep.subr.mxu0 0.0
    %3018 = vmatpush1.msra.mxu0 0.0
    %3019 = vmatprep.subr.mxu0 0.0
    %3020 = vmatpush1.msra.mxu0 0.0
    %3021 = vmatprep.subr.mxu0 0.0
    %3022 = vmatpush1.msra.mxu0 0.0
    %3023 = vmatprep.subr.mxu0 0.0
    %3024 = vmatpush1.msra.mxu0 0.0
    %3025 = vmatprep.subr.mxu0 0.0
    %3026 = vmatpush1.msra.mxu0 0.0
    %3027 = vmatprep.subr.mxu0 0.0
    %3028 = vmatpush1.msra.mxu0 0.0
    %3029 = vmatprep.subr.mxu0 0.0
    %3030 = vmatpush1.msra.mxu0 0.0
    %3031 = vmatprep.subr.mxu0 0.0
    %3032 = vmatpush1.msra.mxu0 0.0
    %3033 = vmatprep.subr.mxu0 0.0
    %3034 = vmatpush1.msra.mxu0 0.0
    %3035 = vmatprep.subr.mxu0 0.0
    %3036 = vmatpush1.msra.mxu0 0.0
    %3037 = vmatprep.subr.mxu0 0.0
    %3038 = vmatpush1.msra.mxu0 0.0
    %3039 = vmatprep.subr.mxu0 0.0
    %3040 = vmatpush1.msra.mxu0 0.0
    %3041 = vmatprep.subr.mxu0 0.0
    %3042 = vmatpush1.msra.mxu0 0.0
    %3043 = vmatprep.subr.mxu0 0.0
    %3044 = vmatpush1.msra.mxu0 %v3008
    %3045 = vmatprep.subr.mxu0 0.0
    %3046 = vmatpush2.msra.mxu0 0.0
    %3047 = vmatprep.subr.mxu0 0.0
    %3048 = vmatpush2.msra.mxu0 0.0
    %3049 = vmatprep.subr.mxu0 0.0
    %3050 = vmatpush2.msra.mxu0 0.0
    %3051 = vmatprep.subr.mxu0 0.0
    %3052 = vmatpush2.msra.mxu0 0.0
    %3053 = vmatprep.subr.mxu0 0.0
    %3054 = vmatpush2.msra.mxu0 0.0
    %3055 = vmatprep.subr.mxu0 0.0
    %3056 = vmatpush2.msra.mxu0 0.0
    %3057 = vmatprep.subr.mxu0 0.0
    %3058 = vmatpush2.msra.mxu0 0.0
    %3059 = vmatprep.subr.mxu0 0.0
    %3060 = vmatpush2.msra.mxu0 0.0
    %3061 = vmatprep.subr.mxu0 0.0
    %3062 = vmatpush2.msra.mxu0 0.0
    %3063 = vmatprep.subr.mxu0 0.0
    %3064 = vmatpush2.msra.mxu0 0.0
    %3065 = vmatprep.subr.mxu0 0.0
    %3066 = vmatpush2.msra.mxu0 0.0
    %3067 = vmatprep.subr.mxu0 0.0
    %3068 = vmatpush2.msra.mxu0 0.0
    %3069 = vmatprep.subr.mxu0 0.0
    %3070 = vmatpush2.msra.mxu0 0.0
    %3071 = vmatprep.subr.mxu0 0.0
    %3072 = vmatpush2.msra.mxu0 0.0
    %3073 = vmatprep.subr.mxu0 0.0
    %3074 = vmatpush2.msra.mxu0 0.0
    %3075 = vmatprep.subr.mxu0 0.0
    %3076 = vmatpush2.msra.mxu0 0.0
    %3077 = vmatprep.mubr.f32.mxu0 0.0
    %3078 = vmatmul.mubr.f32.gmra.mxu0 %v3011
    %v3079 = vpop.f32.mrf.mxu0
    %v3080 = vadd.f32 0.0, %v3079
    %v3081 = vpop.f32.mrf.mxu0
    %3082 = vdwg.mxu0
    %3083 = vrot.lane.b32.xlu0 %v173, 48
    %v3084 = vpop.permute.xlu0 %3083
    %v3087 = vsel %vm179, %v2702, 0
    %3089 = vmatprep.subr.mxu0 0.0
    %3090 = vmatpush1.msra.mxu0 0.0
    %3091 = vmatprep.subr.mxu0 0.0
    %3092 = vmatpush1.msra.mxu0 0.0
    %3093 = vmatprep.subr.mxu0 0.0
    %3094 = vmatpush1.msra.mxu0 0.0
    %3095 = vmatprep.subr.mxu0 0.0
    %3096 = vmatpush1.msra.mxu0 0.0
    %3097 = vmatprep.subr.mxu0 0.0
    %3098 = vmatpush1.msra.mxu0 0.0
    %3099 = vmatprep.subr.mxu0 0.0
    %3100 = vmatpush1.msra.mxu0 0.0
    %3101 = vmatprep.subr.mxu0 0.0
    %3102 = vmatpush1.msra.mxu0 0.0
    %3103 = vmatprep.subr.mxu0 0.0
    %3104 = vmatpush1.msra.mxu0 0.0
    %3105 = vmatprep.subr.mxu0 0.0
    %3106 = vmatpush1.msra.mxu0 0.0
    %3107 = vmatprep.subr.mxu0 0.0
    %3108 = vmatpush1.msra.mxu0 0.0
    %3109 = vmatprep.subr.mxu0 0.0
    %3110 = vmatpush1.msra.mxu0 0.0
    %3111 = vmatprep.subr.mxu0 0.0
    %3112 = vmatpush1.msra.mxu0 0.0
    %3113 = vmatprep.subr.mxu0 0.0
    %3114 = vmatpush1.msra.mxu0 0.0
    %3115 = vmatprep.subr.mxu0 0.0
    %3116 = vmatpush1.msra.mxu0 0.0
    %3117 = vmatprep.subr.mxu0 0.0
    %3118 = vmatpush1.msra.mxu0 0.0
    %3119 = vmatprep.subr.mxu0 0.0
    %3120 = vmatpush1.msra.mxu0 %v3084
    %3121 = vmatprep.subr.mxu0 0.0
    %3122 = vmatpush2.msra.mxu0 0.0
    %3123 = vmatprep.subr.mxu0 0.0
    %3124 = vmatpush2.msra.mxu0 0.0
    %3125 = vmatprep.subr.mxu0 0.0
    %3126 = vmatpush2.msra.mxu0 0.0
    %3127 = vmatprep.subr.mxu0 0.0
    %3128 = vmatpush2.msra.mxu0 0.0
    %3129 = vmatprep.subr.mxu0 0.0
    %3130 = vmatpush2.msra.mxu0 0.0
    %3131 = vmatprep.subr.mxu0 0.0
    %3132 = vmatpush2.msra.mxu0 0.0
    %3133 = vmatprep.subr.mxu0 0.0
    %3134 = vmatpush2.msra.mxu0 0.0
    %3135 = vmatprep.subr.mxu0 0.0
    %3136 = vmatpush2.msra.mxu0 0.0
    %3137 = vmatprep.subr.mxu0 0.0
    %3138 = vmatpush2.msra.mxu0 0.0
    %3139 = vmatprep.subr.mxu0 0.0
    %3140 = vmatpush2.msra.mxu0 0.0
    %3141 = vmatprep.subr.mxu0 0.0
    %3142 = vmatpush2.msra.mxu0 0.0
    %3143 = vmatprep.subr.mxu0 0.0
    %3144 = vmatpush2.msra.mxu0 0.0
    %3145 = vmatprep.subr.mxu0 0.0
    %3146 = vmatpush2.msra.mxu0 0.0
    %3147 = vmatprep.subr.mxu0 0.0
    %3148 = vmatpush2.msra.mxu0 0.0
    %3149 = vmatprep.subr.mxu0 0.0
    %3150 = vmatpush2.msra.mxu0 0.0
    %3151 = vmatprep.subr.mxu0 0.0
    %3152 = vmatpush2.msra.mxu0 0.0
    %3153 = vmatprep.mubr.f32.mxu0 0.0
    %3154 = vmatmul.mubr.f32.gmra.mxu0 %v3087
    %v3155 = vpop.f32.mrf.mxu0
    %v3156 = vadd.f32 0.0, %v3155
    %v3157 = vpop.f32.mrf.mxu0
    %3158 = vdwg.mxu0
    %3159 = vrot.lane.b32.xlu0 %v148, 104
    %v3160 = vpop.permute.xlu0 %3159
    %3161 = vrot.lane.b32.xlu0 %v148, 72
    %v3162 = vpop.permute.xlu0 %3161
    %v3163 = vsel %vm179, %v3160, 0
    %v3165 = vsel %vm179, %v3162, 0
    %3167 = vmatprep.subr.mxu0 0.0
    %3168 = vmatpush1.xpose.msra.mxu0 0.0
    %3169 = vmatprep.subr.mxu0 0.0
    %3170 = vmatpush1.xpose.msra.mxu0 0.0
    %3171 = vmatprep.subr.mxu0 0.0
    %3172 = vmatpush1.xpose.msra.mxu0 0.0
    %3173 = vmatprep.subr.mxu0 0.0
    %3174 = vmatpush1.xpose.msra.mxu0 0.0
    %3175 = vmatprep.subr.mxu0 0.0
    %3176 = vmatpush1.xpose.msra.mxu0 0.0
    %3177 = vmatprep.subr.mxu0 0.0
    %3178 = vmatpush1.xpose.msra.mxu0 0.0
    %3179 = vmatprep.subr.mxu0 0.0
    %3180 = vmatpush1.xpose.msra.mxu0 0.0
    %3181 = vmatprep.subr.mxu0 0.0
    %3182 = vmatpush1.xpose.msra.mxu0 0.0
    %3183 = vmatprep.subr.mxu0 0.0
    %3184 = vmatpush1.xpose.msra.mxu0 0.0
    %3185 = vmatprep.subr.mxu0 0.0
    %3186 = vmatpush1.xpose.msra.mxu0 0.0
    %3187 = vmatprep.subr.mxu0 0.0
    %3188 = vmatpush1.xpose.msra.mxu0 0.0
    %3189 = vmatprep.subr.mxu0 0.0
    %3190 = vmatpush1.xpose.msra.mxu0 0.0
    %3191 = vmatprep.subr.mxu0 0.0
    %3192 = vmatpush1.xpose.msra.mxu0 0.0
    %3193 = vmatprep.subr.mxu0 0.0
    %3194 = vmatpush1.xpose.msra.mxu0 0.0
    %3195 = vmatprep.subr.mxu0 0.0
    %3196 = vmatpush1.xpose.msra.mxu0 0.0
    %3197 = vmatprep.subr.mxu0 0.0
    %3198 = vmatpush1.xpose.msra.mxu0 %v3165
    %3199 = vmatprep.subr.mxu0 0.0
    %3200 = vmatpush2.xpose.msra.mxu0 0.0
    %3201 = vmatprep.subr.mxu0 0.0
    %3202 = vmatpush2.xpose.msra.mxu0 0.0
    %3203 = vmatprep.subr.mxu0 0.0
    %3204 = vmatpush2.xpose.msra.mxu0 0.0
    %3205 = vmatprep.subr.mxu0 0.0
    %3206 = vmatpush2.xpose.msra.mxu0 0.0
    %3207 = vmatprep.subr.mxu0 0.0
    %3208 = vmatpush2.xpose.msra.mxu0 0.0
    %3209 = vmatprep.subr.mxu0 0.0
    %3210 = vmatpush2.xpose.msra.mxu0 0.0
    %3211 = vmatprep.subr.mxu0 0.0
    %3212 = vmatpush2.xpose.msra.mxu0 0.0
    %3213 = vmatprep.subr.mxu0 0.0
    %3214 = vmatpush2.xpose.msra.mxu0 0.0
    %3215 = vmatprep.subr.mxu0 0.0
    %3216 = vmatpush2.xpose.msra.mxu0 0.0
    %3217 = vmatprep.subr.mxu0 0.0
    %3218 = vmatpush2.xpose.msra.mxu0 0.0
    %3219 = vmatprep.subr.mxu0 0.0
    %3220 = vmatpush2.xpose.msra.mxu0 0.0
    %3221 = vmatprep.subr.mxu0 0.0
    %3222 = vmatpush2.xpose.msra.mxu0 0.0
    %3223 = vmatprep.subr.mxu0 0.0
    %3224 = vmatpush2.xpose.msra.mxu0 0.0
    %3225 = vmatprep.subr.mxu0 0.0
    %3226 = vmatpush2.xpose.msra.mxu0 0.0
    %3227 = vmatprep.subr.mxu0 0.0
    %3228 = vmatpush2.xpose.msra.mxu0 0.0
    %3229 = vmatprep.subr.mxu0 0.0
    %3230 = vmatpush2.xpose.msra.mxu0 0.0
    %3231 = vmatprep.mubr.f32.mxu0 0.0
    %3232 = vmatmul.mubr.f32.gmra.mxu0 %v3163
    %v3233 = vpop.f32.mrf.mxu0
    %v3234 = vadd.f32 0.0, %v3233
    %v3235 = vpop.f32.mrf.mxu0
    %3236 = vdwg.mxu0
    %3237 = vrot.lane.b32.xlu0 %v153, 104
    %v3238 = vpop.permute.xlu0 %3237
    %3239 = vrot.lane.b32.xlu0 %v153, 72
    %v3240 = vpop.permute.xlu0 %3239
    %v3241 = vsel %vm179, %v3238, 0
    %v3243 = vsel %vm179, %v3240, 0
    %3245 = vmatprep.subr.mxu0 0.0
    %3246 = vmatpush1.xpose.msra.mxu0 0.0
    %3247 = vmatprep.subr.mxu0 0.0
    %3248 = vmatpush1.xpose.msra.mxu0 0.0
    %3249 = vmatprep.subr.mxu0 0.0
    %3250 = vmatpush1.xpose.msra.mxu0 0.0
    %3251 = vmatprep.subr.mxu0 0.0
    %3252 = vmatpush1.xpose.msra.mxu0 0.0
    %3253 = vmatprep.subr.mxu0 0.0
    %3254 = vmatpush1.xpose.msra.mxu0 0.0
    %3255 = vmatprep.subr.mxu0 0.0
    %3256 = vmatpush1.xpose.msra.mxu0 0.0
    %3257 = vmatprep.subr.mxu0 0.0
    %3258 = vmatpush1.xpose.msra.mxu0 0.0
    %3259 = vmatprep.subr.mxu0 0.0
    %3260 = vmatpush1.xpose.msra.mxu0 0.0
    %3261 = vmatprep.subr.mxu0 0.0
    %3262 = vmatpush1.xpose.msra.mxu0 0.0
    %3263 = vmatprep.subr.mxu0 0.0
    %3264 = vmatpush1.xpose.msra.mxu0 0.0
    %3265 = vmatprep.subr.mxu0 0.0
    %3266 = vmatpush1.xpose.msra.mxu0 0.0
    %3267 = vmatprep.subr.mxu0 0.0
    %3268 = vmatpush1.xpose.msra.mxu0 0.0
    %3269 = vmatprep.subr.mxu0 0.0
    %3270 = vmatpush1.xpose.msra.mxu0 0.0
    %3271 = vmatprep.subr.mxu0 0.0
    %3272 = vmatpush1.xpose.msra.mxu0 0.0
    %3273 = vmatprep.subr.mxu0 0.0
    %3274 = vmatpush1.xpose.msra.mxu0 0.0
    %3275 = vmatprep.subr.mxu0 0.0
    %3276 = vmatpush1.xpose.msra.mxu0 %v3243
    %3277 = vmatprep.subr.mxu0 0.0
    %3278 = vmatpush2.xpose.msra.mxu0 0.0
    %3279 = vmatprep.subr.mxu0 0.0
    %3280 = vmatpush2.xpose.msra.mxu0 0.0
    %3281 = vmatprep.subr.mxu0 0.0
    %3282 = vmatpush2.xpose.msra.mxu0 0.0
    %3283 = vmatprep.subr.mxu0 0.0
    %3284 = vmatpush2.xpose.msra.mxu0 0.0
    %3285 = vmatprep.subr.mxu0 0.0
    %3286 = vmatpush2.xpose.msra.mxu0 0.0
    %3287 = vmatprep.subr.mxu0 0.0
    %3288 = vmatpush2.xpose.msra.mxu0 0.0
    %3289 = vmatprep.subr.mxu0 0.0
    %3290 = vmatpush2.xpose.msra.mxu0 0.0
    %3291 = vmatprep.subr.mxu0 0.0
    %3292 = vmatpush2.xpose.msra.mxu0 0.0
    %3293 = vmatprep.subr.mxu0 0.0
    %3294 = vmatpush2.xpose.msra.mxu0 0.0
    %3295 = vmatprep.subr.mxu0 0.0
    %3296 = vmatpush2.xpose.msra.mxu0 0.0
    %3297 = vmatprep.subr.mxu0 0.0
    %3298 = vmatpush2.xpose.msra.mxu0 0.0
    %3299 = vmatprep.subr.mxu0 0.0
    %3300 = vmatpush2.xpose.msra.mxu0 0.0
    %3301 = vmatprep.subr.mxu0 0.0
    %3302 = vmatpush2.xpose.msra.mxu0 0.0
    %3303 = vmatprep.subr.mxu0 0.0
    %3304 = vmatpush2.xpose.msra.mxu0 0.0
    %3305 = vmatprep.subr.mxu0 0.0
    %3306 = vmatpush2.xpose.msra.mxu0 0.0
    %3307 = vmatprep.subr.mxu0 0.0
    %3308 = vmatpush2.xpose.msra.mxu0 0.0
    %3309 = vmatprep.mubr.f32.mxu0 0.0
    %3310 = vmatmul.mubr.f32.gmra.mxu0 %v3241
    %v3311 = vpop.f32.mrf.mxu0
    %v3312 = vadd.f32 0.0, %v3311
    %v3313 = vpop.f32.mrf.mxu0
    %3314 = vdwg.mxu0
    %3315 = vrot.lane.b32.xlu0 %v158, 104
    %v3316 = vpop.permute.xlu0 %3315
    %3317 = vrot.lane.b32.xlu0 %v158, 72
    %v3318 = vpop.permute.xlu0 %3317
    %v3319 = vsel %vm179, %v3316, 0
    %v3321 = vsel %vm179, %v3318, 0
    %3323 = vmatprep.subr.mxu0 0.0
    %3324 = vmatpush1.xpose.msra.mxu0 0.0
    %3325 = vmatprep.subr.mxu0 0.0
    %3326 = vmatpush1.xpose.msra.mxu0 0.0
    %3327 = vmatprep.subr.mxu0 0.0
    %3328 = vmatpush1.xpose.msra.mxu0 0.0
    %3329 = vmatprep.subr.mxu0 0.0
    %3330 = vmatpush1.xpose.msra.mxu0 0.0
    %3331 = vmatprep.subr.mxu0 0.0
    %3332 = vmatpush1.xpose.msra.mxu0 0.0
    %3333 = vmatprep.subr.mxu0 0.0
    %3334 = vmatpush1.xpose.msra.mxu0 0.0
    %3335 = vmatprep.subr.mxu0 0.0
    %3336 = vmatpush1.xpose.msra.mxu0 0.0
    %3337 = vmatprep.subr.mxu0 0.0
    %3338 = vmatpush1.xpose.msra.mxu0 0.0
    %3339 = vmatprep.subr.mxu0 0.0
    %3340 = vmatpush1.xpose.msra.mxu0 0.0
    %3341 = vmatprep.subr.mxu0 0.0
    %3342 = vmatpush1.xpose.msra.mxu0 0.0
    %3343 = vmatprep.subr.mxu0 0.0
    %3344 = vmatpush1.xpose.msra.mxu0 0.0
    %3345 = vmatprep.subr.mxu0 0.0
    %3346 = vmatpush1.xpose.msra.mxu0 0.0
    %3347 = vmatprep.subr.mxu0 0.0
    %3348 = vmatpush1.xpose.msra.mxu0 0.0
    %3349 = vmatprep.subr.mxu0 0.0
    %3350 = vmatpush1.xpose.msra.mxu0 0.0
    %3351 = vmatprep.subr.mxu0 0.0
    %3352 = vmatpush1.xpose.msra.mxu0 0.0
    %3353 = vmatprep.subr.mxu0 0.0
    %3354 = vmatpush1.xpose.msra.mxu0 %v3321
    %3355 = vmatprep.subr.mxu0 0.0
    %3356 = vmatpush2.xpose.msra.mxu0 0.0
    %3357 = vmatprep.subr.mxu0 0.0
    %3358 = vmatpush2.xpose.msra.mxu0 0.0
    %3359 = vmatprep.subr.mxu0 0.0
    %3360 = vmatpush2.xpose.msra.mxu0 0.0
    %3361 = vmatprep.subr.mxu0 0.0
    %3362 = vmatpush2.xpose.msra.mxu0 0.0
    %3363 = vmatprep.subr.mxu0 0.0
    %3364 = vmatpush2.xpose.msra.mxu0 0.0
    %3365 = vmatprep.subr.mxu0 0.0
    %3366 = vmatpush2.xpose.msra.mxu0 0.0
    %3367 = vmatprep.subr.mxu0 0.0
    %3368 = vmatpush2.xpose.msra.mxu0 0.0
    %3369 = vmatprep.subr.mxu0 0.0
    %3370 = vmatpush2.xpose.msra.mxu0 0.0
    %3371 = vmatprep.subr.mxu0 0.0
    %3372 = vmatpush2.xpose.msra.mxu0 0.0
    %3373 = vmatprep.subr.mxu0 0.0
    %3374 = vmatpush2.xpose.msra.mxu0 0.0
    %3375 = vmatprep.subr.mxu0 0.0
    %3376 = vmatpush2.xpose.msra.mxu0 0.0
    %3377 = vmatprep.subr.mxu0 0.0
    %3378 = vmatpush2.xpose.msra.mxu0 0.0
    %3379 = vmatprep.subr.mxu0 0.0
    %3380 = vmatpush2.xpose.msra.mxu0 0.0
    %3381 = vmatprep.subr.mxu0 0.0
    %3382 = vmatpush2.xpose.msra.mxu0 0.0
    %3383 = vmatprep.subr.mxu0 0.0
    %3384 = vmatpush2.xpose.msra.mxu0 0.0
    %3385 = vmatprep.subr.mxu0 0.0
    %3386 = vmatpush2.xpose.msra.mxu0 0.0
    %3387 = vmatprep.mubr.f32.mxu0 0.0
    %3388 = vmatmul.mubr.f32.gmra.mxu0 %v3319
    %v3389 = vpop.f32.mrf.mxu0
    %v3390 = vadd.f32 0.0, %v3389
    %v3391 = vpop.f32.mrf.mxu0
    %3392 = vdwg.mxu0
    %3393 = vrot.lane.b32.xlu0 %v163, 104
    %v3394 = vpop.permute.xlu0 %3393
    %3395 = vrot.lane.b32.xlu0 %v163, 72
    %v3396 = vpop.permute.xlu0 %3395
    %v3397 = vsel %vm179, %v3394, 0
    %v3399 = vsel %vm179, %v3396, 0
    %3401 = vmatprep.subr.mxu0 0.0
    %3402 = vmatpush1.xpose.msra.mxu0 0.0
    %3403 = vmatprep.subr.mxu0 0.0
    %3404 = vmatpush1.xpose.msra.mxu0 0.0
    %3405 = vmatprep.subr.mxu0 0.0
    %3406 = vmatpush1.xpose.msra.mxu0 0.0
    %3407 = vmatprep.subr.mxu0 0.0
    %3408 = vmatpush1.xpose.msra.mxu0 0.0
    %3409 = vmatprep.subr.mxu0 0.0
    %3410 = vmatpush1.xpose.msra.mxu0 0.0
    %3411 = vmatprep.subr.mxu0 0.0
    %3412 = vmatpush1.xpose.msra.mxu0 0.0
    %3413 = vmatprep.subr.mxu0 0.0
    %3414 = vmatpush1.xpose.msra.mxu0 0.0
    %3415 = vmatprep.subr.mxu0 0.0
    %3416 = vmatpush1.xpose.msra.mxu0 0.0
    %3417 = vmatprep.subr.mxu0 0.0
    %3418 = vmatpush1.xpose.msra.mxu0 0.0
    %3419 = vmatprep.subr.mxu0 0.0
    %3420 = vmatpush1.xpose.msra.mxu0 0.0
    %3421 = vmatprep.subr.mxu0 0.0
    %3422 = vmatpush1.xpose.msra.mxu0 0.0
    %3423 = vmatprep.subr.mxu0 0.0
    %3424 = vmatpush1.xpose.msra.mxu0 0.0
    %3425 = vmatprep.subr.mxu0 0.0
    %3426 = vmatpush1.xpose.msra.mxu0 0.0
    %3427 = vmatprep.subr.mxu0 0.0
    %3428 = vmatpush1.xpose.msra.mxu0 0.0
    %3429 = vmatprep.subr.mxu0 0.0
    %3430 = vmatpush1.xpose.msra.mxu0 0.0
    %3431 = vmatprep.subr.mxu0 0.0
    %3432 = vmatpush1.xpose.msra.mxu0 %v3399
    %3433 = vmatprep.subr.mxu0 0.0
    %3434 = vmatpush2.xpose.msra.mxu0 0.0
    %3435 = vmatprep.subr.mxu0 0.0
    %3436 = vmatpush2.xpose.msra.mxu0 0.0
    %3437 = vmatprep.subr.mxu0 0.0
    %3438 = vmatpush2.xpose.msra.mxu0 0.0
    %3439 = vmatprep.subr.mxu0 0.0
    %3440 = vmatpush2.xpose.msra.mxu0 0.0
    %3441 = vmatprep.subr.mxu0 0.0
    %3442 = vmatpush2.xpose.msra.mxu0 0.0
    %3443 = vmatprep.subr.mxu0 0.0
    %3444 = vmatpush2.xpose.msra.mxu0 0.0
    %3445 = vmatprep.subr.mxu0 0.0
    %3446 = vmatpush2.xpose.msra.mxu0 0.0
    %3447 = vmatprep.subr.mxu0 0.0
    %3448 = vmatpush2.xpose.msra.mxu0 0.0
    %3449 = vmatprep.subr.mxu0 0.0
    %3450 = vmatpush2.xpose.msra.mxu0 0.0
    %3451 = vmatprep.subr.mxu0 0.0
    %3452 = vmatpush2.xpose.msra.mxu0 0.0
    %3453 = vmatprep.subr.mxu0 0.0
    %3454 = vmatpush2.xpose.msra.mxu0 0.0
    %3455 = vmatprep.subr.mxu0 0.0
    %3456 = vmatpush2.xpose.msra.mxu0 0.0
    %3457 = vmatprep.subr.mxu0 0.0
    %3458 = vmatpush2.xpose.msra.mxu0 0.0
    %3459 = vmatprep.subr.mxu0 0.0
    %3460 = vmatpush2.xpose.msra.mxu0 0.0
    %3461 = vmatprep.subr.mxu0 0.0
    %3462 = vmatpush2.xpose.msra.mxu0 0.0
    %3463 = vmatprep.subr.mxu0 0.0
    %3464 = vmatpush2.xpose.msra.mxu0 0.0
    %3465 = vmatprep.mubr.f32.mxu0 0.0
    %3466 = vmatmul.mubr.f32.gmra.mxu0 %v3397
    %v3467 = vpop.f32.mrf.mxu0
    %v3468 = vadd.f32 0.0, %v3467
    %v3469 = vpop.f32.mrf.mxu0
    %3470 = vdwg.mxu0
    %3471 = vrot.lane.b32.xlu0 %v168, 104
    %v3472 = vpop.permute.xlu0 %3471
    %3473 = vrot.lane.b32.xlu0 %v168, 72
    %v3474 = vpop.permute.xlu0 %3473
    %v3475 = vsel %vm179, %v3472, 0
    %v3477 = vsel %vm179, %v3474, 0
    %3479 = vmatprep.subr.mxu0 0.0
    %3480 = vmatpush1.xpose.msra.mxu0 0.0
    %3481 = vmatprep.subr.mxu0 0.0
    %3482 = vmatpush1.xpose.msra.mxu0 0.0
    %3483 = vmatprep.subr.mxu0 0.0
    %3484 = vmatpush1.xpose.msra.mxu0 0.0
    %3485 = vmatprep.subr.mxu0 0.0
    %3486 = vmatpush1.xpose.msra.mxu0 0.0
    %3487 = vmatprep.subr.mxu0 0.0
    %3488 = vmatpush1.xpose.msra.mxu0 0.0
    %3489 = vmatprep.subr.mxu0 0.0
    %3490 = vmatpush1.xpose.msra.mxu0 0.0
    %3491 = vmatprep.subr.mxu0 0.0
    %3492 = vmatpush1.xpose.msra.mxu0 0.0
    %3493 = vmatprep.subr.mxu0 0.0
    %3494 = vmatpush1.xpose.msra.mxu0 0.0
    %3495 = vmatprep.subr.mxu0 0.0
    %3496 = vmatpush1.xpose.msra.mxu0 0.0
    %3497 = vmatprep.subr.mxu0 0.0
    %3498 = vmatpush1.xpose.msra.mxu0 0.0
    %3499 = vmatprep.subr.mxu0 0.0
    %3500 = vmatpush1.xpose.msra.mxu0 0.0
    %3501 = vmatprep.subr.mxu0 0.0
    %3502 = vmatpush1.xpose.msra.mxu0 0.0
    %3503 = vmatprep.subr.mxu0 0.0
    %3504 = vmatpush1.xpose.msra.mxu0 0.0
    %3505 = vmatprep.subr.mxu0 0.0
    %3506 = vmatpush1.xpose.msra.mxu0 0.0
    %3507 = vmatprep.subr.mxu0 0.0
    %3508 = vmatpush1.xpose.msra.mxu0 0.0
    %3509 = vmatprep.subr.mxu0 0.0
    %3510 = vmatpush1.xpose.msra.mxu0 %v3477
    %3511 = vmatprep.subr.mxu0 0.0
    %3512 = vmatpush2.xpose.msra.mxu0 0.0
    %3513 = vmatprep.subr.mxu0 0.0
    %3514 = vmatpush2.xpose.msra.mxu0 0.0
    %3515 = vmatprep.subr.mxu0 0.0
    %3516 = vmatpush2.xpose.msra.mxu0 0.0
    %3517 = vmatprep.subr.mxu0 0.0
    %3518 = vmatpush2.xpose.msra.mxu0 0.0
    %3519 = vmatprep.subr.mxu0 0.0
    %3520 = vmatpush2.xpose.msra.mxu0 0.0
    %3521 = vmatprep.subr.mxu0 0.0
    %3522 = vmatpush2.xpose.msra.mxu0 0.0
    %3523 = vmatprep.subr.mxu0 0.0
    %3524 = vmatpush2.xpose.msra.mxu0 0.0
    %3525 = vmatprep.subr.mxu0 0.0
    %3526 = vmatpush2.xpose.msra.mxu0 0.0
    %3527 = vmatprep.subr.mxu0 0.0
    %3528 = vmatpush2.xpose.msra.mxu0 0.0
    %3529 = vmatprep.subr.mxu0 0.0
    %3530 = vmatpush2.xpose.msra.mxu0 0.0
    %3531 = vmatprep.subr.mxu0 0.0
    %3532 = vmatpush2.xpose.msra.mxu0 0.0
    %3533 = vmatprep.subr.mxu0 0.0
    %3534 = vmatpush2.xpose.msra.mxu0 0.0
    %3535 = vmatprep.subr.mxu0 0.0
    %3536 = vmatpush2.xpose.msra.mxu0 0.0
    %3537 = vmatprep.subr.mxu0 0.0
    %3538 = vmatpush2.xpose.msra.mxu0 0.0
    %3539 = vmatprep.subr.mxu0 0.0
    %3540 = vmatpush2.xpose.msra.mxu0 0.0
    %3541 = vmatprep.subr.mxu0 0.0
    %3542 = vmatpush2.xpose.msra.mxu0 0.0
    %3543 = vmatprep.mubr.f32.mxu0 0.0
    %3544 = vmatmul.mubr.f32.gmra.mxu0 %v3475
    %v3545 = vpop.f32.mrf.mxu0
    %v3546 = vadd.f32 0.0, %v3545
    %v3547 = vpop.f32.mrf.mxu0
    %3548 = vdwg.mxu0
    %3549 = vrot.lane.b32.xlu0 %v173, 104
    %v3550 = vpop.permute.xlu0 %3549
    %3551 = vrot.lane.b32.xlu0 %v173, 72
    %v3552 = vpop.permute.xlu0 %3551
    %v3553 = vsel %vm179, %v3550, 0
    %v3555 = vsel %vm179, %v3552, 0
    %3557 = vmatprep.subr.mxu0 0.0
    %3558 = vmatpush1.xpose.msra.mxu0 0.0
    %3559 = vmatprep.subr.mxu0 0.0
    %3560 = vmatpush1.xpose.msra.mxu0 0.0
    %3561 = vmatprep.subr.mxu0 0.0
    %3562 = vmatpush1.xpose.msra.mxu0 0.0
    %3563 = vmatprep.subr.mxu0 0.0
    %3564 = vmatpush1.xpose.msra.mxu0 0.0
    %3565 = vmatprep.subr.mxu0 0.0
    %3566 = vmatpush1.xpose.msra.mxu0 0.0
    %3567 = vmatprep.subr.mxu0 0.0
    %3568 = vmatpush1.xpose.msra.mxu0 0.0
    %3569 = vmatprep.subr.mxu0 0.0
    %3570 = vmatpush1.xpose.msra.mxu0 0.0
    %3571 = vmatprep.subr.mxu0 0.0
    %3572 = vmatpush1.xpose.msra.mxu0 0.0
    %3573 = vmatprep.subr.mxu0 0.0
    %3574 = vmatpush1.xpose.msra.mxu0 0.0
    %3575 = vmatprep.subr.mxu0 0.0
    %3576 = vmatpush1.xpose.msra.mxu0 0.0
    %3577 = vmatprep.subr.mxu0 0.0
    %3578 = vmatpush1.xpose.msra.mxu0 0.0
    %3579 = vmatprep.subr.mxu0 0.0
    %3580 = vmatpush1.xpose.msra.mxu0 0.0
    %3581 = vmatprep.subr.mxu0 0.0
    %3582 = vmatpush1.xpose.msra.mxu0 0.0
    %3583 = vmatprep.subr.mxu0 0.0
    %3584 = vmatpush1.xpose.msra.mxu0 0.0
    %3585 = vmatprep.subr.mxu0 0.0
    %3586 = vmatpush1.xpose.msra.mxu0 0.0
    %3587 = vmatprep.subr.mxu0 0.0
    %3588 = vmatpush1.xpose.msra.mxu0 %v3555
    %3589 = vmatprep.subr.mxu0 0.0
    %3590 = vmatpush2.xpose.msra.mxu0 0.0
    %3591 = vmatprep.subr.mxu0 0.0
    %3592 = vmatpush2.xpose.msra.mxu0 0.0
    %3593 = vmatprep.subr.mxu0 0.0
    %3594 = vmatpush2.xpose.msra.mxu0 0.0
    %3595 = vmatprep.subr.mxu0 0.0
    %3596 = vmatpush2.xpose.msra.mxu0 0.0
    %3597 = vmatprep.subr.mxu0 0.0
    %3598 = vmatpush2.xpose.msra.mxu0 0.0
    %3599 = vmatprep.subr.mxu0 0.0
    %3600 = vmatpush2.xpose.msra.mxu0 0.0
    %3601 = vmatprep.subr.mxu0 0.0
    %3602 = vmatpush2.xpose.msra.mxu0 0.0
    %3603 = vmatprep.subr.mxu0 0.0
    %3604 = vmatpush2.xpose.msra.mxu0 0.0
    %3605 = vmatprep.subr.mxu0 0.0
    %3606 = vmatpush2.xpose.msra.mxu0 0.0
    %3607 = vmatprep.subr.mxu0 0.0
    %3608 = vmatpush2.xpose.msra.mxu0 0.0
    %3609 = vmatprep.subr.mxu0 0.0
    %3610 = vmatpush2.xpose.msra.mxu0 0.0
    %3611 = vmatprep.subr.mxu0 0.0
    %3612 = vmatpush2.xpose.msra.mxu0 0.0
    %3613 = vmatprep.subr.mxu0 0.0
    %3614 = vmatpush2.xpose.msra.mxu0 0.0
    %3615 = vmatprep.subr.mxu0 0.0
    %3616 = vmatpush2.xpose.msra.mxu0 0.0
    %3617 = vmatprep.subr.mxu0 0.0
    %3618 = vmatpush2.xpose.msra.mxu0 0.0
    %3619 = vmatprep.subr.mxu0 0.0
    %3620 = vmatpush2.xpose.msra.mxu0 0.0
    %3621 = vmatprep.mubr.f32.mxu0 0.0
    %3622 = vmatmul.mubr.f32.gmra.mxu0 %v3553
    %v3623 = vpop.f32.mrf.mxu0
    %v3624 = vadd.f32 0.0, %v3623
    %v3625 = vpop.f32.mrf.mxu0
    %3626 = vdwg.mxu0
    %v3627 = vmul.f32 %v3234, 0.35355338
    %v3628 = vmul.f32 %v3312, 0.35355338
    %v3629 = vmul.f32 %v3390, 0.35355338
    %v3630 = vmul.f32 %v3468, 0.35355338
    %v3631 = vmul.f32 %v3546, 0.35355338
    %v3632 = vmul.f32 %v3624, 0.35355338
    %v3633 = vsel %vm179, %v3627, -inf
    %3634 = vmax.xlane.f32.xlu0 %v3633
    %v3635 = vpop.xlane.xlu0 %3634
    %v3636 = vsel %vm179, %v3628, -inf
    %3637 = vmax.xlane.f32.xlu0 %v3636
    %v3638 = vpop.xlane.xlu0 %3637
    %v3639 = vsel %vm179, %v3629, -inf
    %3640 = vmax.xlane.f32.xlu0 %v3639
    %v3641 = vpop.xlane.xlu0 %3640
    %v3642 = vsel %vm179, %v3630, -inf
    %3643 = vmax.xlane.f32.xlu0 %v3642
    %v3644 = vpop.xlane.xlu0 %3643
    %v3645 = vsel %vm179, %v3631, -inf
    %3646 = vmax.xlane.f32.xlu0 %v3645
    %v3647 = vpop.xlane.xlu0 %3646
    %v3648 = vsel %vm179, %v3632, -inf
    %3649 = vmax.xlane.f32.xlu0 %v3648
    %v3650 = vpop.xlane.xlu0 %3649
    %v3651 = vsub.f32 %v3627, %v3635
    %v3652 = vsub.f32 %v3628, %v3638
    %v3653 = vsub.f32 %v3629, %v3641
    %v3654 = vsub.f32 %v3630, %v3644
    %v3655 = vsub.f32 %v3631, %v3647
    %v3656 = vsub.f32 %v3632, %v3650
    %v3657 = vmul.f32 %v3651, 1.442695
    %v3658 = vpow.pop %v3657
    %v3659 = vmul.f32 %v3652, 1.442695
    %v3660 = vpow.pop %v3659
    %v3661 = vmul.f32 %v3653, 1.442695
    %v3662 = vpow.pop %v3661
    %v3663 = vmul.f32 %v3654, 1.442695
    %v3664 = vpow.pop %v3663
    %v3665 = vmul.f32 %v3655, 1.442695
    %v3666 = vpow.pop %v3665
    %v3667 = vmul.f32 %v3656, 1.442695
    %v3668 = vpow.pop %v3667
    %v3669 = vsel %vm179, %v3658, 0.0
    %3670 = vadd.xlane.f32.xlu0 %v3669
    %v3671 = vpop.xlane.xlu0 %3670
    %v3672 = vsel %vm179, %v3660, 0.0
    %3673 = vadd.xlane.f32.xlu0 %v3672
    %v3674 = vpop.xlane.xlu0 %3673
    %v3675 = vsel %vm179, %v3662, 0.0
    %3676 = vadd.xlane.f32.xlu0 %v3675
    %v3677 = vpop.xlane.xlu0 %3676
    %v3678 = vsel %vm179, %v3664, 0.0
    %3679 = vadd.xlane.f32.xlu0 %v3678
    %v3680 = vpop.xlane.xlu0 %3679
    %v3681 = vsel %vm179, %v3666, 0.0
    %3682 = vadd.xlane.f32.xlu0 %v3681
    %v3683 = vpop.xlane.xlu0 %3682
    %v3684 = vsel %vm179, %v3668, 0.0
    %3685 = vadd.xlane.f32.xlu0 %v3684
    %v3686 = vpop.xlane.xlu0 %3685
    %v3687 = vrcp.pop %v3671
    %v3688 = vrcp.pop %v3674
    %v3689 = vrcp.pop %v3677
    %v3690 = vrcp.pop %v3680
    %v3691 = vrcp.pop %v3683
    %v3692 = vrcp.pop %v3686
    %v3693 = vmul.f32 %v3658, %v3687
    %v3694 = vmul.f32 %v3660, %v3688
    %v3695 = vmul.f32 %v3662, %v3689
    %v3696 = vmul.f32 %v3664, %v3690
    %v3697 = vmul.f32 %v3666, %v3691
    %v3698 = vmul.f32 %v3668, %v3692
    %3699 = vrot.lane.b32.xlu0 %v148, 40
    %v3700 = vpop.permute.xlu0 %3699
    %v3703 = vsel %vm179, %v3693, 0
    %3705 = vmatprep.subr.mxu0 0.0
    %3706 = vmatpush1.msra.mxu0 0.0
    %3707 = vmatprep.subr.mxu0 0.0
    %3708 = vmatpush1.msra.mxu0 0.0
    %3709 = vmatprep.subr.mxu0 0.0
    %3710 = vmatpush1.msra.mxu0 0.0
    %3711 = vmatprep.subr.mxu0 0.0
    %3712 = vmatpush1.msra.mxu0 0.0
    %3713 = vmatprep.subr.mxu0 0.0
    %3714 = vmatpush1.msra.mxu0 0.0
    %3715 = vmatprep.subr.mxu0 0.0
    %3716 = vmatpush1.msra.mxu0 0.0
    %3717 = vmatprep.subr.mxu0 0.0
    %3718 = vmatpush1.msra.mxu0 0.0
    %3719 = vmatprep.subr.mxu0 0.0
    %3720 = vmatpush1.msra.mxu0 0.0
    %3721 = vmatprep.subr.mxu0 0.0
    %3722 = vmatpush1.msra.mxu0 0.0
    %3723 = vmatprep.subr.mxu0 0.0
    %3724 = vmatpush1.msra.mxu0 0.0
    %3725 = vmatprep.subr.mxu0 0.0
    %3726 = vmatpush1.msra.mxu0 0.0
    %3727 = vmatprep.subr.mxu0 0.0
    %3728 = vmatpush1.msra.mxu0 0.0
    %3729 = vmatprep.subr.mxu0 0.0
    %3730 = vmatpush1.msra.mxu0 0.0
    %3731 = vmatprep.subr.mxu0 0.0
    %3732 = vmatpush1.msra.mxu0 0.0
    %3733 = vmatprep.subr.mxu0 0.0
    %3734 = vmatpush1.msra.mxu0 0.0
    %3735 = vmatprep.subr.mxu0 0.0
    %3736 = vmatpush1.msra.mxu0 %v3700
    %3737 = vmatprep.subr.mxu0 0.0
    %3738 = vmatpush2.msra.mxu0 0.0
    %3739 = vmatprep.subr.mxu0 0.0
    %3740 = vmatpush2.msra.mxu0 0.0
    %3741 = vmatprep.subr.mxu0 0.0
    %3742 = vmatpush2.msra.mxu0 0.0
    %3743 = vmatprep.subr.mxu0 0.0
    %3744 = vmatpush2.msra.mxu0 0.0
    %3745 = vmatprep.subr.mxu0 0.0
    %3746 = vmatpush2.msra.mxu0 0.0
    %3747 = vmatprep.subr.mxu0 0.0
    %3748 = vmatpush2.msra.mxu0 0.0
    %3749 = vmatprep.subr.mxu0 0.0
    %3750 = vmatpush2.msra.mxu0 0.0
    %3751 = vmatprep.subr.mxu0 0.0
    %3752 = vmatpush2.msra.mxu0 0.0
    %3753 = vmatprep.subr.mxu0 0.0
    %3754 = vmatpush2.msra.mxu0 0.0
    %3755 = vmatprep.subr.mxu0 0.0
    %3756 = vmatpush2.msra.mxu0 0.0
    %3757 = vmatprep.subr.mxu0 0.0
    %3758 = vmatpush2.msra.mxu0 0.0
    %3759 = vmatprep.subr.mxu0 0.0
    %3760 = vmatpush2.msra.mxu0 0.0
    %3761 = vmatprep.subr.mxu0 0.0
    %3762 = vmatpush2.msra.mxu0 0.0
    %3763 = vmatprep.subr.mxu0 0.0
    %3764 = vmatpush2.msra.mxu0 0.0
    %3765 = vmatprep.subr.mxu0 0.0
    %3766 = vmatpush2.msra.mxu0 0.0
    %3767 = vmatprep.subr.mxu0 0.0
    %3768 = vmatpush2.msra.mxu0 0.0
    %3769 = vmatprep.mubr.f32.mxu0 0.0
    %3770 = vmatmul.mubr.f32.gmra.mxu0 %v3703
    %v3771 = vpop.f32.mrf.mxu0
    %v3772 = vadd.f32 0.0, %v3771
    %v3773 = vpop.f32.mrf.mxu0
    %3774 = vdwg.mxu0
    %3775 = vrot.lane.b32.xlu0 %v153, 40
    %v3776 = vpop.permute.xlu0 %3775
    %v3779 = vsel %vm179, %v3694, 0
    %3781 = vmatprep.subr.mxu0 0.0
    %3782 = vmatpush1.msra.mxu0 0.0
    %3783 = vmatprep.subr.mxu0 0.0
    %3784 = vmatpush1.msra.mxu0 0.0
    %3785 = vmatprep.subr.mxu0 0.0
    %3786 = vmatpush1.msra.mxu0 0.0
    %3787 = vmatprep.subr.mxu0 0.0
    %3788 = vmatpush1.msra.mxu0 0.0
    %3789 = vmatprep.subr.mxu0 0.0
    %3790 = vmatpush1.msra.mxu0 0.0
    %3791 = vmatprep.subr.mxu0 0.0
    %3792 = vmatpush1.msra.mxu0 0.0
    %3793 = vmatprep.subr.mxu0 0.0
    %3794 = vmatpush1.msra.mxu0 0.0
    %3795 = vmatprep.subr.mxu0 0.0
    %3796 = vmatpush1.msra.mxu0 0.0
    %3797 = vmatprep.subr.mxu0 0.0
    %3798 = vmatpush1.msra.mxu0 0.0
    %3799 = vmatprep.subr.mxu0 0.0
    %3800 = vmatpush1.msra.mxu0 0.0
    %3801 = vmatprep.subr.mxu0 0.0
    %3802 = vmatpush1.msra.mxu0 0.0
    %3803 = vmatprep.subr.mxu0 0.0
    %3804 = vmatpush1.msra.mxu0 0.0
    %3805 = vmatprep.subr.mxu0 0.0
    %3806 = vmatpush1.msra.mxu0 0.0
    %3807 = vmatprep.subr.mxu0 0.0
    %3808 = vmatpush1.msra.mxu0 0.0
    %3809 = vmatprep.subr.mxu0 0.0
    %3810 = vmatpush1.msra.mxu0 0.0
    %3811 = vmatprep.subr.mxu0 0.0
    %3812 = vmatpush1.msra.mxu0 %v3776
    %3813 = vmatprep.subr.mxu0 0.0
    %3814 = vmatpush2.msra.mxu0 0.0
    %3815 = vmatprep.subr.mxu0 0.0
    %3816 = vmatpush2.msra.mxu0 0.0
    %3817 = vmatprep.subr.mxu0 0.0
    %3818 = vmatpush2.msra.mxu0 0.0
    %3819 = vmatprep.subr.mxu0 0.0
    %3820 = vmatpush2.msra.mxu0 0.0
    %3821 = vmatprep.subr.mxu0 0.0
    %3822 = vmatpush2.msra.mxu0 0.0
    %3823 = vmatprep.subr.mxu0 0.0
    %3824 = vmatpush2.msra.mxu0 0.0
    %3825 = vmatprep.subr.mxu0 0.0
    %3826 = vmatpush2.msra.mxu0 0.0
    %3827 = vmatprep.subr.mxu0 0.0
    %3828 = vmatpush2.msra.mxu0 0.0
    %3829 = vmatprep.subr.mxu0 0.0
    %3830 = vmatpush2.msra.mxu0 0.0
    %3831 = vmatprep.subr.mxu0 0.0
    %3832 = vmatpush2.msra.mxu0 0.0
    %3833 = vmatprep.subr.mxu0 0.0
    %3834 = vmatpush2.msra.mxu0 0.0
    %3835 = vmatprep.subr.mxu0 0.0
    %3836 = vmatpush2.msra.mxu0 0.0
    %3837 = vmatprep.subr.mxu0 0.0
    %3838 = vmatpush2.msra.mxu0 0.0
    %3839 = vmatprep.subr.mxu0 0.0
    %3840 = vmatpush2.msra.mxu0 0.0
    %3841 = vmatprep.subr.mxu0 0.0
    %3842 = vmatpush2.msra.mxu0 0.0
    %3843 = vmatprep.subr.mxu0 0.0
    %3844 = vmatpush2.msra.mxu0 0.0
    %3845 = vmatprep.mubr.f32.mxu0 0.0
    %3846 = vmatmul.mubr.f32.gmra.mxu0 %v3779
    %v3847 = vpop.f32.mrf.mxu0
    %v3848 = vadd.f32 0.0, %v3847
    %v3849 = vpop.f32.mrf.mxu0
    %3850 = vdwg.mxu0
    %3851 = vrot.lane.b32.xlu0 %v158, 40
    %v3852 = vpop.permute.xlu0 %3851
    %v3855 = vsel %vm179, %v3695, 0
    %3857 = vmatprep.subr.mxu0 0.0
    %3858 = vmatpush1.msra.mxu0 0.0
    %3859 = vmatprep.subr.mxu0 0.0
    %3860 = vmatpush1.msra.mxu0 0.0
    %3861 = vmatprep.subr.mxu0 0.0
    %3862 = vmatpush1.msra.mxu0 0.0
    %3863 = vmatprep.subr.mxu0 0.0
    %3864 = vmatpush1.msra.mxu0 0.0
    %3865 = vmatprep.subr.mxu0 0.0
    %3866 = vmatpush1.msra.mxu0 0.0
    %3867 = vmatprep.subr.mxu0 0.0
    %3868 = vmatpush1.msra.mxu0 0.0
    %3869 = vmatprep.subr.mxu0 0.0
    %3870 = vmatpush1.msra.mxu0 0.0
    %3871 = vmatprep.subr.mxu0 0.0
    %3872 = vmatpush1.msra.mxu0 0.0
    %3873 = vmatprep.subr.mxu0 0.0
    %3874 = vmatpush1.msra.mxu0 0.0
    %3875 = vmatprep.subr.mxu0 0.0
    %3876 = vmatpush1.msra.mxu0 0.0
    %3877 = vmatprep.subr.mxu0 0.0
    %3878 = vmatpush1.msra.mxu0 0.0
    %3879 = vmatprep.subr.mxu0 0.0
    %3880 = vmatpush1.msra.mxu0 0.0
    %3881 = vmatprep.subr.mxu0 0.0
    %3882 = vmatpush1.msra.mxu0 0.0
    %3883 = vmatprep.subr.mxu0 0.0
    %3884 = vmatpush1.msra.mxu0 0.0
    %3885 = vmatprep.subr.mxu0 0.0
    %3886 = vmatpush1.msra.mxu0 0.0
    %3887 = vmatprep.subr.mxu0 0.0
    %3888 = vmatpush1.msra.mxu0 %v3852
    %3889 = vmatprep.subr.mxu0 0.0
    %3890 = vmatpush2.msra.mxu0 0.0
    %3891 = vmatprep.subr.mxu0 0.0
    %3892 = vmatpush2.msra.mxu0 0.0
    %3893 = vmatprep.subr.mxu0 0.0
    %3894 = vmatpush2.msra.mxu0 0.0
    %3895 = vmatprep.subr.mxu0 0.0
    %3896 = vmatpush2.msra.mxu0 0.0
    %3897 = vmatprep.subr.mxu0 0.0
    %3898 = vmatpush2.msra.mxu0 0.0
    %3899 = vmatprep.subr.mxu0 0.0
    %3900 = vmatpush2.msra.mxu0 0.0
    %3901 = vmatprep.subr.mxu0 0.0
    %3902 = vmatpush2.msra.mxu0 0.0
    %3903 = vmatprep.subr.mxu0 0.0
    %3904 = vmatpush2.msra.mxu0 0.0
    %3905 = vmatprep.subr.mxu0 0.0
    %3906 = vmatpush2.msra.mxu0 0.0
    %3907 = vmatprep.subr.mxu0 0.0
    %3908 = vmatpush2.msra.mxu0 0.0
    %3909 = vmatprep.subr.mxu0 0.0
    %3910 = vmatpush2.msra.mxu0 0.0
    %3911 = vmatprep.subr.mxu0 0.0
    %3912 = vmatpush2.msra.mxu0 0.0
    %3913 = vmatprep.subr.mxu0 0.0
    %3914 = vmatpush2.msra.mxu0 0.0
    %3915 = vmatprep.subr.mxu0 0.0
    %3916 = vmatpush2.msra.mxu0 0.0
    %3917 = vmatprep.subr.mxu0 0.0
    %3918 = vmatpush2.msra.mxu0 0.0
    %3919 = vmatprep.subr.mxu0 0.0
    %3920 = vmatpush2.msra.mxu0 0.0
    %3921 = vmatprep.mubr.f32.mxu0 0.0
    %3922 = vmatmul.mubr.f32.gmra.mxu0 %v3855
    %v3923 = vpop.f32.mrf.mxu0
    %v3924 = vadd.f32 0.0, %v3923
    %v3925 = vpop.f32.mrf.mxu0
    %3926 = vdwg.mxu0
    %3927 = vrot.lane.b32.xlu0 %v163, 40
    %v3928 = vpop.permute.xlu0 %3927
    %v3931 = vsel %vm179, %v3696, 0
    %3933 = vmatprep.subr.mxu0 0.0
    %3934 = vmatpush1.msra.mxu0 0.0
    %3935 = vmatprep.subr.mxu0 0.0
    %3936 = vmatpush1.msra.mxu0 0.0
    %3937 = vmatprep.subr.mxu0 0.0
    %3938 = vmatpush1.msra.mxu0 0.0
    %3939 = vmatprep.subr.mxu0 0.0
    %3940 = vmatpush1.msra.mxu0 0.0
    %3941 = vmatprep.subr.mxu0 0.0
    %3942 = vmatpush1.msra.mxu0 0.0
    %3943 = vmatprep.subr.mxu0 0.0
    %3944 = vmatpush1.msra.mxu0 0.0
    %3945 = vmatprep.subr.mxu0 0.0
    %3946 = vmatpush1.msra.mxu0 0.0
    %3947 = vmatprep.subr.mxu0 0.0
    %3948 = vmatpush1.msra.mxu0 0.0
    %3949 = vmatprep.subr.mxu0 0.0
    %3950 = vmatpush1.msra.mxu0 0.0
    %3951 = vmatprep.subr.mxu0 0.0
    %3952 = vmatpush1.msra.mxu0 0.0
    %3953 = vmatprep.subr.mxu0 0.0
    %3954 = vmatpush1.msra.mxu0 0.0
    %3955 = vmatprep.subr.mxu0 0.0
    %3956 = vmatpush1.msra.mxu0 0.0
    %3957 = vmatprep.subr.mxu0 0.0
    %3958 = vmatpush1.msra.mxu0 0.0
    %3959 = vmatprep.subr.mxu0 0.0
    %3960 = vmatpush1.msra.mxu0 0.0
    %3961 = vmatprep.subr.mxu0 0.0
    %3962 = vmatpush1.msra.mxu0 0.0
    %3963 = vmatprep.subr.mxu0 0.0
    %3964 = vmatpush1.msra.mxu0 %v3928
    %3965 = vmatprep.subr.mxu0 0.0
    %3966 = vmatpush2.msra.mxu0 0.0
    %3967 = vmatprep.subr.mxu0 0.0
    %3968 = vmatpush2.msra.mxu0 0.0
    %3969 = vmatprep.subr.mxu0 0.0
    %3970 = vmatpush2.msra.mxu0 0.0
    %3971 = vmatprep.subr.mxu0 0.0
    %3972 = vmatpush2.msra.mxu0 0.0
    %3973 = vmatprep.subr.mxu0 0.0
    %3974 = vmatpush2.msra.mxu0 0.0
    %3975 = vmatprep.subr.mxu0 0.0
    %3976 = vmatpush2.msra.mxu0 0.0
    %3977 = vmatprep.subr.mxu0 0.0
    %3978 = vmatpush2.msra.mxu0 0.0
    %3979 = vmatprep.subr.mxu0 0.0
    %3980 = vmatpush2.msra.mxu0 0.0
    %3981 = vmatprep.subr.mxu0 0.0
    %3982 = vmatpush2.msra.mxu0 0.0
    %3983 = vmatprep.subr.mxu0 0.0
    %3984 = vmatpush2.msra.mxu0 0.0
    %3985 = vmatprep.subr.mxu0 0.0
    %3986 = vmatpush2.msra.mxu0 0.0
    %3987 = vmatprep.subr.mxu0 0.0
    %3988 = vmatpush2.msra.mxu0 0.0
    %3989 = vmatprep.subr.mxu0 0.0
    %3990 = vmatpush2.msra.mxu0 0.0
    %3991 = vmatprep.subr.mxu0 0.0
    %3992 = vmatpush2.msra.mxu0 0.0
    %3993 = vmatprep.subr.mxu0 0.0
    %3994 = vmatpush2.msra.mxu0 0.0
    %3995 = vmatprep.subr.mxu0 0.0
    %3996 = vmatpush2.msra.mxu0 0.0
    %3997 = vmatprep.mubr.f32.mxu0 0.0
    %3998 = vmatmul.mubr.f32.gmra.mxu0 %v3931
    %v3999 = vpop.f32.mrf.mxu0
    %v4000 = vadd.f32 0.0, %v3999
    %v4001 = vpop.f32.mrf.mxu0
    %4002 = vdwg.mxu0
    %4003 = vrot.lane.b32.xlu0 %v168, 40
    %v4004 = vpop.permute.xlu0 %4003
    %v4007 = vsel %vm179, %v3697, 0
    %4009 = vmatprep.subr.mxu0 0.0
    %4010 = vmatpush1.msra.mxu0 0.0
    %4011 = vmatprep.subr.mxu0 0.0
    %4012 = vmatpush1.msra.mxu0 0.0
    %4013 = vmatprep.subr.mxu0 0.0
    %4014 = vmatpush1.msra.mxu0 0.0
    %4015 = vmatprep.subr.mxu0 0.0
    %4016 = vmatpush1.msra.mxu0 0.0
    %4017 = vmatprep.subr.mxu0 0.0
    %4018 = vmatpush1.msra.mxu0 0.0
    %4019 = vmatprep.subr.mxu0 0.0
    %4020 = vmatpush1.msra.mxu0 0.0
    %4021 = vmatprep.subr.mxu0 0.0
    %4022 = vmatpush1.msra.mxu0 0.0
    %4023 = vmatprep.subr.mxu0 0.0
    %4024 = vmatpush1.msra.mxu0 0.0
    %4025 = vmatprep.subr.mxu0 0.0
    %4026 = vmatpush1.msra.mxu0 0.0
    %4027 = vmatprep.subr.mxu0 0.0
    %4028 = vmatpush1.msra.mxu0 0.0
    %4029 = vmatprep.subr.mxu0 0.0
    %4030 = vmatpush1.msra.mxu0 0.0
    %4031 = vmatprep.subr.mxu0 0.0
    %4032 = vmatpush1.msra.mxu0 0.0
    %4033 = vmatprep.subr.mxu0 0.0
    %4034 = vmatpush1.msra.mxu0 0.0
    %4035 = vmatprep.subr.mxu0 0.0
    %4036 = vmatpush1.msra.mxu0 0.0
    %4037 = vmatprep.subr.mxu0 0.0
    %4038 = vmatpush1.msra.mxu0 0.0
    %4039 = vmatprep.subr.mxu0 0.0
    %4040 = vmatpush1.msra.mxu0 %v4004
    %4041 = vmatprep.subr.mxu0 0.0
    %4042 = vmatpush2.msra.mxu0 0.0
    %4043 = vmatprep.subr.mxu0 0.0
    %4044 = vmatpush2.msra.mxu0 0.0
    %4045 = vmatprep.subr.mxu0 0.0
    %4046 = vmatpush2.msra.mxu0 0.0
    %4047 = vmatprep.subr.mxu0 0.0
    %4048 = vmatpush2.msra.mxu0 0.0
    %4049 = vmatprep.subr.mxu0 0.0
    %4050 = vmatpush2.msra.mxu0 0.0
    %4051 = vmatprep.subr.mxu0 0.0
    %4052 = vmatpush2.msra.mxu0 0.0
    %4053 = vmatprep.subr.mxu0 0.0
    %4054 = vmatpush2.msra.mxu0 0.0
    %4055 = vmatprep.subr.mxu0 0.0
    %4056 = vmatpush2.msra.mxu0 0.0
    %4057 = vmatprep.subr.mxu0 0.0
    %4058 = vmatpush2.msra.mxu0 0.0
    %4059 = vmatprep.subr.mxu0 0.0
    %4060 = vmatpush2.msra.mxu0 0.0
    %4061 = vmatprep.subr.mxu0 0.0
    %4062 = vmatpush2.msra.mxu0 0.0
    %4063 = vmatprep.subr.mxu0 0.0
    %4064 = vmatpush2.msra.mxu0 0.0
    %4065 = vmatprep.subr.mxu0 0.0
    %4066 = vmatpush2.msra.mxu0 0.0
    %4067 = vmatprep.subr.mxu0 0.0
    %4068 = vmatpush2.msra.mxu0 0.0
    %4069 = vmatprep.subr.mxu0 0.0
    %4070 = vmatpush2.msra.mxu0 0.0
    %4071 = vmatprep.subr.mxu0 0.0
    %4072 = vmatpush2.msra.mxu0 0.0
    %4073 = vmatprep.mubr.f32.mxu0 0.0
    %4074 = vmatmul.mubr.f32.gmra.mxu0 %v4007
    %v4075 = vpop.f32.mrf.mxu0
    %v4076 = vadd.f32 0.0, %v4075
    %v4077 = vpop.f32.mrf.mxu0
    %4078 = vdwg.mxu0
    %4079 = vrot.lane.b32.xlu0 %v173, 40
    %v4080 = vpop.permute.xlu0 %4079
    %v4083 = vsel %vm179, %v3698, 0
    %4085 = vmatprep.subr.mxu0 0.0
    %4086 = vmatpush1.msra.mxu0 0.0
    %4087 = vmatprep.subr.mxu0 0.0
    %4088 = vmatpush1.msra.mxu0 0.0
    %4089 = vmatprep.subr.mxu0 0.0
    %4090 = vmatpush1.msra.mxu0 0.0
    %4091 = vmatprep.subr.mxu0 0.0
    %4092 = vmatpush1.msra.mxu0 0.0
    %4093 = vmatprep.subr.mxu0 0.0
    %4094 = vmatpush1.msra.mxu0 0.0
    %4095 = vmatprep.subr.mxu0 0.0
    %4096 = vmatpush1.msra.mxu0 0.0
    %4097 = vmatprep.subr.mxu0 0.0
    %4098 = vmatpush1.msra.mxu0 0.0
    %4099 = vmatprep.subr.mxu0 0.0
    %4100 = vmatpush1.msra.mxu0 0.0
    %4101 = vmatprep.subr.mxu0 0.0
    %4102 = vmatpush1.msra.mxu0 0.0
    %4103 = vmatprep.subr.mxu0 0.0
    %4104 = vmatpush1.msra.mxu0 0.0
    %4105 = vmatprep.subr.mxu0 0.0
    %4106 = vmatpush1.msra.mxu0 0.0
    %4107 = vmatprep.subr.mxu0 0.0
    %4108 = vmatpush1.msra.mxu0 0.0
    %4109 = vmatprep.subr.mxu0 0.0
    %4110 = vmatpush1.msra.mxu0 0.0
    %4111 = vmatprep.subr.mxu0 0.0
    %4112 = vmatpush1.msra.mxu0 0.0
    %4113 = vmatprep.subr.mxu0 0.0
    %4114 = vmatpush1.msra.mxu0 0.0
    %4115 = vmatprep.subr.mxu0 0.0
    %4116 = vmatpush1.msra.mxu0 %v4080
    %4117 = vmatprep.subr.mxu0 0.0
    %4118 = vmatpush2.msra.mxu0 0.0
    %4119 = vmatprep.subr.mxu0 0.0
    %4120 = vmatpush2.msra.mxu0 0.0
    %4121 = vmatprep.subr.mxu0 0.0
    %4122 = vmatpush2.msra.mxu0 0.0
    %4123 = vmatprep.subr.mxu0 0.0
    %4124 = vmatpush2.msra.mxu0 0.0
    %4125 = vmatprep.subr.mxu0 0.0
    %4126 = vmatpush2.msra.mxu0 0.0
    %4127 = vmatprep.subr.mxu0 0.0
    %4128 = vmatpush2.msra.mxu0 0.0
    %4129 = vmatprep.subr.mxu0 0.0
    %4130 = vmatpush2.msra.mxu0 0.0
    %4131 = vmatprep.subr.mxu0 0.0
    %4132 = vmatpush2.msra.mxu0 0.0
    %4133 = vmatprep.subr.mxu0 0.0
    %4134 = vmatpush2.msra.mxu0 0.0
    %4135 = vmatprep.subr.mxu0 0.0
    %4136 = vmatpush2.msra.mxu0 0.0
    %4137 = vmatprep.subr.mxu0 0.0
    %4138 = vmatpush2.msra.mxu0 0.0
    %4139 = vmatprep.subr.mxu0 0.0
    %4140 = vmatpush2.msra.mxu0 0.0
    %4141 = vmatprep.subr.mxu0 0.0
    %4142 = vmatpush2.msra.mxu0 0.0
    %4143 = vmatprep.subr.mxu0 0.0
    %4144 = vmatpush2.msra.mxu0 0.0
    %4145 = vmatprep.subr.mxu0 0.0
    %4146 = vmatpush2.msra.mxu0 0.0
    %4147 = vmatprep.subr.mxu0 0.0
    %4148 = vmatpush2.msra.mxu0 0.0
    %4149 = vmatprep.mubr.f32.mxu0 0.0
    %4150 = vmatmul.mubr.f32.gmra.mxu0 %v4083
    %v4151 = vpop.f32.mrf.mxu0
    %v4152 = vadd.f32 0.0, %v4151
    %v4153 = vpop.f32.mrf.mxu0
    %4154 = vdwg.mxu0
    %4161 = vrot.lane.b32.xlu0 %v1780, 8
    %v4162 = vpop.permute.xlu0 %4161
    %4163 = vrot.lane.b32.xlu0 %v1856, 8
    %v4164 = vpop.permute.xlu0 %4163
    %4165 = vrot.lane.b32.xlu0 %v1932, 8
    %v4166 = vpop.permute.xlu0 %4165
    %4167 = vrot.lane.b32.xlu0 %v2008, 8
    %v4168 = vpop.permute.xlu0 %4167
    %4169 = vrot.lane.b32.xlu0 %v2084, 8
    %v4170 = vpop.permute.xlu0 %4169
    %4171 = vrot.lane.b32.xlu0 %v2160, 8
    %v4172 = vpop.permute.xlu0 %4171
    %4185 = vrot.lane.b32.xlu0 %v2776, 16
    %v4186 = vpop.permute.xlu0 %4185
    %4187 = vrot.lane.b32.xlu0 %v2852, 16
    %v4188 = vpop.permute.xlu0 %4187
    %4189 = vrot.lane.b32.xlu0 %v2928, 16
    %v4190 = vpop.permute.xlu0 %4189
    %4191 = vrot.lane.b32.xlu0 %v3004, 16
    %v4192 = vpop.permute.xlu0 %4191
    %4193 = vrot.lane.b32.xlu0 %v3080, 16
    %v4194 = vpop.permute.xlu0 %4193
    %4195 = vrot.lane.b32.xlu0 %v3156, 16
    %v4196 = vpop.permute.xlu0 %4195
    %4209 = vrot.lane.b32.xlu0 %v3772, 24
    %v4210 = vpop.permute.xlu0 %4209
    %4211 = vrot.lane.b32.xlu0 %v3848, 24
    %v4212 = vpop.permute.xlu0 %4211
    %4213 = vrot.lane.b32.xlu0 %v3924, 24
    %v4214 = vpop.permute.xlu0 %4213
    %4215 = vrot.lane.b32.xlu0 %v4000, 24
    %v4216 = vpop.permute.xlu0 %4215
    %4217 = vrot.lane.b32.xlu0 %v4076, 24
    %v4218 = vpop.permute.xlu0 %4217
    %4219 = vrot.lane.b32.xlu0 %v4152, 24
    %v4220 = vpop.permute.xlu0 %4219
    %v4227 = vsel %vm179, %v784, %v4162
    %v4228 = vsel %vm179, %v860, %v4164
    %v4229 = vsel %vm179, %v936, %v4166
    %v4230 = vsel %vm179, %v1012, %v4168
    %v4231 = vsel %vm179, %v1088, %v4170
    %v4232 = vsel %vm179, %v1164, %v4172
    %vm4233 = vcmask 130048
    %v4234 = vsel %vm4233, %v4227, %v4186
    %v4235 = vsel %vm4233, %v4228, %v4188
    %v4236 = vsel %vm4233, %v4229, %v4190
    %v4237 = vsel %vm4233, %v4230, %v4192
    %v4238 = vsel %vm4233, %v4231, %v4194
    %v4239 = vsel %vm4233, %v4232, %v4196
    %vm4240 = vcmask 195584
    %v4241 = vsel %vm4240, %v4234, %v4210
    %v4242 = vsel %vm4240, %v4235, %v4212
    %v4243 = vsel %vm4240, %v4236, %v4214
    %v4244 = vsel %vm4240, %v4237, %v4216
    %v4245 = vsel %vm4240, %v4238, %v4218
    %v4246 = vsel %vm4240, %v4239, %v4220
    %v4247 = vld [vmem:[%s3] sm:$0xff]
    %v4248 = vld [vmem:[%s3 + $0x8] sm:$0xff]
    %v4249 = vld [vmem:[%s3 + $0x10] sm:$0xff]
    %v4250 = vld [vmem:[%s3 + $0x18] sm:$0xff]
    %v4251 = vld [vmem:[%s4] sm:$0x1]
    %v4253 = vlaneseq
    %v4254 = vshrl.u32 %v4253, 7
    %v4255 = vsub.s32 0, %v4254
    %v4256 = vrot.slane %v4251, %v4255
    %v4259 = vsel %vm62, %v4241, 0
    %v4262 = vsel %vm62, %v4242, 0
    %v4265 = vsel %vm62, %v4243, 0
    %v4268 = vsel %vm62, %v4244, 0
    %v4271 = vsel %vm62, %v4245, 0
    %v4274 = vsel %vm62, %v4246, 0
    %4276 = vmatprep.subr.mxu0 0.0
    %4277 = vmatpush1.msra.mxu0 0.0
    %4278 = vmatprep.subr.mxu0 0.0
    %4279 = vmatpush1.msra.mxu0 0.0
    %4280 = vmatprep.subr.mxu0 0.0
    %4281 = vmatpush1.msra.mxu0 0.0
    %4282 = vmatprep.subr.mxu0 0.0
    %4283 = vmatpush1.msra.mxu0 0.0
    %4284 = vmatprep.subr.mxu0 0.0
    %4285 = vmatpush1.msra.mxu0 0.0
    %4286 = vmatprep.subr.mxu0 0.0
    %4287 = vmatpush1.msra.mxu0 0.0
    %4288 = vmatprep.subr.mxu0 0.0
    %4289 = vmatpush1.msra.mxu0 0.0
    %4290 = vmatprep.subr.mxu0 0.0
    %4291 = vmatpush1.msra.mxu0 0.0
    %4292 = vmatprep.subr.mxu0 0.0
    %4293 = vmatpush1.msra.mxu0 0.0
    %4294 = vmatprep.subr.mxu0 0.0
    %4295 = vmatpush1.msra.mxu0 0.0
    %4296 = vmatprep.subr.mxu0 0.0
    %4297 = vmatpush1.msra.mxu0 0.0
    %4298 = vmatprep.subr.mxu0 0.0
    %4299 = vmatpush1.msra.mxu0 0.0
    %4300 = vmatprep.subr.mxu0 0.0
    %4301 = vmatpush1.msra.mxu0 %v4250
    %4302 = vmatprep.subr.mxu0 0.0
    %4303 = vmatpush1.msra.mxu0 %v4249
    %4304 = vmatprep.subr.mxu0 0.0
    %4305 = vmatpush1.msra.mxu0 %v4248
    %4306 = vmatprep.subr.mxu0 0.0
    %4307 = vmatpush1.msra.mxu0 %v4247
    %4308 = vmatprep.subr.mxu0 0.0
    %4309 = vmatpush2.msra.mxu0 0.0
    %4310 = vmatprep.subr.mxu0 0.0
    %4311 = vmatpush2.msra.mxu0 0.0
    %4312 = vmatprep.subr.mxu0 0.0
    %4313 = vmatpush2.msra.mxu0 0.0
    %4314 = vmatprep.subr.mxu0 0.0
    %4315 = vmatpush2.msra.mxu0 0.0
    %4316 = vmatprep.subr.mxu0 0.0
    %4317 = vmatpush2.msra.mxu0 0.0
    %4318 = vmatprep.subr.mxu0 0.0
    %4319 = vmatpush2.msra.mxu0 0.0
    %4320 = vmatprep.subr.mxu0 0.0
    %4321 = vmatpush2.msra.mxu0 0.0
    %4322 = vmatprep.subr.mxu0 0.0
    %4323 = vmatpush2.msra.mxu0 0.0
    %4324 = vmatprep.subr.mxu0 0.0
    %4325 = vmatpush2.msra.mxu0 0.0
    %4326 = vmatprep.subr.mxu0 0.0
    %4327 = vmatpush2.msra.mxu0 0.0
    %4328 = vmatprep.subr.mxu0 0.0
    %4329 = vmatpush2.msra.mxu0 0.0
    %4330 = vmatprep.subr.mxu0 0.0
    %4331 = vmatpush2.msra.mxu0 0.0
    %4332 = vmatprep.subr.mxu0 0.0
    %4333 = vmatpush2.msra.mxu0 0.0
    %4334 = vmatprep.subr.mxu0 0.0
    %4335 = vmatpush2.msra.mxu0 0.0
    %4336 = vmatprep.subr.mxu0 0.0
    %4337 = vmatpush2.msra.mxu0 0.0
    %4338 = vmatprep.subr.mxu0 0.0
    %4339 = vmatpush2.msra.mxu0 0.0
    %4340 = vmatprep.mubr.f32.mxu0 0.0
    %4341 = vmatmul.mubr.f32.gmra.mxu0 %v4259
    %v4342 = vpop.f32.mrf.mxu0
    %v4343 = vadd.f32 %v4256, %v4342
    %v4344 = vpop.f32.mrf.mxu0
    %4345 = vmatprep.mubr.f32.mxu0 0.0
    %4346 = vmatmul.mubr.f32.gmra.mxu0 %v4262
    %v4347 = vpop.f32.mrf.mxu0
    %v4348 = vadd.f32 %v4256, %v4347
    %v4349 = vpop.f32.mrf.mxu0
    %4350 = vmatprep.mubr.f32.mxu0 0.0
    %4351 = vmatmul.mubr.f32.gmra.mxu0 %v4265
    %v4352 = vpop.f32.mrf.mxu0
    %v4353 = vadd.f32 %v4256, %v4352
    %v4354 = vpop.f32.mrf.mxu0
    %4355 = vmatprep.mubr.f32.mxu0 0.0
    %4356 = vmatmul.mubr.f32.gmra.mxu0 %v4268
    %v4357 = vpop.f32.mrf.mxu0
    %v4358 = vadd.f32 %v4256, %v4357
    %v4359 = vpop.f32.mrf.mxu0
    %4360 = vmatprep.mubr.f32.mxu0 0.0
    %4361 = vmatmul.mubr.f32.gmra.mxu0 %v4271
    %v4362 = vpop.f32.mrf.mxu0
    %v4363 = vadd.f32 %v4256, %v4362
    %v4364 = vpop.f32.mrf.mxu0
    %4365 = vmatprep.mubr.f32.mxu0 0.0
    %4366 = vmatmul.mubr.f32.gmra.mxu0 %v4274
    %v4367 = vpop.f32.mrf.mxu0
    %v4368 = vadd.f32 %v4256, %v4367
    %v4369 = vpop.f32.mrf.mxu0
    %4370 = vdwg.mxu0
    %v4371 = vadd.f32 %v45, %v4343
    %v4372 = vadd.f32 %v46, %v4348
    %v4373 = vadd.f32 %v47, %v4353
    %v4374 = vadd.f32 %v48, %v4358
    %v4375 = vadd.f32 %v49, %v4363
    %v4376 = vadd.f32 %v50, %v4368
    %v4377 = vld [vmem:[%s5] sm:$0x1]
    %v4378 = vld [vmem:[%s6] sm:$0x1]
    %v4379 = vsel %vm62, %v4371, 0.0
    %4380 = vadd.xlane.f32.xlu0 %v4379
    %v4381 = vpop.xlane.xlu0 %4380
    %v4382 = vsel %vm62, %v4372, 0.0
    %4383 = vadd.xlane.f32.xlu0 %v4382
    %v4384 = vpop.xlane.xlu0 %4383
    %v4385 = vsel %vm62, %v4373, 0.0
    %4386 = vadd.xlane.f32.xlu0 %v4385
    %v4387 = vpop.xlane.xlu0 %4386
    %v4388 = vsel %vm62, %v4374, 0.0
    %4389 = vadd.xlane.f32.xlu0 %v4388
    %v4390 = vpop.xlane.xlu0 %4389
    %v4391 = vsel %vm62, %v4375, 0.0
    %4392 = vadd.xlane.f32.xlu0 %v4391
    %v4393 = vpop.xlane.xlu0 %4392
    %v4394 = vsel %vm62, %v4376, 0.0
    %4395 = vadd.xlane.f32.xlu0 %v4394
    %v4396 = vpop.xlane.xlu0 %4395
    %v4397 = vrcp.pop 32.0
    %v4398 = vmul.f32 %v4381, %v4397
    %v4399 = vmul.f32 %v4384, %v4397
    %v4400 = vmul.f32 %v4387, %v4397
    %v4401 = vmul.f32 %v4390, %v4397
    %v4402 = vmul.f32 %v4393, %v4397
    %v4403 = vmul.f32 %v4396, %v4397
    %v4404 = vsub.f32 %v4371, %v4398
    %v4405 = vsub.f32 %v4372, %v4399
    %v4406 = vsub.f32 %v4373, %v4400
    %v4407 = vsub.f32 %v4374, %v4401
    %v4408 = vsub.f32 %v4375, %v4402
    %v4409 = vsub.f32 %v4376, %v4403
    %v4410 = vmul.f32 %v4404, %v4404
    %v4411 = vmul.f32 %v4405, %v4405
    %v4412 = vmul.f32 %v4406, %v4406
    %v4413 = vmul.f32 %v4407, %v4407
    %v4414 = vmul.f32 %v4408, %v4408
    %v4415 = vmul.f32 %v4409, %v4409
    %v4416 = vsel %vm62, %v4410, 0.0
    %4417 = vadd.xlane.f32.xlu0 %v4416
    %v4418 = vpop.xlane.xlu0 %4417
    %v4419 = vsel %vm62, %v4411, 0.0
    %4420 = vadd.xlane.f32.xlu0 %v4419
    %v4421 = vpop.xlane.xlu0 %4420
    %v4422 = vsel %vm62, %v4412, 0.0
    %4423 = vadd.xlane.f32.xlu0 %v4422
    %v4424 = vpop.xlane.xlu0 %4423
    %v4425 = vsel %vm62, %v4413, 0.0
    %4426 = vadd.xlane.f32.xlu0 %v4425
    %v4427 = vpop.xlane.xlu0 %4426
    %v4428 = vsel %vm62, %v4414, 0.0
    %4429 = vadd.xlane.f32.xlu0 %v4428
    %v4430 = vpop.xlane.xlu0 %4429
    %v4431 = vsel %vm62, %v4415, 0.0
    %4432 = vadd.xlane.f32.xlu0 %v4431
    %v4433 = vpop.xlane.xlu0 %4432
    %v4434 = vmul.f32 %v4418, %v4397
    %v4435 = vmul.f32 %v4421, %v4397
    %v4436 = vmul.f32 %v4424, %v4397
    %v4437 = vmul.f32 %v4427, %v4397
    %v4438 = vmul.f32 %v4430, %v4397
    %v4439 = vmul.f32 %v4433, %v4397
    %v4440 = vadd.f32 %v4434, 1e-05
    %v4441 = vadd.f32 %v4435, 1e-05
    %v4442 = vadd.f32 %v4436, 1e-05
    %v4443 = vadd.f32 %v4437, 1e-05
    %v4444 = vadd.f32 %v4438, 1e-05
    %v4445 = vadd.f32 %v4439, 1e-05
    %v4446 = vrsqrt.pop %v4440
    %v4447 = vrsqrt.pop %v4441
    %v4448 = vrsqrt.pop %v4442
    %v4449 = vrsqrt.pop %v4443
    %v4450 = vrsqrt.pop %v4444
    %v4451 = vrsqrt.pop %v4445
    %v4452 = vmul.f32 %v4404, %v4446
    %v4453 = vmul.f32 %v4405, %v4447
    %v4454 = vmul.f32 %v4406, %v4448
    %v4455 = vmul.f32 %v4407, %v4449
    %v4456 = vmul.f32 %v4408, %v4450
    %v4457 = vmul.f32 %v4409, %v4451
    %v4459 = vlaneseq
    %v4460 = vshrl.u32 %v4459, 7
    %v4461 = vsub.s32 0, %v4460
    %v4462 = vrot.slane %v4377, %v4461
    %v4464 = vmul.f32 %v4452, %v4462
    %v4465 = vmul.f32 %v4453, %v4462
    %v4466 = vmul.f32 %v4454, %v4462
    %v4467 = vmul.f32 %v4455, %v4462
    %v4468 = vmul.f32 %v4456, %v4462
    %v4469 = vmul.f32 %v4457, %v4462
    %v4471 = vlaneseq
    %v4472 = vshrl.u32 %v4471, 7
    %v4473 = vsub.s32 0, %v4472
    %v4474 = vrot.slane %v4378, %v4473
    %v4476 = vadd.f32 %v4464, %v4474
    %v4477 = vadd.f32 %v4465, %v4474
    %v4478 = vadd.f32 %v4466, %v4474
    %v4479 = vadd.f32 %v4467, %v4474
    %v4480 = vadd.f32 %v4468, %v4474
    %v4481 = vadd.f32 %v4469, %v4474
    %v4482 = vld [vmem:[%s7] sm:$0xff]
    %v4483 = vld [vmem:[%s7 + $0x8] sm:$0xff]
    %v4484 = vld [vmem:[%s7 + $0x10] sm:$0xff]
    %v4485 = vld [vmem:[%s7 + $0x18] sm:$0xff]
    %v4486 = vld [vmem:[%s7 + $0x20] sm:$0xff]
    %v4487 = vld [vmem:[%s7 + $0x28] sm:$0xff]
    %v4488 = vld [vmem:[%s7 + $0x30] sm:$0xff]
    %v4489 = vld [vmem:[%s7 + $0x38] sm:$0xff]
    %v4490 = vld [vmem:[%s8] sm:$0x3]
    %v4492 = vlaneseq
    %v4493 = vshrl.u32 %v4492, 7
    %v4494 = vsub.s32 0, %v4493
    %v4495 = vrot.slane %v4490, %v4494
    %v4496 = vlaneseq
    %v4497 = vshrl.u32 %v4496, 7
    %v4498 = vsub.s32 1, %v4497
    %v4499 = vrot.slane %v4490, %v4498
    %v4503 = vsel %vm62, %v4476, 0
    %v4506 = vsel %vm62, %v4477, 0
    %v4509 = vsel %vm62, %v4478, 0
    %v4512 = vsel %vm62, %v4479, 0
    %v4515 = vsel %vm62, %v4480, 0
    %v4518 = vsel %vm62, %v4481, 0
    %4520 = vmatprep.subr.mxu0 0.0
    %4521 = vmatpush1.msra.mxu0 0.0
    %4522 = vmatprep.subr.mxu0 0.0
    %4523 = vmatpush1.msra.mxu0 0.0
    %4524 = vmatprep.subr.mxu0 0.0
    %4525 = vmatpush1.msra.mxu0 0.0
    %4526 = vmatprep.subr.mxu0 0.0
    %4527 = vmatpush1.msra.mxu0 0.0
    %4528 = vmatprep.subr.mxu0 0.0
    %4529 = vmatpush1.msra.mxu0 0.0
    %4530 = vmatprep.subr.mxu0 0.0
    %4531 = vmatpush1.msra.mxu0 0.0
    %4532 = vmatprep.subr.mxu0 0.0
    %4533 = vmatpush1.msra.mxu0 0.0
    %4534 = vmatprep.subr.mxu0 0.0
    %4535 = vmatpush1.msra.mxu0 0.0
    %4536 = vmatprep.subr.mxu0 0.0
    %4537 = vmatpush1.msra.mxu0 0.0
    %4538 = vmatprep.subr.mxu0 0.0
    %4539 = vmatpush1.msra.mxu0 0.0
    %4540 = vmatprep.subr.mxu0 0.0
    %4541 = vmatpush1.msra.mxu0 0.0
    %4542 = vmatprep.subr.mxu0 0.0
    %4543 = vmatpush1.msra.mxu0 0.0
    %4544 = vmatprep.subr.mxu0 %v4489
    %4545 = vmatpush1.msra.mxu0 %v4488
    %4546 = vmatprep.subr.mxu0 %v4487
    %4547 = vmatpush1.msra.mxu0 %v4486
    %4548 = vmatprep.subr.mxu0 %v4485
    %4549 = vmatpush1.msra.mxu0 %v4484
    %4550 = vmatprep.subr.mxu0 %v4483
    %4551 = vmatpush1.msra.mxu0 %v4482
    %4552 = vmatprep.subr.mxu0 0.0
    %4553 = vmatpush2.msra.mxu0 0.0
    %4554 = vmatprep.subr.mxu0 0.0
    %4555 = vmatpush2.msra.mxu0 0.0
    %4556 = vmatprep.subr.mxu0 0.0
    %4557 = vmatpush2.msra.mxu0 0.0
    %4558 = vmatprep.subr.mxu0 0.0
    %4559 = vmatpush2.msra.mxu0 0.0
    %4560 = vmatprep.subr.mxu0 0.0
    %4561 = vmatpush2.msra.mxu0 0.0
    %4562 = vmatprep.subr.mxu0 0.0
    %4563 = vmatpush2.msra.mxu0 0.0
    %4564 = vmatprep.subr.mxu0 0.0
    %4565 = vmatpush2.msra.mxu0 0.0
    %4566 = vmatprep.subr.mxu0 0.0
    %4567 = vmatpush2.msra.mxu0 0.0
    %4568 = vmatprep.subr.mxu0 0.0
    %4569 = vmatpush2.msra.mxu0 0.0
    %4570 = vmatprep.subr.mxu0 0.0
    %4571 = vmatpush2.msra.mxu0 0.0
    %4572 = vmatprep.subr.mxu0 0.0
    %4573 = vmatpush2.msra.mxu0 0.0
    %4574 = vmatprep.subr.mxu0 0.0
    %4575 = vmatpush2.msra.mxu0 0.0
    %4576 = vmatprep.subr.mxu0 0.0
    %4577 = vmatpush2.msra.mxu0 0.0
    %4578 = vmatprep.subr.mxu0 0.0
    %4579 = vmatpush2.msra.mxu0 0.0
    %4580 = vmatprep.subr.mxu0 0.0
    %4581 = vmatpush2.msra.mxu0 0.0
    %4582 = vmatprep.subr.mxu0 0.0
    %4583 = vmatpush2.msra.mxu0 0.0
    %4584 = vmatprep.mubr.f32.mxu0 0.0
    %4585 = vmatmul.mubr.f32.gmra.mxu0 %v4503
    %v4586 = vpop.f32.mrf.mxu0
    %v4587 = vadd.f32 %v4495, %v4586
    %v4588 = vpop.f32.mrf.mxu0
    %v4589 = vadd.f32 %v4499, %v4588
    %4590 = vmatprep.mubr.f32.mxu0 0.0
    %4591 = vmatmul.mubr.f32.gmra.mxu0 %v4506
    %v4592 = vpop.f32.mrf.mxu0
    %v4593 = vadd.f32 %v4495, %v4592
    %v4594 = vpop.f32.mrf.mxu0
    %v4595 = vadd.f32 %v4499, %v4594
    %4596 = vmatprep.mubr.f32.mxu0 0.0
    %4597 = vmatmul.mubr.f32.gmra.mxu0 %v4509
    %v4598 = vpop.f32.mrf.mxu0
    %v4599 = vadd.f32 %v4495, %v4598
    %v4600 = vpop.f32.mrf.mxu0
    %v4601 = vadd.f32 %v4499, %v4600
    %4602 = vmatprep.mubr.f32.mxu0 0.0
    %4603 = vmatmul.mubr.f32.gmra.mxu0 %v4512
    %v4604 = vpop.f32.mrf.mxu0
    %v4605 = vadd.f32 %v4495, %v4604
    %v4606 = vpop.f32.mrf.mxu0
    %v4607 = vadd.f32 %v4499, %v4606
    %4608 = vmatprep.mubr.f32.mxu0 0.0
    %4609 = vmatmul.mubr.f32.gmra.mxu0 %v4515
    %v4610 = vpop.f32.mrf.mxu0
    %v4611 = vadd.f32 %v4495, %v4610
    %v4612 = vpop.f32.mrf.mxu0
    %v4613 = vadd.f32 %v4499, %v4612
    %4614 = vmatprep.mubr.f32.mxu0 0.0
    %4615 = vmatmul.mubr.f32.gmra.mxu0 %v4518
    %v4616 = vpop.f32.mrf.mxu0
    %v4617 = vadd.f32 %v4495, %v4616
    %v4618 = vpop.f32.mrf.mxu0
    %v4619 = vadd.f32 %v4499, %v4618
    %4620 = vdwg.mxu0
    %v4621 = vmax.f32 %v4587, 0.0
    %v4622 = vmax.f32 %v4589, 0.0
    %v4623 = vmax.f32 %v4593, 0.0
    %v4624 = vmax.f32 %v4595, 0.0
    %v4625 = vmax.f32 %v4599, 0.0
    %v4626 = vmax.f32 %v4601, 0.0
    %v4627 = vmax.f32 %v4605, 0.0
    %v4628 = vmax.f32 %v4607, 0.0
    %v4629 = vmax.f32 %v4611, 0.0
    %v4630 = vmax.f32 %v4613, 0.0
    %v4631 = vmax.f32 %v4617, 0.0
    %v4632 = vmax.f32 %v4619, 0.0
    %v4633 = vld [vmem:[%s9] sm:$0xff]
    %v4634 = vld [vmem:[%s9 + $0x8] sm:$0xff]
    %v4635 = vld [vmem:[%s9 + $0x10] sm:$0xff]
    %v4636 = vld [vmem:[%s9 + $0x18] sm:$0xff]
    %v4637 = vld [vmem:[%s9 + $0x20] sm:$0xff]
    %v4638 = vld [vmem:[%s9 + $0x28] sm:$0xff]
    %v4639 = vld [vmem:[%s9 + $0x30] sm:$0xff]
    %v4640 = vld [vmem:[%s9 + $0x38] sm:$0xff]
    %v4641 = vld [vmem:[%s9 + $0x40] sm:$0xff]
    %v4642 = vld [vmem:[%s9 + $0x48] sm:$0xff]
    %v4643 = vld [vmem:[%s9 + $0x50] sm:$0xff]
    %v4644 = vld [vmem:[%s9 + $0x58] sm:$0xff]
    %v4645 = vld [vmem:[%s9 + $0x60] sm:$0xff]
    %v4646 = vld [vmem:[%s9 + $0x68] sm:$0xff]
    %v4647 = vld [vmem:[%s9 + $0x70] sm:$0xff]
    %v4648 = vld [vmem:[%s9 + $0x78] sm:$0xff]
    %v4649 = vld [vmem:[%s9 + $0x80] sm:$0xff]
    %v4650 = vld [vmem:[%s9 + $0x88] sm:$0xff]
    %v4651 = vld [vmem:[%s9 + $0x90] sm:$0xff]
    %v4652 = vld [vmem:[%s9 + $0x98] sm:$0xff]
    %v4653 = vld [vmem:[%s9 + $0xa0] sm:$0xff]
    %v4654 = vld [vmem:[%s9 + $0xa8] sm:$0xff]
    %v4655 = vld [vmem:[%s9 + $0xb0] sm:$0xff]
    %v4656 = vld [vmem:[%s9 + $0xb8] sm:$0xff]
    %v4657 = vld [vmem:[%s9 + $0xc0] sm:$0xff]
    %v4658 = vld [vmem:[%s9 + $0xc8] sm:$0xff]
    %v4659 = vld [vmem:[%s9 + $0xd0] sm:$0xff]
    %v4660 = vld [vmem:[%s9 + $0xd8] sm:$0xff]
    %v4661 = vld [vmem:[%s9 + $0xe0] sm:$0xff]
    %v4662 = vld [vmem:[%s9 + $0xe8] sm:$0xff]
    %v4663 = vld [vmem:[%s9 + $0xf0] sm:$0xff]
    %v4664 = vld [vmem:[%s9 + $0xf8] sm:$0xff]
    %v4665 = vld [vmem:[%s10] sm:$0x1]
    %v4667 = vlaneseq
    %v4668 = vshrl.u32 %v4667, 7
    %v4669 = vsub.s32 0, %v4668
    %v4670 = vrot.slane %v4665, %v4669
    %4672 = vmatprep.subr.mxu0 0.0
    %4673 = vmatpush1.msra.mxu0 %v4648
    %4674 = vmatprep.subr.mxu0 0.0
    %4675 = vmatpush1.msra.mxu0 %v4647
    %4676 = vmatprep.subr.mxu0 0.0
    %4677 = vmatpush1.msra.mxu0 %v4646
    %4678 = vmatprep.subr.mxu0 0.0
    %4679 = vmatpush1.msra.mxu0 %v4645
    %4680 = vmatprep.subr.mxu0 0.0
    %4681 = vmatpush1.msra.mxu0 %v4644
    %4682 = vmatprep.subr.mxu0 0.0
    %4683 = vmatpush1.msra.mxu0 %v4643
    %4684 = vmatprep.subr.mxu0 0.0
    %4685 = vmatpush1.msra.mxu0 %v4642
    %4686 = vmatprep.subr.mxu0 0.0
    %4687 = vmatpush1.msra.mxu0 %v4641
    %4688 = vmatprep.subr.mxu0 0.0
    %4689 = vmatpush1.msra.mxu0 %v4640
    %4690 = vmatprep.subr.mxu0 0.0
    %4691 = vmatpush1.msra.mxu0 %v4639
    %4692 = vmatprep.subr.mxu0 0.0
    %4693 = vmatpush1.msra.mxu0 %v4638
    %4694 = vmatprep.subr.mxu0 0.0
    %4695 = vmatpush1.msra.mxu0 %v4637
    %4696 = vmatprep.subr.mxu0 0.0
    %4697 = vmatpush1.msra.mxu0 %v4636
    %4698 = vmatprep.subr.mxu0 0.0
    %4699 = vmatpush1.msra.mxu0 %v4635
    %4700 = vmatprep.subr.mxu0 0.0
    %4701 = vmatpush1.msra.mxu0 %v4634
    %4702 = vmatprep.subr.mxu0 0.0
    %4703 = vmatpush1.msra.mxu0 %v4633
    %4704 = vmatprep.subr.mxu0 0.0
    %4705 = vmatpush2.msra.mxu0 %v4664
    %4706 = vmatprep.subr.mxu0 0.0
    %4707 = vmatpush2.msra.mxu0 %v4663
    %4708 = vmatprep.subr.mxu0 0.0
    %4709 = vmatpush2.msra.mxu0 %v4662
    %4710 = vmatprep.subr.mxu0 0.0
    %4711 = vmatpush2.msra.mxu0 %v4661
    %4712 = vmatprep.subr.mxu0 0.0
    %4713 = vmatpush2.msra.mxu0 %v4660
    %4714 = vmatprep.subr.mxu0 0.0
    %4715 = vmatpush2.msra.mxu0 %v4659
    %4716 = vmatprep.subr.mxu0 0.0
    %4717 = vmatpush2.msra.mxu0 %v4658
    %4718 = vmatprep.subr.mxu0 0.0
    %4719 = vmatpush2.msra.mxu0 %v4657
    %4720 = vmatprep.subr.mxu0 0.0
    %4721 = vmatpush2.msra.mxu0 %v4656
    %4722 = vmatprep.subr.mxu0 0.0
    %4723 = vmatpush2.msra.mxu0 %v4655
    %4724 = vmatprep.subr.mxu0 0.0
    %4725 = vmatpush2.msra.mxu0 %v4654
    %4726 = vmatprep.subr.mxu0 0.0
    %4727 = vmatpush2.msra.mxu0 %v4653
    %4728 = vmatprep.subr.mxu0 0.0
    %4729 = vmatpush2.msra.mxu0 %v4652
    %4730 = vmatprep.subr.mxu0 0.0
    %4731 = vmatpush2.msra.mxu0 %v4651
    %4732 = vmatprep.subr.mxu0 0.0
    %4733 = vmatpush2.msra.mxu0 %v4650
    %4734 = vmatprep.subr.mxu0 0.0
    %4735 = vmatpush2.msra.mxu0 %v4649
    %4736 = vmatprep.mubr.f32.mxu0 %v4622
    %4737 = vmatmul.mubr.f32.gmra.mxu0 %v4621
    %v4738 = vpop.f32.mrf.mxu0
    %v4739 = vadd.f32 %v4670, %v4738
    %v4740 = vpop.f32.mrf.mxu0
    %4741 = vmatprep.mubr.f32.mxu0 %v4624
    %4742 = vmatmul.mubr.f32.gmra.mxu0 %v4623
    %v4743 = vpop.f32.mrf.mxu0
    %v4744 = vadd.f32 %v4670, %v4743
    %v4745 = vpop.f32.mrf.mxu0
    %4746 = vmatprep.mubr.f32.mxu0 %v4626
    %4747 = vmatmul.mubr.f32.gmra.mxu0 %v4625
    %v4748 = vpop.f32.mrf.mxu0
    %v4749 = vadd.f32 %v4670, %v4748
    %v4750 = vpop.f32.mrf.mxu0
    %4751 = vmatprep.mubr.f32.mxu0 %v4628
    %4752 = vmatmul.mubr.f32.gmra.mxu0 %v4627
    %v4753 = vpop.f32.mrf.mxu0
    %v4754 = vadd.f32 %v4670, %v4753
    %v4755 = vpop.f32.mrf.mxu0
    %4756 = vmatprep.mubr.f32.mxu0 %v4630
    %4757 = vmatmul.mubr.f32.gmra.mxu0 %v4629
    %v4758 = vpop.f32.mrf.mxu0
    %v4759 = vadd.f32 %v4670, %v4758
    %v4760 = vpop.f32.mrf.mxu0
    %4761 = vmatprep.mubr.f32.mxu0 %v4632
    %4762 = vmatmul.mubr.f32.gmra.mxu0 %v4631
    %v4763 = vpop.f32.mrf.mxu0
    %v4764 = vadd.f32 %v4670, %v4763
    %v4765 = vpop.f32.mrf.mxu0
    %4766 = vdwg.mxu0
    %v4767 = vadd.f32 %v4476, %v4739
    %v4768 = vadd.f32 %v4477, %v4744
    %v4769 = vadd.f32 %v4478, %v4749
    %v4770 = vadd.f32 %v4479, %v4754
    %v4771 = vadd.f32 %v4480, %v4759
    %v4772 = vadd.f32 %v4481, %v4764
    %v4773 = vld [vmem:[%s11] sm:$0x1]
    %v4774 = vld [vmem:[%s12] sm:$0x1]
    %v4775 = vsel %vm62, %v4767, 0.0
    %4776 = vadd.xlane.f32.xlu0 %v4775
    %v4777 = vpop.xlane.xlu0 %4776
    %v4778 = vsel %vm62, %v4768, 0.0
    %4779 = vadd.xlane.f32.xlu0 %v4778
    %v4780 = vpop.xlane.xlu0 %4779
    %v4781 = vsel %vm62, %v4769, 0.0
    %4782 = vadd.xlane.f32.xlu0 %v4781
    %v4783 = vpop.xlane.xlu0 %4782
    %v4784 = vsel %vm62, %v4770, 0.0
    %4785 = vadd.xlane.f32.xlu0 %v4784
    %v4786 = vpop.xlane.xlu0 %4785
    %v4787 = vsel %vm62, %v4771, 0.0
    %4788 = vadd.xlane.f32.xlu0 %v4787
    %v4789 = vpop.xlane.xlu0 %4788
    %v4790 = vsel %vm62, %v4772, 0.0
    %4791 = vadd.xlane.f32.xlu0 %v4790
    %v4792 = vpop.xlane.xlu0 %4791
    %v4793 = vmul.f32 %v4777, %v4397
    %v4794 = vmul.f32 %v4780, %v4397
    %v4795 = vmul.f32 %v4783, %v4397
    %v4796 = vmul.f32 %v4786, %v4397
    %v4797 = vmul.f32 %v4789, %v4397
    %v4798 = vmul.f32 %v4792, %v4397
    %v4799 = vsub.f32 %v4767, %v4793
    %v4800 = vsub.f32 %v4768, %v4794
    %v4801 = vsub.f32 %v4769, %v4795
    %v4802 = vsub.f32 %v4770, %v4796
    %v4803 = vsub.f32 %v4771, %v4797
    %v4804 = vsub.f32 %v4772, %v4798
    %v4805 = vmul.f32 %v4799, %v4799
    %v4806 = vmul.f32 %v4800, %v4800
    %v4807 = vmul.f32 %v4801, %v4801
    %v4808 = vmul.f32 %v4802, %v4802
    %v4809 = vmul.f32 %v4803, %v4803
    %v4810 = vmul.f32 %v4804, %v4804
    %v4811 = vsel %vm62, %v4805, 0.0
    %4812 = vadd.xlane.f32.xlu0 %v4811
    %v4813 = vpop.xlane.xlu0 %4812
    %v4814 = vsel %vm62, %v4806, 0.0
    %4815 = vadd.xlane.f32.xlu0 %v4814
    %v4816 = vpop.xlane.xlu0 %4815
    %v4817 = vsel %vm62, %v4807, 0.0
    %4818 = vadd.xlane.f32.xlu0 %v4817
    %v4819 = vpop.xlane.xlu0 %4818
    %v4820 = vsel %vm62, %v4808, 0.0
    %4821 = vadd.xlane.f32.xlu0 %v4820
    %v4822 = vpop.xlane.xlu0 %4821
    %v4823 = vsel %vm62, %v4809, 0.0
    %4824 = vadd.xlane.f32.xlu0 %v4823
    %v4825 = vpop.xlane.xlu0 %4824
    %v4826 = vsel %vm62, %v4810, 0.0
    %4827 = vadd.xlane.f32.xlu0 %v4826
    %v4828 = vpop.xlane.xlu0 %4827
    %v4829 = vmul.f32 %v4813, %v4397
    %v4830 = vmul.f32 %v4816, %v4397
    %v4831 = vmul.f32 %v4819, %v4397
    %v4832 = vmul.f32 %v4822, %v4397
    %v4833 = vmul.f32 %v4825, %v4397
    %v4834 = vmul.f32 %v4828, %v4397
    %v4835 = vadd.f32 %v4829, 1e-05
    %v4836 = vadd.f32 %v4830, 1e-05
    %v4837 = vadd.f32 %v4831, 1e-05
    %v4838 = vadd.f32 %v4832, 1e-05
    %v4839 = vadd.f32 %v4833, 1e-05
    %v4840 = vadd.f32 %v4834, 1e-05
    %v4841 = vrsqrt.pop %v4835
    %v4842 = vrsqrt.pop %v4836
    %v4843 = vrsqrt.pop %v4837
    %v4844 = vrsqrt.pop %v4838
    %v4845 = vrsqrt.pop %v4839
    %v4846 = vrsqrt.pop %v4840
    %v4847 = vmul.f32 %v4799, %v4841
    %v4848 = vmul.f32 %v4800, %v4842
    %v4849 = vmul.f32 %v4801, %v4843
    %v4850 = vmul.f32 %v4802, %v4844
    %v4851 = vmul.f32 %v4803, %v4845
    %v4852 = vmul.f32 %v4804, %v4846
    %v4854 = vlaneseq
    %v4855 = vshrl.u32 %v4854, 7
    %v4856 = vsub.s32 0, %v4855
    %v4857 = vrot.slane %v4773, %v4856
    %v4859 = vmul.f32 %v4847, %v4857
    %v4860 = vmul.f32 %v4848, %v4857
    %v4861 = vmul.f32 %v4849, %v4857
    %v4862 = vmul.f32 %v4850, %v4857
    %v4863 = vmul.f32 %v4851, %v4857
    %v4864 = vmul.f32 %v4852, %v4857
    %v4866 = vlaneseq
    %v4867 = vshrl.u32 %v4866, 7
    %v4868 = vsub.s32 0, %v4867
    %v4869 = vrot.slane %v4774, %v4868
    %v4871 = vadd.f32 %v4859, %v4869
    %v4872 = vadd.f32 %v4860, %v4869
    %v4873 = vadd.f32 %v4861, %v4869
    %v4874 = vadd.f32 %v4862, %v4869
    %v4875 = vadd.f32 %v4863, %v4869
    %v4876 = vadd.f32 %v4864, %v4869
    %4877 = vst.msk [vmem:[#allocation2] sm:$0xff] %vm62, %v4871
    %4878 = vst.msk [vmem:[#allocation2 + $0x8] sm:$0xff] %vm62, %v4872
    %4879 = vst.msk [vmem:[#allocation2 + $0x10] sm:$0xff] %vm62, %v4873
    %4880 = vst.msk [vmem:[#allocation2 + $0x18] sm:$0xff] %vm62, %v4874
    %4881 = vst.msk [vmem:[#allocation2 + $0x20] sm:$0xff] %vm62, %v4875
    %4882 = vst.msk [vmem:[#allocation2 + $0x28] sm:$0xff] %vm62, %v4876
    // Predicated region
    $region54: #{tpu_custom_call.1} parent=1 // pred_check
      _
    $region55: #{tpu_custom_call.1} parent=1 // pred_check_branch
      %4884 = sbr.rel (0) target = $region57
    $region56: #{tpu_custom_call.1} parent=1 // pred_region
      %s4886 = ssub.s32 768, 768
      %4887 = vsyncadd [#allocation3], %s4886
      %s4888 = sshll.u32 [#allocation2], 4
      %s4889 = int_to_ptr.vmem [resolvable:$true] %s4888
      %4894 = dma.vmem_to_hbm [thread:$0]  %s4889, 768, %s13, [#allocation3], 128, 128, 8
    $region57: #{tpu_custom_call.1} parent=1 // pred_fallthru
      _
    // Predicated region
    $region58: #{tpu_custom_call.1} parent=1 // pred_check
      _
    $region59: #{tpu_custom_call.1} parent=1 // pred_check_branch
      %4896 = sbr.rel (0) target = $region61
    $region60: #{tpu_custom_call.1} parent=1 // pred_region
      %4897 = dma.done [#allocation3], 768
    $region61: #{tpu_custom_call.1} parent=1 // pred_fallthru
      _
    %4898 = vsyncpa [#allocation3], 1

</llo_original>
